<compile_context>
chip_gen: v7x
topology: tpu7x:2x2x1
jax: 0.10.0
libtpu: 0.0.40
codegen_flags: <defaults>
</compile_context>

<pallas_src>
import functools

import jax
import jax.numpy as jnp
from jax.experimental import pallas as pl
from jax.experimental.pallas import tpu as pltpu


# Optional per-kernel VMEM budget.  None keeps the compiler defaults (ample for
# the demo shapes).  For wide production layers raise it on v5e/v6e (128 MiB
# physical, 16/32 MiB scoped default); on v7x (64 MiB physical) keep it at or
# below ~48 MiB and rely on the K-tiling below instead of bigger tiles.
VMEM_LIMIT_BYTES = None


def _mosaic_params(dim_sem):
    kwargs = dict(dimension_semantics=dim_sem)
    if VMEM_LIMIT_BYTES is not None:
        kwargs["vmem_limit_bytes"] = VMEM_LIMIT_BYTES
    return pltpu.CompilerParams(**kwargs)


def _round_up(x, m):
    return (x + m - 1) // m * m


def _pick_tm(m, cap=512):
    # Prefer >=2 grid steps along the parallel M axis (both v7x TensorCores get
    # work) while keeping row tiles large (per-grid-step overhead ~0.35us).
    cands = [c for c in (512, 384, 256, 128) if c <= cap]
    for t in cands:
        if m % t == 0 and m // t >= 2:
            return t
    for t in cands + [64, 32, 16, 8]:
        if m % t == 0:
            return t
    return min(cap, _round_up(m, 8))


def _pick_tk(k, cap=512):
    # Channel dims are padded to multiples of 128, so an exact divisor exists.
    # K-tiling with an f32 accumulator bounds resident VMEM (matters on v7x).
    for t in (512, 384, 256, 128):
        if t <= cap and k % t == 0:
            return t
    return k


# ----------------------------------------------------------------------------
# Pallas kernels
# ----------------------------------------------------------------------------
def _mm_bn_kernel(x_ref, w_ref, scale_ref, bias_ref, o_ref, acc_ref, *, apply_relu):
    """out = [relu]((x @ w) * scale + bias); K-tiled, f32 accumulator."""
    k = pl.program_id(1)

    @pl.when(k == 0)
    def _():
        acc_ref[...] = jnp.zeros_like(acc_ref)

    acc_ref[...] += jnp.dot(x_ref[...], w_ref[...],
                            preferred_element_type=jnp.float32)

    @pl.when(k == pl.num_programs(1) - 1)
    def _():
        out = acc_ref[...] * scale_ref[...] + bias_ref[...]
        if apply_relu:
            out = jnp.maximum(out, 0.0)
        o_ref[...] = out.astype(o_ref.dtype)


def _mm_bn_add_relu_kernel(x_ref, w_ref, scale_ref, bias_ref, sc_ref, *rest,
                           emit_preact):
    """Fused tail: relu((x @ w) * scale + bias + shortcut).

    The pre-activation is only stored when emit_preact (is_last), halving the
    tail's write traffic in the common case.
    """
    if emit_preact:
        out_ref, pre_ref, acc_ref = rest
    else:
        out_ref, acc_ref = rest
        pre_ref = None
    k = pl.program_id(1)

    @pl.when(k == 0)
    def _():
        acc_ref[...] = jnp.zeros_like(acc_ref)

    acc_ref[...] += jnp.dot(x_ref[...], w_ref[...],
                            preferred_element_type=jnp.float32)

    @pl.when(k == pl.num_programs(1) - 1)
    def _():
        pre = acc_ref[...] * scale_ref[...] + bias_ref[...]
        pre = pre + sc_ref[...].astype(jnp.float32)
        if emit_preact:
            pre_ref[...] = pre.astype(pre_ref.dtype)
        out_ref[...] = jnp.maximum(pre, 0.0).astype(out_ref.dtype)


def _conv3x3_bn_relu_kernel(x_ref, w_ref, scale_ref, bias_ref, o_ref, *,
                            stride, hs, ho, wo):
    """In-kernel 3x3 conv + BN + ReLU for one batch image.

    x_ref: (1, s*s*hs, ws, Cin)  space-to-depth (phase-major) padded input.
    w_ref: (9, Cin, Cout)        tap-major weights (tap = ky*3 + kx).
    o_ref: (1, ho*wo, Cout)
    Each tap is a contiguous slice of one phase image -> 9 MXU matmuls
    accumulated in f32; no im2col buffer is ever materialised in HBM.
    """
    s = stride
    cin = x_ref.shape[-1]
    cout = w_ref.shape[-1]
    acc = jnp.zeros((ho * wo, cout), jnp.float32)
    for ky in range(3):
        for kx in range(3):
            phase = (ky % s) * s + (kx % s)
            qy, qx = ky // s, kx // s
            r0 = phase * hs + qy
            patch = x_ref[0, r0:r0 + ho, qx:qx + wo, :]          # (ho, wo, cin)
            if patch.dtype == jnp.float32:
                patch = patch.reshape(ho * wo, cin)
            else:
                # Merge rows in f32 layout (trivial relayout), then repack to
                # the narrow MXU operand dtype.
                patch = patch.astype(jnp.float32).reshape(ho * wo, cin)
                patch = patch.astype(x_ref.dtype)
            acc = acc + jnp.dot(patch, w_ref[ky * 3 + kx],
                                preferred_element_type=jnp.float32)
    out = acc * scale_ref[...] + bias_ref[...]
    o_ref[0] = jnp.maximum(out, 0.0).astype(o_ref.dtype)


# ----------------------------------------------------------------------------
# pallas_call wrappers
# ----------------------------------------------------------------------------
def matmul_bn(x, w, scale, bias, *, apply_relu, out_dtype=jnp.float32):
    """y = [relu]((x @ w) * scale + bias);  x:(M,K)  w:(K,N)  scale/bias:(1,N)."""
    m, k = x.shape
    _, ncols = w.shape
    tm = _pick_tm(m)
    tk = _pick_tk(k)
    kernel = functools.partial(_mm_bn_kernel, apply_relu=apply_relu)
    # NOTE: the weight / scale / bias blocks have constant index maps, so the
    # pipeline fetches them once; on very wide layers they could additionally
    # be single-buffered (pipeline_mode) to trim VMEM.
    return pl.pallas_call(
        kernel,
        out_shape=jax.ShapeDtypeStruct((m, ncols), out_dtype),
        grid=(pl.cdiv(m, tm), pl.cdiv(k, tk)),
        in_specs=[
            pl.BlockSpec((tm, tk), lambda i, kk: (i, kk)),
            pl.BlockSpec((tk, ncols), lambda i, kk: (kk, 0)),
            pl.BlockSpec((1, ncols), lambda i, kk: (0, 0)),
            pl.BlockSpec((1, ncols), lambda i, kk: (0, 0)),
        ],
        out_specs=pl.BlockSpec((tm, ncols), lambda i, kk: (i, 0)),
        scratch_shapes=[pltpu.VMEM((tm, ncols), jnp.float32)],
        compiler_params=_mosaic_params(("parallel", "arbitrary")),
    )(x, w, scale, bias)


def matmul_bn_add_relu(x, w, scale, bias, shortcut, *, emit_preact):
    """Fused conv3 + BN3 + residual add + ReLU.  Outputs are fp32."""
    m, k = x.shape
    _, ncols = w.shape
    tm = _pick_tm(m)
    tk = _pick_tk(k)
    kernel = functools.partial(_mm_bn_add_relu_kernel, emit_preact=emit_preact)
    out_shape = jax.ShapeDtypeStruct((m, ncols), jnp.float32)
    out_specs = pl.BlockSpec((tm, ncols), lambda i, kk: (i, 0))
    if emit_preact:
        out_shape = (out_shape, jax.ShapeDtypeStruct((m, ncols), jnp.float32))
        out_specs = (out_specs, pl.BlockSpec((tm, ncols), lambda i, kk: (i, 0)))
    return pl.pallas_call(
        kernel,
        out_shape=out_shape,
        grid=(pl.cdiv(m, tm), pl.cdiv(k, tk)),
        in_specs=[
            pl.BlockSpec((tm, tk), lambda i, kk: (i, kk)),
            pl.BlockSpec((tk, ncols), lambda i, kk: (kk, 0)),
            pl.BlockSpec((1, ncols), lambda i, kk: (0, 0)),
            pl.BlockSpec((1, ncols), lambda i, kk: (0, 0)),
            pl.BlockSpec((tm, ncols), lambda i, kk: (i, 0)),
        ],
        out_specs=out_specs,
        scratch_shapes=[pltpu.VMEM((tm, ncols), jnp.float32)],
        compiler_params=_mosaic_params(("parallel", "arbitrary")),
    )(x, w, scale, bias, shortcut)


def conv3x3_bn_relu(xs, w_taps, scale, bias, *, stride, hs, ho, wo, out_dtype):
    """3x3 conv (stride, pad folded in xs) + BN + ReLU, one image per grid step."""
    n = xs.shape[0]
    cout = w_taps.shape[-1]
    kernel = functools.partial(_conv3x3_bn_relu_kernel,
                               stride=stride, hs=hs, ho=ho, wo=wo)
    return pl.pallas_call(
        kernel,
        out_shape=jax.ShapeDtypeStruct((n, ho * wo, cout), out_dtype),
        grid=(n,),
        in_specs=[
            pl.BlockSpec((1,) + xs.shape[1:], lambda b: (b, 0, 0, 0)),
            pl.BlockSpec(w_taps.shape, lambda b: (0, 0, 0)),
            pl.BlockSpec((1, cout), lambda b: (0, 0)),
            pl.BlockSpec((1, cout), lambda b: (0, 0)),
        ],
        out_specs=pl.BlockSpec((1, ho * wo, cout), lambda b: (b, 0, 0)),
        compiler_params=_mosaic_params(("parallel",)),
    )(xs, w_taps, scale, bias)


# ----------------------------------------------------------------------------
# One-time parameter preparation (BN folding, weight layout, channel padding)
# ----------------------------------------------------------------------------
def prepare_params(p, *, in_planes, planes, stride, eps=1e-5,
                   compute_dtype=jnp.float32):
    expansion = 4
    cexp = expansion * planes
    cin_p = _round_up(in_planes, 128)
    cmid_p = _round_up(planes, 128)
    cexp_p = _round_up(cexp, 128)

    def fold(bn, cpad):
        gamma, beta, mean, var = bn
        scale = gamma / jnp.sqrt(var + eps)
        bias = beta - mean * scale
        scale = jnp.pad(scale, (0, cpad - scale.shape[0]))[None, :].astype(jnp.float32)
        bias = jnp.pad(bias, (0, cpad - bias.shape[0]))[None, :].astype(jnp.float32)
        return scale, bias

    def pad2(w2d, rows, cols):
        return jnp.pad(w2d, ((0, rows - w2d.shape[0]),
                             (0, cols - w2d.shape[1]))).astype(compute_dtype)

    w1 = pad2(p["w1"][:, :, 0, 0].T, cin_p, cmid_p)                  # (Cin,  mid)
    w2 = jnp.transpose(p["w2"], (2, 3, 1, 0)).reshape(9, planes, planes)
    w2 = jnp.pad(w2, ((0, 0), (0, cmid_p - planes),
                      (0, cmid_p - planes))).astype(compute_dtype)   # (9, mid, mid)
    w3 = pad2(p["w3"][:, :, 0, 0].T, cmid_p, cexp_p)                 # (mid, exp)
    s1, b1 = fold(p["bn1"], cmid_p)
    s2, b2 = fold(p["bn2"], cmid_p)
    s3, b3 = fold(p["bn3"], cexp_p)

    prep = dict(w1=w1, w2=w2, w3=w3,
                s1=s1, b1=b1, s2=s2, b2=b2, s3=s3, b3=b3,
                cexp=cexp, cin_pad=cin_p, cmid_pad=cmid_p, cexp_pad=cexp_p,
                compute_dtype=compute_dtype,
                downsample=(stride != 1 or in_planes != cexp))
    if prep["downsample"]:
        prep["ws"] = pad2(p["ws"][:, :, 0, 0].T, cin_p, cexp_p)
        prep["ss"], prep["sb"] = fold(p["bns"], cexp_p)
    return prep


# ----------------------------------------------------------------------------
# Bottleneck forward
# ----------------------------------------------------------------------------
def bottleneck_pallas(x_nchw, prep, *, stride, is_last):
    n, cin, h, w = x_nchw.shape
    cd = prep["compute_dtype"]
    cin_p, cmid_p = prep["cin_pad"], prep["cmid_pad"]
    cexp = prep["cexp"]
    s = stride

    # NCHW -> NHWC, zero-pad channels to a lane-dense multiple of 128.
    x = jnp.transpose(x_nchw, (0, 2, 3, 1)).astype(cd)
    if cin_p > cin:
        x = jnp.pad(x, ((0, 0), (0, 0), (0, 0), (0, cin_p - cin)))

    # conv1 (1x1) + BN1 + ReLU: channel-last matmul on the MXU.
    out1 = matmul_bn(x.reshape(n * h * w, cin_p), prep["w1"], prep["s1"],
                     prep["b1"], apply_relu=True, out_dtype=cd)
    out1 = out1.reshape(n, h, w, cmid_p)

    # conv2 (3x3, stride, pad=1) + BN2 + ReLU, computed fully in-kernel.
    # Space-to-depth (phase) rearrangement turns every tap of the strided conv
    # into a contiguous slice -> no im2col buffer in HBM.
    ho = (h + 2 - 3) // s + 1
    wo = (w + 2 - 3) // s + 1
    hp = _round_up(h + 2, s)
    wp = _round_up(w + 2, s)
    hs, ws_sp = hp // s, wp // s
    xp = jnp.pad(out1, ((0, 0), (1, hp - h - 1), (1, wp - w - 1), (0, 0)))
    xs = xp.reshape(n, hs, s, ws_sp, s, cmid_p)
    xs = jnp.transpose(xs, (0, 2, 4, 1, 3, 5)).reshape(n, s * s * hs, ws_sp, cmid_p)
    out2 = conv3x3_bn_relu(xs, prep["w2"], prep["s2"], prep["b2"],
                           stride=s, hs=hs, ho=ho, wo=wo, out_dtype=cd)
    out2 = out2.reshape(n * ho * wo, cmid_p)

    # Shortcut branch (matches PyTorch: identity when stride==1 and Cin==Cexp).
    if prep["downsample"]:
        # TODO(synk): the strided subsample is still an XLA slice; it could be
        # folded into the shortcut matmul's index_map via an Element BlockSpec.
        xsc = x[:, ::s, ::s, :].reshape(n * ho * wo, cin_p)
        sc = matmul_bn(xsc, prep["ws"], prep["ss"], prep["sb"],
                       apply_relu=False, out_dtype=cd)
    else:
        sc = x.reshape(n * h * w, cin_p)

    # conv3 (1x1) + BN3 + residual add + ReLU fused; preact only when needed.
    res = matmul_bn_add_relu(out2, prep["w3"], prep["s3"], prep["b3"], sc,
                             emit_preact=is_last)

    def to_nchw(t):
        return jnp.transpose(t[:, :cexp].reshape(n, ho, wo, cexp), (0, 3, 1, 2))

    if is_last:
        out_f, pre_f = res
        return to_nchw(out_f), to_nchw(pre_f)
    return to_nchw(res)


# ----------------------------------------------------------------------------
# Pure-JAX reference (mirrors the PyTorch forward, eval-mode BN)
# ----------------------------------------------------------------------------
def bottleneck_ref(x, p, *, stride, eps=1e-5):
    def conv(t, w, stride=1, padding=0):
        return jax.lax.conv_general_dilated(
            t, w, window_strides=(stride, stride),
            padding=[(padding, padding), (padding, padding)],
            dimension_numbers=("NCHW", "OIHW", "NCHW"),
            precision=jax.lax.Precision.HIGHEST)

    def bn(t, params):
        gamma, beta, mean, var = params
        inv = gamma / jnp.sqrt(var + eps)
        return t * inv[None, :, None, None] + (beta - mean * inv)[None, :, None, None]

    out = jax.nn.relu(bn(conv(x, p["w1"]), p["bn1"]))
    out = jax.nn.relu(bn(conv(out, p["w2"], stride=stride, padding=1), p["bn2"]))
    out = bn(conv(out, p["w3"]), p["bn3"])
    in_planes = x.shape[1]
    cexp = p["w3"].shape[0]
    if stride != 1 or in_planes != cexp:
        sc = bn(conv(x, p["ws"], stride=stride), p["bns"])
    else:
        sc = x
    preact = out + sc
    return jax.nn.relu(preact), preact


# ----------------------------------------------------------------------------
# Deterministic parameter init + demo
# ----------------------------------------------------------------------------
def make_params(key, in_planes, planes):
    expansion = 4
    ks = jax.random.split(key, 8)

    def bn_params(k, c):
        k1, k2, k3, k4 = jax.random.split(k, 4)
        gamma = 1.0 + 0.1 * jax.random.normal(k1, (c,), jnp.float32)
        beta = 0.1 * jax.random.normal(k2, (c,), jnp.float32)
        mean = 0.1 * jax.random.normal(k3, (c,), jnp.float32)
        var = jnp.abs(jax.random.normal(k4, (c,), jnp.float32)) + 0.5
        return (gamma, beta, mean, var)

    return {
        "w1": 0.1 * jax.random.normal(ks[0], (planes, in_planes, 1, 1), jnp.float32),
        "w2": 0.1 * jax.random.normal(ks[1], (planes, planes, 3, 3), jnp.float32),
        "w3": 0.1 * jax.random.normal(ks[2], (expansion * planes, planes, 1, 1), jnp.float32),
        "ws": 0.1 * jax.random.normal(ks[3], (expansion * planes, in_planes, 1, 1), jnp.float32),
        "bn1": bn_params(ks[4], planes),
        "bn2": bn_params(ks[5], planes),
        "bn3": bn_params(ks[6], expansion * planes),
        "bns": bn_params(ks[7], expansion * planes),
    }


if __name__ == "__main__":
    N, H, W = 2, 16, 16
    in_planes, planes, stride, is_last = 4, 4, 2, True

    key = jax.random.PRNGKey(0)
    kx, kp = jax.random.split(key)
    x = jax.random.normal(kx, (N, in_planes, H, W), jnp.float32)
    params = make_params(kp, in_planes, planes)
    ref_out, ref_pre = bottleneck_ref(x, params, stride=stride)

    # --- fp32 path (downsample shortcut, stride=2, is_last=True) -------------
    prep = prepare_params(params, in_planes=in_planes, planes=planes, stride=stride)
    fwd = jax.jit(functools.partial(bottleneck_pallas, prep=prep,
                                    stride=stride, is_last=is_last))
    out, preact = jax.block_until_ready(fwd(x))
    assert out.shape == ref_out.shape == (N, 4 * planes, H // stride, W // stride)
    assert jnp.allclose(out, ref_out, atol=2e-2, rtol=2e-2)
    assert jnp.allclose(preact, ref_pre, atol=2e-2, rtol=2e-2)

    # --- bf16 operand path (fp32 accumulation): v6e/v7x MXU peak, half DMA ---
    prep_bf16 = prepare_params(params, in_planes=in_planes, planes=planes,
                               stride=stride, compute_dtype=jnp.bfloat16)
    fwd_bf16 = jax.jit(functools.partial(bottleneck_pallas, prep=prep_bf16,
                                         stride=stride, is_last=is_last))
    out_b, pre_b = jax.block_until_ready(fwd_bf16(x))
    assert jnp.allclose(out_b, ref_out, atol=1e-1, rtol=1e-1)
    assert jnp.allclose(pre_b, ref_pre, atol=1e-1, rtol=1e-1)

    # --- identity-shortcut config (stride=1, Cin == 4*planes, is_last=False) -
    in2, planes2 = 16, 4
    x2 = jax.random.normal(jax.random.PRNGKey(1), (N, in2, H, W), jnp.float32)
    params2 = make_params(jax.random.PRNGKey(2), in2, planes2)
    prep2 = prepare_params(params2, in_planes=in2, planes=planes2, stride=1)
    fwd2 = jax.jit(functools.partial(bottleneck_pallas, prep=prep2,
                                     stride=1, is_last=False))
    out2 = jax.block_until_ready(fwd2(x2))
    ref_out2, _ = bottleneck_ref(x2, params2, stride=1)
    assert out2.shape == ref_out2.shape == (N, 4 * planes2, H, W)
    assert jnp.allclose(out2, ref_out2, atol=2e-2, rtol=2e-2)

    print("KERNEL_OK")
</pallas_src>

<mosaic_0001>
module attributes {stable_mosaic.version = 11 : i64} {
  func.func @_mm_bn_kernel(%arg0: i32, %arg1: i32, %arg2: memref<256x128xf32, #tpu.memory_space<vmem>>, %arg3: memref<128x128xf32, #tpu.memory_space<vmem>>, %arg4: memref<1x128xf32, #tpu.memory_space<vmem>>, %arg5: memref<1x128xf32, #tpu.memory_space<vmem>>, %arg6: memref<256x128xf32, #tpu.memory_space<vmem>>, %arg7: memref<256x128xf32, #tpu.memory_space<vmem>>) attributes {dimension_semantics = [#tpu.dimension_semantics<parallel>, #tpu.dimension_semantics<arbitrary>], iteration_bounds = array<i64: 2, 1>, scalar_prefetch = 0 : i64, scratch_operands = 1 : i64, tpu.core_type = #tpu.core_type<tc>, window_params = [{transform_indices = @transform_0, window_bounds = array<i64: 256, 128>}, {transform_indices = @transform_1, window_bounds = array<i64: 128, 128>}, {pipeline_mode = #tpu.pipeline_mode<synchronous>, transform_indices = @transform_2, window_bounds = array<i64: 1, 128>}, {pipeline_mode = #tpu.pipeline_mode<synchronous>, transform_indices = @transform_3, window_bounds = array<i64: 1, 128>}, {transform_indices = @transform_4, window_bounds = array<i64: 256, 128>}]} {
    %c0_i32 = arith.constant 0 : i32
    %0 = arith.cmpi eq, %arg1, %c0_i32 : i32
    %1 = arith.extui %0 : i1 to i32
    %c0_i32_0 = arith.constant 0 : i32
    %2 = arith.cmpi ne, %1, %c0_i32_0 : i32
    scf.if %2 {
      %cst_10 = arith.constant 0.000000e+00 : f32
      %12 = vector.broadcast %cst_10 : f32 to vector<256x128xf32>
      %c0_11 = arith.constant 0 : index
      %c0_12 = arith.constant 0 : index
      %13 = vector.load %arg7[%c0_11, %c0_12] : memref<256x128xf32, #tpu.memory_space<vmem>>, vector<256x128xf32>
      tpu.vector_store %arg7[%c0_11, %c0_12], %12 {strides = array<i32>} : memref<256x128xf32, #tpu.memory_space<vmem>>, vector<256x128xf32>,
    } else {
    }
    %c0 = arith.constant 0 : index
    %c0_1 = arith.constant 0 : index
    %3 = vector.load %arg7[%c0, %c0_1] : memref<256x128xf32, #tpu.memory_space<vmem>>, vector<256x128xf32>
    %c0_2 = arith.constant 0 : index
    %c0_3 = arith.constant 0 : index
    %4 = vector.load %arg2[%c0_2, %c0_3] : memref<256x128xf32, #tpu.memory_space<vmem>>, vector<256x128xf32>
    %c0_4 = arith.constant 0 : index
    %c0_5 = arith.constant 0 : index
    %5 = vector.load %arg3[%c0_4, %c0_5] : memref<128x128xf32, #tpu.memory_space<vmem>>, vector<128x128xf32>
    %cst = arith.constant dense<0.000000e+00> : vector<256x128xf32>
    %6 = tpu.matmul %4, %5, %cst {dimension_numbers = #tpu.dot_dimension_numbers<[1], [0], [0], [1], [0, 0, 1, 1], [], []>} : vector<256x128xf32>, vector<128x128xf32>, vector<256x128xf32> -> vector<256x128xf32>
    %7 = arith.addf %3, %6 : vector<256x128xf32>
    %c0_6 = arith.constant 0 : index
    %c0_7 = arith.constant 0 : index
    %8 = vector.load %arg7[%c0_6, %c0_7] : memref<256x128xf32, #tpu.memory_space<vmem>>, vector<256x128xf32>
    tpu.vector_store %arg7[%c0_6, %c0_7], %7 {strides = array<i32>} : memref<256x128xf32, #tpu.memory_space<vmem>>, vector<256x128xf32>,
    %c0_i32_8 = arith.constant 0 : i32
    %9 = arith.cmpi eq, %arg1, %c0_i32_8 : i32
    %10 = arith.extui %9 : i1 to i32
    %c0_i32_9 = arith.constant 0 : i32
    %11 = arith.cmpi ne, %10, %c0_i32_9 : i32
    scf.if %11 {
      %c0_10 = arith.constant 0 : index
      %c0_11 = arith.constant 0 : index
      %12 = vector.load %arg7[%c0_10, %c0_11] : memref<256x128xf32, #tpu.memory_space<vmem>>, vector<256x128xf32>
      %c0_12 = arith.constant 0 : index
      %c0_13 = arith.constant 0 : index
      %13 = vector.load %arg4[%c0_12, %c0_13] : memref<1x128xf32, #tpu.memory_space<vmem>>, vector<1x128xf32>
      %14 = vector.broadcast %13 : vector<1x128xf32> to vector<256x128xf32>
      %15 = arith.mulf %12, %14 : vector<256x128xf32>
      %c0_14 = arith.constant 0 : index
      %c0_15 = arith.constant 0 : index
      %16 = vector.load %arg5[%c0_14, %c0_15] : memref<1x128xf32, #tpu.memory_space<vmem>>, vector<1x128xf32>
      %17 = vector.broadcast %16 : vector<1x128xf32> to vector<256x128xf32>
      %18 = arith.addf %15, %17 : vector<256x128xf32>
      %cst_16 = arith.constant 0.000000e+00 : f32
      %19 = vector.broadcast %cst_16 : f32 to vector<256x128xf32>
      %20 = arith.maximumf %18, %19 : vector<256x128xf32>
      %c0_17 = arith.constant 0 : index
      %c0_18 = arith.constant 0 : index
      %21 = vector.load %arg6[%c0_17, %c0_18] : memref<256x128xf32, #tpu.memory_space<vmem>>, vector<256x128xf32>
      tpu.vector_store %arg6[%c0_17, %c0_18], %20 {strides = array<i32>} : memref<256x128xf32, #tpu.memory_space<vmem>>, vector<256x128xf32>,
    } else {
    }
    return
  }
  func.func @transform_0(%arg0: i32, %arg1: i32) -> (i32, i32) {
    %c0_i32 = arith.constant 0 : i32
    return %arg0, %arg1 : i32, i32
  }
  func.func @transform_1(%arg0: i32, %arg1: i32) -> (i32, i32) {
    %c0_i32 = arith.constant 0 : i32
    %c0_i32_0 = arith.constant 0 : i32
    return %arg1, %c0_i32 : i32, i32
  }
  func.func @transform_2(%arg0: i32, %arg1: i32) -> (i32, i32) {
    %c0_i32 = arith.constant 0 : i32
    %c0_i32_0 = arith.constant 0 : i32
    %c0_i32_1 = arith.constant 0 : i32
    return %c0_i32, %c0_i32_0 : i32, i32
  }
  func.func @transform_3(%arg0: i32, %arg1: i32) -> (i32, i32) {
    %c0_i32 = arith.constant 0 : i32
    %c0_i32_0 = arith.constant 0 : i32
    %c0_i32_1 = arith.constant 0 : i32
    return %c0_i32, %c0_i32_0 : i32, i32
  }
  func.func @transform_4(%arg0: i32, %arg1: i32) -> (i32, i32) {
    %c0_i32 = arith.constant 0 : i32
    %c0_i32_0 = arith.constant 0 : i32
    return %arg0, %c0_i32 : i32, i32
  }
}

module attributes {stable_mosaic.version = 11 : i64} {
  func.func @_conv3x3_bn_relu_kernel(%arg0: i32, %arg1: memref<1x36x9x128xf32, #tpu.memory_space<vmem>>, %arg2: memref<9x128x128xf32, #tpu.memory_space<vmem>>, %arg3: memref<1x128xf32, #tpu.memory_space<vmem>>, %arg4: memref<1x128xf32, #tpu.memory_space<vmem>>, %arg5: memref<1x64x128xf32, #tpu.memory_space<vmem>>) attributes {dimension_semantics = [#tpu.dimension_semantics<parallel>], iteration_bounds = array<i64: 2>, scalar_prefetch = 0 : i64, scratch_operands = 0 : i64, tpu.core_type = #tpu.core_type<tc>, window_params = [{transform_indices = @transform_0, window_bounds = array<i64: 1, 36, 9, 128>}, {pipeline_mode = #tpu.pipeline_mode<synchronous>, transform_indices = @transform_1, window_bounds = array<i64: 9, 128, 128>}, {pipeline_mode = #tpu.pipeline_mode<synchronous>, transform_indices = @transform_2, window_bounds = array<i64: 1, 128>}, {pipeline_mode = #tpu.pipeline_mode<synchronous>, transform_indices = @transform_3, window_bounds = array<i64: 1, 128>}, {transform_indices = @transform_4, window_bounds = array<i64: 1, 64, 128>}]} {
    %cst = arith.constant 0.000000e+00 : f32
    %0 = vector.broadcast %cst : f32 to vector<64x128xf32>
    %c0 = arith.constant 0 : index
    %c0_0 = arith.constant 0 : index
    %c0_1 = arith.constant 0 : index
    %c0_2 = arith.constant 0 : index
    %1 = vector.load %arg1[%c0, %c0_0, %c0_1, %c0_2] : memref<1x36x9x128xf32, #tpu.memory_space<vmem>>, vector<1x8x8x128xf32>
    %2 = vector.shape_cast %1 : vector<1x8x8x128xf32> to vector<8x8x128xf32>
    %3 = vector.shape_cast %2 : vector<8x8x128xf32> to vector<64x128xf32>
    %c0_3 = arith.constant 0 : index
    %c0_4 = arith.constant 0 : index
    %c0_5 = arith.constant 0 : index
    %4 = vector.load %arg2[%c0_3, %c0_4, %c0_5] : memref<9x128x128xf32, #tpu.memory_space<vmem>>, vector<1x128x128xf32>
    %5 = vector.shape_cast %4 : vector<1x128x128xf32> to vector<128x128xf32>
    %cst_6 = arith.constant dense<0.000000e+00> : vector<64x128xf32>
    %6 = tpu.matmul %3, %5, %cst_6 {dimension_numbers = #tpu.dot_dimension_numbers<[1], [0], [0], [1], [0, 0, 1, 1], [], []>} : vector<64x128xf32>, vector<128x128xf32>, vector<64x128xf32> -> vector<64x128xf32>
    %7 = arith.addf %0, %6 : vector<64x128xf32>
    %c0_7 = arith.constant 0 : index
    %c9 = arith.constant 9 : index
    %c0_8 = arith.constant 0 : index
    %c0_9 = arith.constant 0 : index
    %8 = vector.load %arg1[%c0_7, %c9, %c0_8, %c0_9] : memref<1x36x9x128xf32, #tpu.memory_space<vmem>>, vector<1x8x8x128xf32>
    %9 = vector.shape_cast %8 : vector<1x8x8x128xf32> to vector<8x8x128xf32>
    %10 = vector.shape_cast %9 : vector<8x8x128xf32> to vector<64x128xf32>
    %c1 = arith.constant 1 : index
    %c0_10 = arith.constant 0 : index
    %c0_11 = arith.constant 0 : index
    %11 = vector.load %arg2[%c1, %c0_10, %c0_11] : memref<9x128x128xf32, #tpu.memory_space<vmem>>, vector<1x128x128xf32>
    %12 = vector.shape_cast %11 : vector<1x128x128xf32> to vector<128x128xf32>
    %cst_12 = arith.constant dense<0.000000e+00> : vector<64x128xf32>
    %13 = tpu.matmul %10, %12, %cst_12 {dimension_numbers = #tpu.dot_dimension_numbers<[1], [0], [0], [1], [0, 0, 1, 1], [], []>} : vector<64x128xf32>, vector<128x128xf32>, vector<64x128xf32> -> vector<64x128xf32>
    %14 = arith.addf %7, %13 : vector<64x128xf32>
    %c0_13 = arith.constant 0 : index
    %c0_14 = arith.constant 0 : index
    %c1_15 = arith.constant 1 : index
    %c0_16 = arith.constant 0 : index
    %15 = vector.load %arg1[%c0_13, %c0_14, %c1_15, %c0_16] : memref<1x36x9x128xf32, #tpu.memory_space<vmem>>, vector<1x8x8x128xf32>
    %16 = vector.shape_cast %15 : vector<1x8x8x128xf32> to vector<8x8x128xf32>
    %17 = vector.shape_cast %16 : vector<8x8x128xf32> to vector<64x128xf32>
    %c2 = arith.constant 2 : index
    %c0_17 = arith.constant 0 : index
    %c0_18 = arith.constant 0 : index
    %18 = vector.load %arg2[%c2, %c0_17, %c0_18] : memref<9x128x128xf32, #tpu.memory_space<vmem>>, vector<1x128x128xf32>
    %19 = vector.shape_cast %18 : vector<1x128x128xf32> to vector<128x128xf32>
    %cst_19 = arith.constant dense<0.000000e+00> : vector<64x128xf32>
    %20 = tpu.matmul %17, %19, %cst_19 {dimension_numbers = #tpu.dot_dimension_numbers<[1], [0], [0], [1], [0, 0, 1, 1], [], []>} : vector<64x128xf32>, vector<128x128xf32>, vector<64x128xf32> -> vector<64x128xf32>
    %21 = arith.addf %14, %20 : vector<64x128xf32>
    %c0_20 = arith.constant 0 : index
    %c18 = arith.constant 18 : index
    %c0_21 = arith.constant 0 : index
    %c0_22 = arith.constant 0 : index
    %22 = vector.load %arg1[%c0_20, %c18, %c0_21, %c0_22] : memref<1x36x9x128xf32, #tpu.memory_space<vmem>>, vector<1x8x8x128xf32>
    %23 = vector.shape_cast %22 : vector<1x8x8x128xf32> to vector<8x8x128xf32>
    %24 = vector.shape_cast %23 : vector<8x8x128xf32> to vector<64x128xf32>
    %c3 = arith.constant 3 : index
    %c0_23 = arith.constant 0 : index
    %c0_24 = arith.constant 0 : index
    %25 = vector.load %arg2[%c3, %c0_23, %c0_24] : memref<9x128x128xf32, #tpu.memory_space<vmem>>, vector<1x128x128xf32>
    %26 = vector.shape_cast %25 : vector<1x128x128xf32> to vector<128x128xf32>
    %cst_25 = arith.constant dense<0.000000e+00> : vector<64x128xf32>
    %27 = tpu.matmul %24, %26, %cst_25 {dimension_numbers = #tpu.dot_dimension_numbers<[1], [0], [0], [1], [0, 0, 1, 1], [], []>} : vector<64x128xf32>, vector<128x128xf32>, vector<64x128xf32> -> vector<64x128xf32>
    %28 = arith.addf %21, %27 : vector<64x128xf32>
    %c0_26 = arith.constant 0 : index
    %c27 = arith.constant 27 : index
    %c0_27 = arith.constant 0 : index
    %c0_28 = arith.constant 0 : index
    %29 = vector.load %arg1[%c0_26, %c27, %c0_27, %c0_28] : memref<1x36x9x128xf32, #tpu.memory_space<vmem>>, vector<1x8x8x128xf32>
    %30 = vector.shape_cast %29 : vector<1x8x8x128xf32> to vector<8x8x128xf32>
    %31 = vector.shape_cast %30 : vector<8x8x128xf32> to vector<64x128xf32>
    %c4 = arith.constant 4 : index
    %c0_29 = arith.constant 0 : index
    %c0_30 = arith.constant 0 : index
    %32 = vector.load %arg2[%c4, %c0_29, %c0_30] : memref<9x128x128xf32, #tpu.memory_space<vmem>>, vector<1x128x128xf32>
    %33 = vector.shape_cast %32 : vector<1x128x128xf32> to vector<128x128xf32>
    %cst_31 = arith.constant dense<0.000000e+00> : vector<64x128xf32>
    %34 = tpu.matmul %31, %33, %cst_31 {dimension_numbers = #tpu.dot_dimension_numbers<[1], [0], [0], [1], [0, 0, 1, 1], [], []>} : vector<64x128xf32>, vector<128x128xf32>, vector<64x128xf32> -> vector<64x128xf32>
    %35 = arith.addf %28, %34 : vector<64x128xf32>
    %c0_32 = arith.constant 0 : index
    %c18_33 = arith.constant 18 : index
    %c1_34 = arith.constant 1 : index
    %c0_35 = arith.constant 0 : index
    %36 = vector.load %arg1[%c0_32, %c18_33, %c1_34, %c0_35] : memref<1x36x9x128xf32, #tpu.memory_space<vmem>>, vector<1x8x8x128xf32>
    %37 = vector.shape_cast %36 : vector<1x8x8x128xf32> to vector<8x8x128xf32>
    %38 = vector.shape_cast %37 : vector<8x8x128xf32> to vector<64x128xf32>
    %c5 = arith.constant 5 : index
    %c0_36 = arith.constant 0 : index
    %c0_37 = arith.constant 0 : index
    %39 = vector.load %arg2[%c5, %c0_36, %c0_37] : memref<9x128x128xf32, #tpu.memory_space<vmem>>, vector<1x128x128xf32>
    %40 = vector.shape_cast %39 : vector<1x128x128xf32> to vector<128x128xf32>
    %cst_38 = arith.constant dense<0.000000e+00> : vector<64x128xf32>
    %41 = tpu.matmul %38, %40, %cst_38 {dimension_numbers = #tpu.dot_dimension_numbers<[1], [0], [0], [1], [0, 0, 1, 1], [], []>} : vector<64x128xf32>, vector<128x128xf32>, vector<64x128xf32> -> vector<64x128xf32>
    %42 = arith.addf %35, %41 : vector<64x128xf32>
    %c0_39 = arith.constant 0 : index
    %c1_40 = arith.constant 1 : index
    %c0_41 = arith.constant 0 : index
    %c0_42 = arith.constant 0 : index
    %43 = vector.load %arg1[%c0_39, %c1_40, %c0_41, %c0_42] : memref<1x36x9x128xf32, #tpu.memory_space<vmem>>, vector<1x8x8x128xf32>
    %44 = vector.shape_cast %43 : vector<1x8x8x128xf32> to vector<8x8x128xf32>
    %45 = vector.shape_cast %44 : vector<8x8x128xf32> to vector<64x128xf32>
    %c6 = arith.constant 6 : index
    %c0_43 = arith.constant 0 : index
    %c0_44 = arith.constant 0 : index
    %46 = vector.load %arg2[%c6, %c0_43, %c0_44] : memref<9x128x128xf32, #tpu.memory_space<vmem>>, vector<1x128x128xf32>
    %47 = vector.shape_cast %46 : vector<1x128x128xf32> to vector<128x128xf32>
    %cst_45 = arith.constant dense<0.000000e+00> : vector<64x128xf32>
    %48 = tpu.matmul %45, %47, %cst_45 {dimension_numbers = #tpu.dot_dimension_numbers<[1], [0], [0], [1], [0, 0, 1, 1], [], []>} : vector<64x128xf32>, vector<128x128xf32>, vector<64x128xf32> -> vector<64x128xf32>
    %49 = arith.addf %42, %48 : vector<64x128xf32>
    %c0_46 = arith.constant 0 : index
    %c10 = arith.constant 10 : index
    %c0_47 = arith.constant 0 : index
    %c0_48 = arith.constant 0 : index
    %50 = vector.load %arg1[%c0_46, %c10, %c0_47, %c0_48] : memref<1x36x9x128xf32, #tpu.memory_space<vmem>>, vector<1x8x8x128xf32>
    %51 = vector.shape_cast %50 : vector<1x8x8x128xf32> to vector<8x8x128xf32>
    %52 = vector.shape_cast %51 : vector<8x8x128xf32> to vector<64x128xf32>
    %c7 = arith.constant 7 : index
    %c0_49 = arith.constant 0 : index
    %c0_50 = arith.constant 0 : index
    %53 = vector.load %arg2[%c7, %c0_49, %c0_50] : memref<9x128x128xf32, #tpu.memory_space<vmem>>, vector<1x128x128xf32>
    %54 = vector.shape_cast %53 : vector<1x128x128xf32> to vector<128x128xf32>
    %cst_51 = arith.constant dense<0.000000e+00> : vector<64x128xf32>
    %55 = tpu.matmul %52, %54, %cst_51 {dimension_numbers = #tpu.dot_dimension_numbers<[1], [0], [0], [1], [0, 0, 1, 1], [], []>} : vector<64x128xf32>, vector<128x128xf32>, vector<64x128xf32> -> vector<64x128xf32>
    %56 = arith.addf %49, %55 : vector<64x128xf32>
    %c0_52 = arith.constant 0 : index
    %c1_53 = arith.constant 1 : index
    %c1_54 = arith.constant 1 : index
    %c0_55 = arith.constant 0 : index
    %57 = vector.load %arg1[%c0_52, %c1_53, %c1_54, %c0_55] : memref<1x36x9x128xf32, #tpu.memory_space<vmem>>, vector<1x8x8x128xf32>
    %58 = vector.shape_cast %57 : vector<1x8x8x128xf32> to vector<8x8x128xf32>
    %59 = vector.shape_cast %58 : vector<8x8x128xf32> to vector<64x128xf32>
    %c8 = arith.constant 8 : index
    %c0_56 = arith.constant 0 : index
    %c0_57 = arith.constant 0 : index
    %60 = vector.load %arg2[%c8, %c0_56, %c0_57] : memref<9x128x128xf32, #tpu.memory_space<vmem>>, vector<1x128x128xf32>
    %61 = vector.shape_cast %60 : vector<1x128x128xf32> to vector<128x128xf32>
    %cst_58 = arith.constant dense<0.000000e+00> : vector<64x128xf32>
    %62 = tpu.matmul %59, %61, %cst_58 {dimension_numbers = #tpu.dot_dimension_numbers<[1], [0], [0], [1], [0, 0, 1, 1], [], []>} : vector<64x128xf32>, vector<128x128xf32>, vector<64x128xf32> -> vector<64x128xf32>
    %63 = arith.addf %56, %62 : vector<64x128xf32>
    %c0_59 = arith.constant 0 : index
    %c0_60 = arith.constant 0 : index
    %64 = vector.load %arg3[%c0_59, %c0_60] : memref<1x128xf32, #tpu.memory_space<vmem>>, vector<1x128xf32>
    %65 = vector.broadcast %64 : vector<1x128xf32> to vector<64x128xf32>
    %66 = arith.mulf %63, %65 : vector<64x128xf32>
    %c0_61 = arith.constant 0 : index
    %c0_62 = arith.constant 0 : index
    %67 = vector.load %arg4[%c0_61, %c0_62] : memref<1x128xf32, #tpu.memory_space<vmem>>, vector<1x128xf32>
    %68 = vector.broadcast %67 : vector<1x128xf32> to vector<64x128xf32>
    %69 = arith.addf %66, %68 : vector<64x128xf32>
    %cst_63 = arith.constant 0.000000e+00 : f32
    %70 = vector.broadcast %cst_63 : f32 to vector<64x128xf32>
    %71 = arith.maximumf %69, %70 : vector<64x128xf32>
    %c0_64 = arith.constant 0 : index
    %c0_65 = arith.constant 0 : index
    %c0_66 = arith.constant 0 : index
    %72 = vector.load %arg5[%c0_64, %c0_65, %c0_66] : memref<1x64x128xf32, #tpu.memory_space<vmem>>, vector<1x64x128xf32>
    %73 = vector.shape_cast %72 : vector<1x64x128xf32> to vector<64x128xf32>
    %74 = vector.shape_cast %71 : vector<64x128xf32> to vector<1x64x128xf32>
    tpu.vector_store %arg5[%c0_64, %c0_65, %c0_66], %74 {strides = array<i32>} : memref<1x64x128xf32, #tpu.memory_space<vmem>>, vector<1x64x128xf32>,
    return
  }
  func.func @transform_0(%arg0: i32) -> (i32, i32, i32, i32) {
    %c0_i32 = arith.constant 0 : i32
    %c0_i32_0 = arith.constant 0 : i32
    %c0_i32_1 = arith.constant 0 : i32
    %c0_i32_2 = arith.constant 0 : i32
    return %arg0, %c0_i32, %c0_i32_0, %c0_i32_1 : i32, i32, i32, i32
  }
  func.func @transform_1(%arg0: i32) -> (i32, i32, i32) {
    %c0_i32 = arith.constant 0 : i32
    %c0_i32_0 = arith.constant 0 : i32
    %c0_i32_1 = arith.constant 0 : i32
    %c0_i32_2 = arith.constant 0 : i32
    return %c0_i32, %c0_i32_0, %c0_i32_1 : i32, i32, i32
  }
  func.func @transform_2(%arg0: i32) -> (i32, i32) {
    %c0_i32 = arith.constant 0 : i32
    %c0_i32_0 = arith.constant 0 : i32
    %c0_i32_1 = arith.constant 0 : i32
    return %c0_i32, %c0_i32_0 : i32, i32
  }
  func.func @transform_3(%arg0: i32) -> (i32, i32) {
    %c0_i32 = arith.constant 0 : i32
    %c0_i32_0 = arith.constant 0 : i32
    %c0_i32_1 = arith.constant 0 : i32
    return %c0_i32, %c0_i32_0 : i32, i32
  }
  func.func @transform_4(%arg0: i32) -> (i32, i32, i32) {
    %c0_i32 = arith.constant 0 : i32
    %c0_i32_0 = arith.constant 0 : i32
    %c0_i32_1 = arith.constant 0 : i32
    return %arg0, %c0_i32, %c0_i32_0 : i32, i32, i32
  }
}

module attributes {stable_mosaic.version = 11 : i64} {
  func.func @_mm_bn_kernel(%arg0: i32, %arg1: i32, %arg2: memref<128x128xf32, #tpu.memory_space<vmem>>, %arg3: memref<128x128xf32, #tpu.memory_space<vmem>>, %arg4: memref<1x128xf32, #tpu.memory_space<vmem>>, %arg5: memref<1x128xf32, #tpu.memory_space<vmem>>, %arg6: memref<128x128xf32, #tpu.memory_space<vmem>>, %arg7: memref<128x128xf32, #tpu.memory_space<vmem>>) attributes {dimension_semantics = [#tpu.dimension_semantics<parallel>, #tpu.dimension_semantics<arbitrary>], iteration_bounds = array<i64: 1, 1>, scalar_prefetch = 0 : i64, scratch_operands = 1 : i64, tpu.core_type = #tpu.core_type<tc>, window_params = [{transform_indices = @transform_0, window_bounds = array<i64: 128, 128>}, {transform_indices = @transform_1, window_bounds = array<i64: 128, 128>}, {pipeline_mode = #tpu.pipeline_mode<synchronous>, transform_indices = @transform_2, window_bounds = array<i64: 1, 128>}, {pipeline_mode = #tpu.pipeline_mode<synchronous>, transform_indices = @transform_3, window_bounds = array<i64: 1, 128>}, {transform_indices = @transform_4, window_bounds = array<i64: 128, 128>}]} {
    %c0_i32 = arith.constant 0 : i32
    %0 = arith.cmpi eq, %arg1, %c0_i32 : i32
    %1 = arith.extui %0 : i1 to i32
    %c0_i32_0 = arith.constant 0 : i32
    %2 = arith.cmpi ne, %1, %c0_i32_0 : i32
    scf.if %2 {
      %cst_10 = arith.constant 0.000000e+00 : f32
      %12 = vector.broadcast %cst_10 : f32 to vector<128x128xf32>
      %c0_11 = arith.constant 0 : index
      %c0_12 = arith.constant 0 : index
      %13 = vector.load %arg7[%c0_11, %c0_12] : memref<128x128xf32, #tpu.memory_space<vmem>>, vector<128x128xf32>
      tpu.vector_store %arg7[%c0_11, %c0_12], %12 {strides = array<i32>} : memref<128x128xf32, #tpu.memory_space<vmem>>, vector<128x128xf32>,
    } else {
    }
    %c0 = arith.constant 0 : index
    %c0_1 = arith.constant 0 : index
    %3 = vector.load %arg7[%c0, %c0_1] : memref<128x128xf32, #tpu.memory_space<vmem>>, vector<128x128xf32>
    %c0_2 = arith.constant 0 : index
    %c0_3 = arith.constant 0 : index
    %4 = vector.load %arg2[%c0_2, %c0_3] : memref<128x128xf32, #tpu.memory_space<vmem>>, vector<128x128xf32>
    %c0_4 = arith.constant 0 : index
    %c0_5 = arith.constant 0 : index
    %5 = vector.load %arg3[%c0_4, %c0_5] : memref<128x128xf32, #tpu.memory_space<vmem>>, vector<128x128xf32>
    %cst = arith.constant dense<0.000000e+00> : vector<128x128xf32>
    %6 = tpu.matmul %4, %5, %cst {dimension_numbers = #tpu.dot_dimension_numbers<[1], [0], [0], [1], [0, 0, 1, 1], [], []>} : vector<128x128xf32>, vector<128x128xf32>, vector<128x128xf32> -> vector<128x128xf32>
    %7 = arith.addf %3, %6 : vector<128x128xf32>
    %c0_6 = arith.constant 0 : index
    %c0_7 = arith.constant 0 : index
    %8 = vector.load %arg7[%c0_6, %c0_7] : memref<128x128xf32, #tpu.memory_space<vmem>>, vector<128x128xf32>
    tpu.vector_store %arg7[%c0_6, %c0_7], %7 {strides = array<i32>} : memref<128x128xf32, #tpu.memory_space<vmem>>, vector<128x128xf32>,
    %c0_i32_8 = arith.constant 0 : i32
    %9 = arith.cmpi eq, %arg1, %c0_i32_8 : i32
    %10 = arith.extui %9 : i1 to i32
    %c0_i32_9 = arith.constant 0 : i32
    %11 = arith.cmpi ne, %10, %c0_i32_9 : i32
    scf.if %11 {
      %c0_10 = arith.constant 0 : index
      %c0_11 = arith.constant 0 : index
      %12 = vector.load %arg7[%c0_10, %c0_11] : memref<128x128xf32, #tpu.memory_space<vmem>>, vector<128x128xf32>
      %c0_12 = arith.constant 0 : index
      %c0_13 = arith.constant 0 : index
      %13 = vector.load %arg4[%c0_12, %c0_13] : memref<1x128xf32, #tpu.memory_space<vmem>>, vector<1x128xf32>
      %14 = vector.broadcast %13 : vector<1x128xf32> to vector<128x128xf32>
      %15 = arith.mulf %12, %14 : vector<128x128xf32>
      %c0_14 = arith.constant 0 : index
      %c0_15 = arith.constant 0 : index
      %16 = vector.load %arg5[%c0_14, %c0_15] : memref<1x128xf32, #tpu.memory_space<vmem>>, vector<1x128xf32>
      %17 = vector.broadcast %16 : vector<1x128xf32> to vector<128x128xf32>
      %18 = arith.addf %15, %17 : vector<128x128xf32>
      %c0_16 = arith.constant 0 : index
      %c0_17 = arith.constant 0 : index
      %19 = vector.load %arg6[%c0_16, %c0_17] : memref<128x128xf32, #tpu.memory_space<vmem>>, vector<128x128xf32>
      tpu.vector_store %arg6[%c0_16, %c0_17], %18 {strides = array<i32>} : memref<128x128xf32, #tpu.memory_space<vmem>>, vector<128x128xf32>,
    } else {
    }
    return
  }
  func.func @transform_0(%arg0: i32, %arg1: i32) -> (i32, i32) {
    %c0_i32 = arith.constant 0 : i32
    return %arg0, %arg1 : i32, i32
  }
  func.func @transform_1(%arg0: i32, %arg1: i32) -> (i32, i32) {
    %c0_i32 = arith.constant 0 : i32
    %c0_i32_0 = arith.constant 0 : i32
    return %arg1, %c0_i32 : i32, i32
  }
  func.func @transform_2(%arg0: i32, %arg1: i32) -> (i32, i32) {
    %c0_i32 = arith.constant 0 : i32
    %c0_i32_0 = arith.constant 0 : i32
    %c0_i32_1 = arith.constant 0 : i32
    return %c0_i32, %c0_i32_0 : i32, i32
  }
  func.func @transform_3(%arg0: i32, %arg1: i32) -> (i32, i32) {
    %c0_i32 = arith.constant 0 : i32
    %c0_i32_0 = arith.constant 0 : i32
    %c0_i32_1 = arith.constant 0 : i32
    return %c0_i32, %c0_i32_0 : i32, i32
  }
  func.func @transform_4(%arg0: i32, %arg1: i32) -> (i32, i32) {
    %c0_i32 = arith.constant 0 : i32
    %c0_i32_0 = arith.constant 0 : i32
    return %arg0, %c0_i32 : i32, i32
  }
}

module attributes {stable_mosaic.version = 11 : i64} {
  func.func @_mm_bn_add_relu_kernel(%arg0: i32, %arg1: i32, %arg2: memref<128x128xf32, #tpu.memory_space<vmem>>, %arg3: memref<128x128xf32, #tpu.memory_space<vmem>>, %arg4: memref<1x128xf32, #tpu.memory_space<vmem>>, %arg5: memref<1x128xf32, #tpu.memory_space<vmem>>, %arg6: memref<128x128xf32, #tpu.memory_space<vmem>>, %arg7: memref<128x128xf32, #tpu.memory_space<vmem>>, %arg8: memref<128x128xf32, #tpu.memory_space<vmem>>, %arg9: memref<128x128xf32, #tpu.memory_space<vmem>>) attributes {dimension_semantics = [#tpu.dimension_semantics<parallel>, #tpu.dimension_semantics<arbitrary>], iteration_bounds = array<i64: 1, 1>, scalar_prefetch = 0 : i64, scratch_operands = 1 : i64, tpu.core_type = #tpu.core_type<tc>, window_params = [{transform_indices = @transform_0, window_bounds = array<i64: 128, 128>}, {transform_indices = @transform_1, window_bounds = array<i64: 128, 128>}, {pipeline_mode = #tpu.pipeline_mode<synchronous>, transform_indices = @transform_2, window_bounds = array<i64: 1, 128>}, {pipeline_mode = #tpu.pipeline_mode<synchronous>, transform_indices = @transform_3, window_bounds = array<i64: 1, 128>}, {transform_indices = @transform_4, window_bounds = array<i64: 128, 128>}, {transform_indices = @transform_5, window_bounds = array<i64: 128, 128>}, {transform_indices = @transform_6, window_bounds = array<i64: 128, 128>}]} {
    %c0_i32 = arith.constant 0 : i32
    %0 = arith.cmpi eq, %arg1, %c0_i32 : i32
    %1 = arith.extui %0 : i1 to i32
    %c0_i32_0 = arith.constant 0 : i32
    %2 = arith.cmpi ne, %1, %c0_i32_0 : i32
    scf.if %2 {
      %cst_10 = arith.constant 0.000000e+00 : f32
      %12 = vector.broadcast %cst_10 : f32 to vector<128x128xf32>
      %c0_11 = arith.constant 0 : index
      %c0_12 = arith.constant 0 : index
      %13 = vector.load %arg9[%c0_11, %c0_12] : memref<128x128xf32, #tpu.memory_space<vmem>>, vector<128x128xf32>
      tpu.vector_store %arg9[%c0_11, %c0_12], %12 {strides = array<i32>} : memref<128x128xf32, #tpu.memory_space<vmem>>, vector<128x128xf32>,
    } else {
    }
    %c0 = arith.constant 0 : index
    %c0_1 = arith.constant 0 : index
    %3 = vector.load %arg9[%c0, %c0_1] : memref<128x128xf32, #tpu.memory_space<vmem>>, vector<128x128xf32>
    %c0_2 = arith.constant 0 : index
    %c0_3 = arith.constant 0 : index
    %4 = vector.load %arg2[%c0_2, %c0_3] : memref<128x128xf32, #tpu.memory_space<vmem>>, vector<128x128xf32>
    %c0_4 = arith.constant 0 : index
    %c0_5 = arith.constant 0 : index
    %5 = vector.load %arg3[%c0_4, %c0_5] : memref<128x128xf32, #tpu.memory_space<vmem>>, vector<128x128xf32>
    %cst = arith.constant dense<0.000000e+00> : vector<128x128xf32>
    %6 = tpu.matmul %4, %5, %cst {dimension_numbers = #tpu.dot_dimension_numbers<[1], [0], [0], [1], [0, 0, 1, 1], [], []>} : vector<128x128xf32>, vector<128x128xf32>, vector<128x128xf32> -> vector<128x128xf32>
    %7 = arith.addf %3, %6 : vector<128x128xf32>
    %c0_6 = arith.constant 0 : index
    %c0_7 = arith.constant 0 : index
    %8 = vector.load %arg9[%c0_6, %c0_7] : memref<128x128xf32, #tpu.memory_space<vmem>>, vector<128x128xf32>
    tpu.vector_store %arg9[%c0_6, %c0_7], %7 {strides = array<i32>} : memref<128x128xf32, #tpu.memory_space<vmem>>, vector<128x128xf32>,
    %c0_i32_8 = arith.constant 0 : i32
    %9 = arith.cmpi eq, %arg1, %c0_i32_8 : i32
    %10 = arith.extui %9 : i1 to i32
    %c0_i32_9 = arith.constant 0 : i32
    %11 = arith.cmpi ne, %10, %c0_i32_9 : i32
    scf.if %11 {
      %c0_10 = arith.constant 0 : index
      %c0_11 = arith.constant 0 : index
      %12 = vector.load %arg9[%c0_10, %c0_11] : memref<128x128xf32, #tpu.memory_space<vmem>>, vector<128x128xf32>
      %c0_12 = arith.constant 0 : index
      %c0_13 = arith.constant 0 : index
      %13 = vector.load %arg4[%c0_12, %c0_13] : memref<1x128xf32, #tpu.memory_space<vmem>>, vector<1x128xf32>
      %14 = vector.broadcast %13 : vector<1x128xf32> to vector<128x128xf32>
      %15 = arith.mulf %12, %14 : vector<128x128xf32>
      %c0_14 = arith.constant 0 : index
      %c0_15 = arith.constant 0 : index
      %16 = vector.load %arg5[%c0_14, %c0_15] : memref<1x128xf32, #tpu.memory_space<vmem>>, vector<1x128xf32>
      %17 = vector.broadcast %16 : vector<1x128xf32> to vector<128x128xf32>
      %18 = arith.addf %15, %17 : vector<128x128xf32>
      %c0_16 = arith.constant 0 : index
      %c0_17 = arith.constant 0 : index
      %19 = vector.load %arg6[%c0_16, %c0_17] : memref<128x128xf32, #tpu.memory_space<vmem>>, vector<128x128xf32>
      %20 = arith.addf %18, %19 : vector<128x128xf32>
      %c0_18 = arith.constant 0 : index
      %c0_19 = arith.constant 0 : index
      %21 = vector.load %arg8[%c0_18, %c0_19] : memref<128x128xf32, #tpu.memory_space<vmem>>, vector<128x128xf32>
      tpu.vector_store %arg8[%c0_18, %c0_19], %20 {strides = array<i32>} : memref<128x128xf32, #tpu.memory_space<vmem>>, vector<128x128xf32>,
      %cst_20 = arith.constant 0.000000e+00 : f32
      %22 = vector.broadcast %cst_20 : f32 to vector<128x128xf32>
      %23 = arith.maximumf %20, %22 : vector<128x128xf32>
      %c0_21 = arith.constant 0 : index
      %c0_22 = arith.constant 0 : index
      %24 = vector.load %arg7[%c0_21, %c0_22] : memref<128x128xf32, #tpu.memory_space<vmem>>, vector<128x128xf32>
      tpu.vector_store %arg7[%c0_21, %c0_22], %23 {strides = array<i32>} : memref<128x128xf32, #tpu.memory_space<vmem>>, vector<128x128xf32>,
    } else {
    }
    return
  }
  func.func @transform_0(%arg0: i32, %arg1: i32) -> (i32, i32) {
    %c0_i32 = arith.constant 0 : i32
    return %arg0, %arg1 : i32, i32
  }
  func.func @transform_1(%arg0: i32, %arg1: i32) -> (i32, i32) {
    %c0_i32 = arith.constant 0 : i32
    %c0_i32_0 = arith.constant 0 : i32
    return %arg1, %c0_i32 : i32, i32
  }
  func.func @transform_2(%arg0: i32, %arg1: i32) -> (i32, i32) {
    %c0_i32 = arith.constant 0 : i32
    %c0_i32_0 = arith.constant 0 : i32
    %c0_i32_1 = arith.constant 0 : i32
    return %c0_i32, %c0_i32_0 : i32, i32
  }
  func.func @transform_3(%arg0: i32, %arg1: i32) -> (i32, i32) {
    %c0_i32 = arith.constant 0 : i32
    %c0_i32_0 = arith.constant 0 : i32
    %c0_i32_1 = arith.constant 0 : i32
    return %c0_i32, %c0_i32_0 : i32, i32
  }
  func.func @transform_4(%arg0: i32, %arg1: i32) -> (i32, i32) {
    %c0_i32 = arith.constant 0 : i32
    %c0_i32_0 = arith.constant 0 : i32
    return %arg0, %c0_i32 : i32, i32
  }
  func.func @transform_5(%arg0: i32, %arg1: i32) -> (i32, i32) {
    %c0_i32 = arith.constant 0 : i32
    %c0_i32_0 = arith.constant 0 : i32
    return %arg0, %c0_i32 : i32, i32
  }
  func.func @transform_6(%arg0: i32, %arg1: i32) -> (i32, i32) {
    %c0_i32 = arith.constant 0 : i32
    %c0_i32_0 = arith.constant 0 : i32
    return %arg0, %c0_i32 : i32, i32
  }
}

</mosaic_0001>

<llo_original>
// kernel: bottleneck_pallas.4
$region0: #{bottleneck_pallas.4}
  #allocation0 [shape = 'u32[]', space=smem, size = 0x4, offset = 0x4, fixed_abs, tag = 'smem constant byte address 0x4 - core index']
  #allocation1 [shape = 'u32[144,128]{1,0:T(1,128)}', space=vmem, size = 0x12000, scoped, tag = 'internal scratch']
  #allocation2 [shape = 'f32[256,128]{1,0:T(8,128)}', space=vmem, size = 0x20000, scoped, tag = 'scratch operand']
  %s0 = inlined_call_operand.vmem [shape: f32[512,128], index: 0, kind: input, shape index: {}]
  %s1 = inlined_call_operand.vmem [shape: f32[128,128], index: 1, kind: input, shape index: {}]
  %s2 = inlined_call_operand.vmem [shape: f32[1,128], index: 2, kind: input, shape index: {}]
  %s3 = inlined_call_operand.vmem [shape: f32[1,128], index: 3, kind: input, shape index: {}]
  %s4 = inlined_call_operand.vmem [shape: f32[512,128], index: 4, kind: output, shape index: {}]
  %s5 = sld [smem:[#allocation0]]
  $region57: #{bottleneck_pallas.4} parent=0
    _
  %s7 = ssub.s32 1, %s5
  %s8 = scalar_select 0, %s7, %s5
  loop: start=0, step=1, limit=4
  $region2: #{bottleneck_pallas.4} parent=0 // loop_pre_header
    _
  $region3: #{bottleneck_pallas.4} parent=0 // loop_header
    %s10 = sphi 0, %s14
    %p11 = scmp.ge.s32.totalorder %s10, 4
    %s17 = sphi 0, %s29
    %s18 = sphi 0, %s25
    %s19 = sphi 0, %s17
    %s20 = sphi 0, %s18
    %s21 = sphi 0, %s19
    %s22 = sphi 0, %s20
    %s34 = sphi 0, %s36
    %s37 = sphi 0, %s34
    %s38 = sphi 0, %s37
    %s54 = sphi 0, %s38
    %s60 = sphi 0, %s62
    %s63 = sphi 0, %s60
    %s64 = sphi 0, %s63
    %s80 = sphi 0, %s64
    %s84 = sphi 0, %s84
    %s86 = sphi 0, %s84
    %s87 = sphi 0, %s86
    %s101 = sphi 0, %s87
    %s105 = sphi 0, %s105
    %s107 = sphi 0, %s105
    %s108 = sphi 0, %s107
    %s122 = sphi 0, %s108
    %s128 = sphi 0, %s130
    %s131 = sphi 0, %s128
    %s132 = sphi 0, %s131
    %s148 = sphi 0, %s132
  $region4: #{bottleneck_pallas.4} parent=0 // loop_header_branch
    %13 = sbr.rel (%p11) target = $region8
  $region5: #{bottleneck_pallas.4} parent=0 // loop_body
    %s15 = ssub.s32 %s10, 1
    %s16 = ssub.s32 %s10, 2
    %s23 = sadd.s32 1, %s18
    %p24 = scmp.ge.s32.totalorder %s23, 1
    %s25 = scalar_select %p24, 0, %s23
    %s26 = sadd.s32 1, %s17
    %s27 = scalar_select %p24, %s26, %s17
    %p28 = scmp.ge.s32.totalorder %s27, 2
    %s29 = scalar_select %p28, 0, %s27
    %s30 = ssub.s32 %s17, %s29
    %s31 = ssub.s32 %s18, %s25
    %s32 = sor.u32 %s30, %s31
    %p33 = scmp.eq.s32.totalorder %s32, 0
    %s35 = sadd.s32 %s34, 1
    %s36 = scalar_select %p33, %s34, %s35
    %p39 = pneg %p33
    %p40 = scmp.eq.s32.totalorder %s10, 1
    %p41 = por %p39, %p40
    %p42 = scmp.ne.s32.totalorder %s34, %s37
    %p43 = scmp.eq.s32.totalorder %s10, 0
    %p44 = por %p42, %p43
    %p45 = scmp.ne.s32.totalorder %s34, %s37
    %p46 = scmp.eq.s32.totalorder %s15, 1
    %p47 = por %p45, %p46
    %p48 = scmp.ne.s32.totalorder %s37, %s38
    %p49 = scmp.eq.s32.totalorder %s15, 0
    %p50 = por %p48, %p49
    %p51 = scmp.ne.s32.totalorder %s37, %s38
    %p52 = scmp.eq.s32.totalorder %s16, 1
    %p53 = por %p51, %p52
    %p55 = scmp.ne.s32.totalorder %s38, %s54
    %p56 = scmp.eq.s32.totalorder %s16, 0
    %p57 = por %p55, %p56
    %s58 = ssub.s32 %s18, %s25
    %p59 = scmp.eq.s32.totalorder %s58, 0
    %s61 = sadd.s32 %s60, 1
    %s62 = scalar_select %p59, %s60, %s61
    %p65 = pneg %p59
    %p66 = scmp.eq.s32.totalorder %s10, 1
    %p67 = por %p65, %p66
    %p68 = scmp.ne.s32.totalorder %s60, %s63
    %p69 = scmp.eq.s32.totalorder %s10, 0
    %p70 = por %p68, %p69
    %p71 = scmp.ne.s32.totalorder %s60, %s63
    %p72 = scmp.eq.s32.totalorder %s15, 1
    %p73 = por %p71, %p72
    %p74 = scmp.ne.s32.totalorder %s63, %s64
    %p75 = scmp.eq.s32.totalorder %s15, 0
    %p76 = por %p74, %p75
    %p77 = scmp.ne.s32.totalorder %s63, %s64
    %p78 = scmp.eq.s32.totalorder %s16, 1
    %p79 = por %p77, %p78
    %p81 = scmp.ne.s32.totalorder %s64, %s80
    %p82 = scmp.eq.s32.totalorder %s16, 0
    %p83 = por %p81, %p82
    %s85 = sadd.s32 %s84, 1
    %p88 = scmp.eq.s32.totalorder %s10, 1
    %p89 = scmp.ne.s32.totalorder %s84, %s86
    %p90 = scmp.eq.s32.totalorder %s10, 0
    %p91 = por %p89, %p90
    %p92 = scmp.ne.s32.totalorder %s84, %s86
    %p93 = scmp.eq.s32.totalorder %s15, 1
    %p94 = por %p92, %p93
    %p95 = scmp.ne.s32.totalorder %s86, %s87
    %p96 = scmp.eq.s32.totalorder %s15, 0
    %p97 = por %p95, %p96
    %p98 = scmp.ne.s32.totalorder %s86, %s87
    %p99 = scmp.eq.s32.totalorder %s16, 1
    %p100 = por %p98, %p99
    %p102 = scmp.ne.s32.totalorder %s87, %s101
    %p103 = scmp.eq.s32.totalorder %s16, 0
    %p104 = por %p102, %p103
    %s106 = sadd.s32 %s105, 1
    %p109 = scmp.eq.s32.totalorder %s10, 1
    %p110 = scmp.ne.s32.totalorder %s105, %s107
    %p111 = scmp.eq.s32.totalorder %s10, 0
    %p112 = por %p110, %p111
    %p113 = scmp.ne.s32.totalorder %s105, %s107
    %p114 = scmp.eq.s32.totalorder %s15, 1
    %p115 = por %p113, %p114
    %p116 = scmp.ne.s32.totalorder %s107, %s108
    %p117 = scmp.eq.s32.totalorder %s15, 0
    %p118 = por %p116, %p117
    %p119 = scmp.ne.s32.totalorder %s107, %s108
    %p120 = scmp.eq.s32.totalorder %s16, 1
    %p121 = por %p119, %p120
    %p123 = scmp.ne.s32.totalorder %s108, %s122
    %p124 = scmp.eq.s32.totalorder %s16, 0
    %p125 = por %p123, %p124
    %s126 = ssub.s32 %s17, %s29
    %p127 = scmp.eq.s32.totalorder %s126, 0
    %s129 = sadd.s32 %s128, 1
    %s130 = scalar_select %p127, %s128, %s129
    %p133 = pneg %p127
    %p134 = scmp.eq.s32.totalorder %s10, 1
    %p135 = por %p133, %p134
    %p136 = scmp.ne.s32.totalorder %s128, %s131
    %p137 = scmp.eq.s32.totalorder %s10, 0
    %p138 = por %p136, %p137
    %p139 = scmp.ne.s32.totalorder %s128, %s131
    %p140 = scmp.eq.s32.totalorder %s15, 1
    %p141 = por %p139, %p140
    %p142 = scmp.ne.s32.totalorder %s131, %s132
    %p143 = scmp.eq.s32.totalorder %s15, 0
    %p144 = por %p142, %p143
    %p145 = scmp.ne.s32.totalorder %s131, %s132
    %p146 = scmp.eq.s32.totalorder %s16, 1
    %p147 = por %p145, %p146
    %p149 = scmp.ne.s32.totalorder %s132, %s148
    %p150 = scmp.eq.s32.totalorder %s16, 0
    %p151 = por %p149, %p150
    %p152 = scmp.le.s32.totalorder 1, %s10
    %p153 = scmp.lt.s32.totalorder %s10, 3
    %p154 = pnand %p152, %p153
    %p155 = pneg %p154
    // Predicated region
    $region9: #{bottleneck_pallas.4} parent=5 // pred_check
      _
    $region10: #{bottleneck_pallas.4} parent=5 // pred_check_branch
      %157 = sbr.rel (%p154) target = $region12
    $region11: #{bottleneck_pallas.4} parent=5 // pred_region
      %s158 = ssub.s32 %s10, 1
      // Predicated region
      $region13: #{bottleneck_pallas.4} parent=11 // pred_check
        %p159 = pneg %p76
      $region14: #{bottleneck_pallas.4} parent=11 // pred_check_branch
        %161 = sbr.rel (%p159) target = $region16
      $region15: #{bottleneck_pallas.4} parent=11 // pred_region
        %s162 = smul.u32 16, %s20
        %p163 = scmp.lt.s32.totalorder %s162, 15
        %s164 = scalar_select %p163, %s162, 15
        %s165 = smul.addr %s164, 8
        %s166 = scalar_lea.vmem %s1, %s165
        %s167 = smul.u32 16, %s20
      $region16: #{bottleneck_pallas.4} parent=11 // pred_fallthru
        _
      // Predicated region
      $region17: #{bottleneck_pallas.4} parent=11 // pred_check
        %p168 = pneg %p97
      $region18: #{bottleneck_pallas.4} parent=11 // pred_check_branch
        %170 = sbr.rel (%p168) target = $region20
      $region19: #{bottleneck_pallas.4} parent=11 // pred_region
        _
      $region20: #{bottleneck_pallas.4} parent=11 // pred_fallthru
        _
      // Predicated region
      $region21: #{bottleneck_pallas.4} parent=11 // pred_check
        %p171 = pneg %p118
      $region22: #{bottleneck_pallas.4} parent=11 // pred_check_branch
        %173 = sbr.rel (%p171) target = $region24
      $region23: #{bottleneck_pallas.4} parent=11 // pred_region
        _
      $region24: #{bottleneck_pallas.4} parent=11 // pred_fallthru
        _
    $region12: #{bottleneck_pallas.4} parent=5 // pred_fallthru
      _
    %p174 = scmp.lt.s32.totalorder %s10, 2
    // Predicated region
    $region25: #{bottleneck_pallas.4} parent=5 // pred_check
      %p175 = pneg %p174
    $region26: #{bottleneck_pallas.4} parent=5 // pred_check_branch
      %177 = sbr.rel (%p175) target = $region28
    $region27: #{bottleneck_pallas.4} parent=5 // pred_region
      // Predicated region
      $region29: #{bottleneck_pallas.4} parent=27 // pred_check
        %p178 = pneg %p44
      $region30: #{bottleneck_pallas.4} parent=27 // pred_check_branch
        %180 = sbr.rel (%p178) target = $region32
      $region31: #{bottleneck_pallas.4} parent=27 // pred_region
        %s181 = smul.u32 32, %s17
        %p182 = scmp.lt.s32.totalorder %s181, 63
        %s183 = scalar_select %p182, %s181, 63
        %p184 = scmp.lt.s32.totalorder %s18, 0
        %s185 = scalar_select %p184, %s18, 0
        %s186 = sadd.s32 %s185, %s183
        %s187 = smul.addr %s186, 8
        %s188 = scalar_lea.vmem %s0, %s187
        %s189 = smul.u32 32, %s17
      $region32: #{bottleneck_pallas.4} parent=27 // pred_fallthru
        _
    $region28: #{bottleneck_pallas.4} parent=5 // pred_fallthru
      _
    %p190 = scmp.le.s32.totalorder 1, %s10
    %p191 = scmp.lt.s32.totalorder %s10, 3
    %p192 = pnand %p190, %p191
    %p193 = pneg %p192
    // Predicated region
    $region33: #{bottleneck_pallas.4} parent=5 // pred_check
      _
    $region34: #{bottleneck_pallas.4} parent=5 // pred_check_branch
      %195 = sbr.rel (%p192) target = $region36
    $region35: #{bottleneck_pallas.4} parent=5 // pred_region
      %s196 = ssub.s32 %s10, 1
      %s197 = smul.u32 32, %s19
      %p198 = scmp.lt.s32.totalorder %s197, 63
      %s199 = scalar_select %p198, %s197, 63
      %p200 = scmp.lt.s32.totalorder %s20, 0
      %s201 = scalar_select %p200, %s20, 0
      %s202 = sadd.s32 %s201, %s199
      %s203 = smul.addr %s202, 8
      %s204 = scalar_lea.vmem %s0, %s203
      %p205 = pneg %p50
      %p206 = pneg %p47
      %s207 = smul.u32 16, %s20
      %p208 = scmp.lt.s32.totalorder %s207, 15
      %s209 = scalar_select %p208, %s207, 15
      %s210 = smul.addr %s209, 8
      %s211 = scalar_lea.vmem %s1, %s210
      %p212 = pneg %p76
      %p213 = pneg %p73
      %p214 = pneg %p97
      %p215 = pneg %p94
      %p216 = pneg %p118
      %p217 = pneg %p115
      %p218 = pneg %p144
      %p219 = pneg %p141
      %s220 = smul.u32 32, %s19
      %p221 = scmp.lt.s32.totalorder %s220, 63
      %s222 = scalar_select %p221, %s220, 63
      %s223 = smul.addr %s222, 8
      %s224 = scalar_lea.vmem %s4, %s223
      %s225 = smul.u32 32, %s19
      %p226 = scmp.lt.s32.totalorder %s225, 63
      %s227 = scalar_select %p226, %s225, 63
      %p228 = scmp.lt.s32.totalorder %s20, 0
      %s229 = scalar_select %p228, %s20, 0
      %s230 = sadd.s32 %s229, %s227
      %s231 = smul.addr %s230, 8
      %s232 = scalar_lea.vmem %s0, %s231
      %s233 = smul.u32 32, %s19
      %s234 = smul.u32 16, %s20
      %p235 = scmp.lt.s32.totalorder %s234, 15
      %s236 = scalar_select %p235, %s234, 15
      %s237 = smul.addr %s236, 8
      %s238 = scalar_lea.vmem %s1, %s237
      %s239 = smul.u32 16, %s20
      %s240 = smul.u32 32, %s19
      %p241 = scmp.lt.s32.totalorder %s240, 63
      %s242 = scalar_select %p241, %s240, 63
      %s243 = smul.addr %s242, 8
      %s244 = scalar_lea.vmem %s4, %s243
      %s245 = smul.u32 32, %s19
      %p246 = scmp.eq.s32.totalorder %s20, 0
      // Predicated region
      $region37: #{bottleneck_pallas.4} parent=35 // pred_check
        %p247 = pneg %p246
      $region38: #{bottleneck_pallas.4} parent=35 // pred_check_branch
        %249 = sbr.rel (%p247) target = $region40
      $region39: #{bottleneck_pallas.4} parent=35 // pred_region
        %250 = vst [vmem:[#allocation2] sm:$0xff] 0.0
        %251 = vst [vmem:[#allocation2 + $0x8] sm:$0xff] 0.0
        %252 = vst [vmem:[#allocation2 + $0x10] sm:$0xff] 0.0
        %253 = vst [vmem:[#allocation2 + $0x18] sm:$0xff] 0.0
        %254 = vst [vmem:[#allocation2 + $0x20] sm:$0xff] 0.0
        %255 = vst [vmem:[#allocation2 + $0x28] sm:$0xff] 0.0
        %256 = vst [vmem:[#allocation2 + $0x30] sm:$0xff] 0.0
        %257 = vst [vmem:[#allocation2 + $0x38] sm:$0xff] 0.0
        %258 = vst [vmem:[#allocation2 + $0x40] sm:$0xff] 0.0
        %259 = vst [vmem:[#allocation2 + $0x48] sm:$0xff] 0.0
        %260 = vst [vmem:[#allocation2 + $0x50] sm:$0xff] 0.0
        %261 = vst [vmem:[#allocation2 + $0x58] sm:$0xff] 0.0
        %262 = vst [vmem:[#allocation2 + $0x60] sm:$0xff] 0.0
        %263 = vst [vmem:[#allocation2 + $0x68] sm:$0xff] 0.0
        %264 = vst [vmem:[#allocation2 + $0x70] sm:$0xff] 0.0
        %265 = vst [vmem:[#allocation2 + $0x78] sm:$0xff] 0.0
        %266 = vst [vmem:[#allocation2 + $0x80] sm:$0xff] 0.0
        %267 = vst [vmem:[#allocation2 + $0x88] sm:$0xff] 0.0
        %268 = vst [vmem:[#allocation2 + $0x90] sm:$0xff] 0.0
        %269 = vst [vmem:[#allocation2 + $0x98] sm:$0xff] 0.0
        %270 = vst [vmem:[#allocation2 + $0xa0] sm:$0xff] 0.0
        %271 = vst [vmem:[#allocation2 + $0xa8] sm:$0xff] 0.0
        %272 = vst [vmem:[#allocation2 + $0xb0] sm:$0xff] 0.0
        %273 = vst [vmem:[#allocation2 + $0xb8] sm:$0xff] 0.0
        %274 = vst [vmem:[#allocation2 + $0xc0] sm:$0xff] 0.0
        %275 = vst [vmem:[#allocation2 + $0xc8] sm:$0xff] 0.0
        %276 = vst [vmem:[#allocation2 + $0xd0] sm:$0xff] 0.0
        %277 = vst [vmem:[#allocation2 + $0xd8] sm:$0xff] 0.0
        %278 = vst [vmem:[#allocation2 + $0xe0] sm:$0xff] 0.0
        %279 = vst [vmem:[#allocation2 + $0xe8] sm:$0xff] 0.0
        %280 = vst [vmem:[#allocation2 + $0xf0] sm:$0xff] 0.0
        %281 = vst [vmem:[#allocation2 + $0xf8] sm:$0xff] 0.0
      $region40: #{bottleneck_pallas.4} parent=35 // pred_fallthru
        _
      %v282 = vld [vmem:[#allocation2] sm:$0xff]
      %v283 = vld [vmem:[#allocation2 + $0x8] sm:$0xff]
      %v284 = vld [vmem:[#allocation2 + $0x10] sm:$0xff]
      %v285 = vld [vmem:[#allocation2 + $0x18] sm:$0xff]
      %v286 = vld [vmem:[#allocation2 + $0x20] sm:$0xff]
      %v287 = vld [vmem:[#allocation2 + $0x28] sm:$0xff]
      %v288 = vld [vmem:[#allocation2 + $0x30] sm:$0xff]
      %v289 = vld [vmem:[#allocation2 + $0x38] sm:$0xff]
      %v290 = vld [vmem:[#allocation2 + $0x40] sm:$0xff]
      %v291 = vld [vmem:[#allocation2 + $0x48] sm:$0xff]
      %v292 = vld [vmem:[#allocation2 + $0x50] sm:$0xff]
      %v293 = vld [vmem:[#allocation2 + $0x58] sm:$0xff]
      %v294 = vld [vmem:[#allocation2 + $0x60] sm:$0xff]
      %v295 = vld [vmem:[#allocation2 + $0x68] sm:$0xff]
      %v296 = vld [vmem:[#allocation2 + $0x70] sm:$0xff]
      %v297 = vld [vmem:[#allocation2 + $0x78] sm:$0xff]
      %v298 = vld [vmem:[#allocation2 + $0x80] sm:$0xff]
      %v299 = vld [vmem:[#allocation2 + $0x88] sm:$0xff]
      %v300 = vld [vmem:[#allocation2 + $0x90] sm:$0xff]
      %v301 = vld [vmem:[#allocation2 + $0x98] sm:$0xff]
      %v302 = vld [vmem:[#allocation2 + $0xa0] sm:$0xff]
      %v303 = vld [vmem:[#allocation2 + $0xa8] sm:$0xff]
      %v304 = vld [vmem:[#allocation2 + $0xb0] sm:$0xff]
      %v305 = vld [vmem:[#allocation2 + $0xb8] sm:$0xff]
      %v306 = vld [vmem:[#allocation2 + $0xc0] sm:$0xff]
      %v307 = vld [vmem:[#allocation2 + $0xc8] sm:$0xff]
      %v308 = vld [vmem:[#allocation2 + $0xd0] sm:$0xff]
      %v309 = vld [vmem:[#allocation2 + $0xd8] sm:$0xff]
      %v310 = vld [vmem:[#allocation2 + $0xe0] sm:$0xff]
      %v311 = vld [vmem:[#allocation2 + $0xe8] sm:$0xff]
      %v312 = vld [vmem:[#allocation2 + $0xf0] sm:$0xff]
      %v313 = vld [vmem:[#allocation2 + $0xf8] sm:$0xff]
      %v314 = vld [vmem:[%s232] sm:$0xff]
      %v315 = vld [vmem:[%s232 + $0x8] sm:$0xff]
      %v316 = vld [vmem:[%s232 + $0x10] sm:$0xff]
      %v317 = vld [vmem:[%s232 + $0x18] sm:$0xff]
      %v318 = vld [vmem:[%s232 + $0x20] sm:$0xff]
      %v319 = vld [vmem:[%s232 + $0x28] sm:$0xff]
      %v320 = vld [vmem:[%s232 + $0x30] sm:$0xff]
      %v321 = vld [vmem:[%s232 + $0x38] sm:$0xff]
      %v322 = vld [vmem:[%s232 + $0x40] sm:$0xff]
      %v323 = vld [vmem:[%s232 + $0x48] sm:$0xff]
      %v324 = vld [vmem:[%s232 + $0x50] sm:$0xff]
      %v325 = vld [vmem:[%s232 + $0x58] sm:$0xff]
      %v326 = vld [vmem:[%s232 + $0x60] sm:$0xff]
      %v327 = vld [vmem:[%s232 + $0x68] sm:$0xff]
      %v328 = vld [vmem:[%s232 + $0x70] sm:$0xff]
      %v329 = vld [vmem:[%s232 + $0x78] sm:$0xff]
      %v330 = vld [vmem:[%s232 + $0x80] sm:$0xff]
      %v331 = vld [vmem:[%s232 + $0x88] sm:$0xff]
      %v332 = vld [vmem:[%s232 + $0x90] sm:$0xff]
      %v333 = vld [vmem:[%s232 + $0x98] sm:$0xff]
      %v334 = vld [vmem:[%s232 + $0xa0] sm:$0xff]
      %v335 = vld [vmem:[%s232 + $0xa8] sm:$0xff]
      %v336 = vld [vmem:[%s232 + $0xb0] sm:$0xff]
      %v337 = vld [vmem:[%s232 + $0xb8] sm:$0xff]
      %v338 = vld [vmem:[%s232 + $0xc0] sm:$0xff]
      %v339 = vld [vmem:[%s232 + $0xc8] sm:$0xff]
      %v340 = vld [vmem:[%s232 + $0xd0] sm:$0xff]
      %v341 = vld [vmem:[%s232 + $0xd8] sm:$0xff]
      %v342 = vld [vmem:[%s232 + $0xe0] sm:$0xff]
      %v343 = vld [vmem:[%s232 + $0xe8] sm:$0xff]
      %v344 = vld [vmem:[%s232 + $0xf0] sm:$0xff]
      %v345 = vld [vmem:[%s232 + $0xf8] sm:$0xff]
      %v346 = vld [vmem:[%s238] sm:$0xff]
      %v347 = vld [vmem:[%s238 + $0x8] sm:$0xff]
      %v348 = vld [vmem:[%s238 + $0x10] sm:$0xff]
      %v349 = vld [vmem:[%s238 + $0x18] sm:$0xff]
      %v350 = vld [vmem:[%s238 + $0x20] sm:$0xff]
      %v351 = vld [vmem:[%s238 + $0x28] sm:$0xff]
      %v352 = vld [vmem:[%s238 + $0x30] sm:$0xff]
      %v353 = vld [vmem:[%s238 + $0x38] sm:$0xff]
      %v354 = vld [vmem:[%s238 + $0x40] sm:$0xff]
      %v355 = vld [vmem:[%s238 + $0x48] sm:$0xff]
      %v356 = vld [vmem:[%s238 + $0x50] sm:$0xff]
      %v357 = vld [vmem:[%s238 + $0x58] sm:$0xff]
      %v358 = vld [vmem:[%s238 + $0x60] sm:$0xff]
      %v359 = vld [vmem:[%s238 + $0x68] sm:$0xff]
      %v360 = vld [vmem:[%s238 + $0x70] sm:$0xff]
      %v361 = vld [vmem:[%s238 + $0x78] sm:$0xff]
      %362 = vmatprep.subr.mxu0 0.0
      %363 = vmatpush1.msra.mxu0 %v346
      %364 = vmatprep.subr.mxu0 0.0
      %365 = vmatpush1.msra.mxu0 %v347
      %366 = vmatprep.subr.mxu0 0.0
      %367 = vmatpush1.msra.mxu0 %v348
      %368 = vmatprep.subr.mxu0 0.0
      %369 = vmatpush1.msra.mxu0 %v349
      %370 = vmatprep.subr.mxu0 0.0
      %371 = vmatpush1.msra.mxu0 %v350
      %372 = vmatprep.subr.mxu0 0.0
      %373 = vmatpush1.msra.mxu0 %v351
      %374 = vmatprep.subr.mxu0 0.0
      %375 = vmatpush1.msra.mxu0 %v352
      %376 = vmatprep.subr.mxu0 0.0
      %377 = vmatpush1.msra.mxu0 %v353
      %378 = vmatprep.subr.mxu0 0.0
      %379 = vmatpush1.msra.mxu0 %v354
      %380 = vmatprep.subr.mxu0 0.0
      %381 = vmatpush1.msra.mxu0 %v355
      %382 = vmatprep.subr.mxu0 0.0
      %383 = vmatpush1.msra.mxu0 %v356
      %384 = vmatprep.subr.mxu0 0.0
      %385 = vmatpush1.msra.mxu0 %v357
      %386 = vmatprep.subr.mxu0 0.0
      %387 = vmatpush1.msra.mxu0 %v358
      %388 = vmatprep.subr.mxu0 0.0
      %389 = vmatpush1.msra.mxu0 %v359
      %390 = vmatprep.subr.mxu0 0.0
      %391 = vmatpush1.msra.mxu0 %v360
      %392 = vmatprep.subr.mxu0 0.0
      %393 = vmatpush1.msra.mxu0 %v361
      %394 = vmatprep.subr.mxu0 0.0
      %395 = vmatpush1.msra.mxu0 0.0
      %396 = vmatprep.subr.mxu0 0.0
      %397 = vmatpush1.msra.mxu0 0.0
      %398 = vmatprep.subr.mxu0 0.0
      %399 = vmatpush1.msra.mxu0 0.0
      %400 = vmatprep.subr.mxu0 0.0
      %401 = vmatpush1.msra.mxu0 0.0
      %402 = vmatprep.subr.mxu0 0.0
      %403 = vmatpush1.msra.mxu0 0.0
      %404 = vmatprep.subr.mxu0 0.0
      %405 = vmatpush1.msra.mxu0 0.0
      %406 = vmatprep.subr.mxu0 0.0
      %407 = vmatpush1.msra.mxu0 0.0
      %408 = vmatprep.subr.mxu0 0.0
      %409 = vmatpush1.msra.mxu0 0.0
      %410 = vmatprep.subr.mxu0 0.0
      %411 = vmatpush1.msra.mxu0 0.0
      %412 = vmatprep.subr.mxu0 0.0
      %413 = vmatpush1.msra.mxu0 0.0
      %414 = vmatprep.subr.mxu0 0.0
      %415 = vmatpush1.msra.mxu0 0.0
      %416 = vmatprep.subr.mxu0 0.0
      %417 = vmatpush1.msra.mxu0 0.0
      %418 = vmatprep.subr.mxu0 0.0
      %419 = vmatpush1.msra.mxu0 0.0
      %420 = vmatprep.subr.mxu0 0.0
      %421 = vmatpush1.msra.mxu0 0.0
      %422 = vmatprep.subr.mxu0 0.0
      %423 = vmatpush1.msra.mxu0 0.0
      %424 = vmatprep.subr.mxu0 0.0
      %425 = vmatpush1.msra.mxu0 0.0
      %426 = vmatprep.mubr.f32.mxu0 0.0
      %427 = vmatmul.mubr.f32.gmra.mrb[0].mxu0 %v314
      %v428 = vpop.f32.mrb[0].mxu0
      %v429 = vadd.f32 0.0, %v428
      %v430 = vpop.f32.mrb[0].mxu0
      %431 = vmatprep.mubr.f32.mxu0 0.0
      %432 = vmatmul.mubr.f32.gmra.mrb[0].mxu0 %v315
      %v433 = vpop.f32.mrb[0].mxu0
      %v434 = vadd.f32 0.0, %v433
      %v435 = vpop.f32.mrb[0].mxu0
      %436 = vmatprep.mubr.f32.mxu0 0.0
      %437 = vmatmul.mubr.f32.gmra.mrb[0].mxu0 %v316
      %v438 = vpop.f32.mrb[0].mxu0
      %v439 = vadd.f32 0.0, %v438
      %v440 = vpop.f32.mrb[0].mxu0
      %441 = vmatprep.mubr.f32.mxu0 0.0
      %442 = vmatmul.mubr.f32.gmra.mrb[0].mxu0 %v317
      %v443 = vpop.f32.mrb[0].mxu0
      %v444 = vadd.f32 0.0, %v443
      %v445 = vpop.f32.mrb[0].mxu0
      %446 = vmatprep.mubr.f32.mxu0 0.0
      %447 = vmatmul.mubr.f32.gmra.mrb[0].mxu0 %v318
      %v448 = vpop.f32.mrb[0].mxu0
      %v449 = vadd.f32 0.0, %v448
      %v450 = vpop.f32.mrb[0].mxu0
      %451 = vmatprep.mubr.f32.mxu0 0.0
      %452 = vmatmul.mubr.f32.gmra.mrb[0].mxu0 %v319
      %v453 = vpop.f32.mrb[0].mxu0
      %v454 = vadd.f32 0.0, %v453
      %v455 = vpop.f32.mrb[0].mxu0
      %456 = vmatprep.mubr.f32.mxu0 0.0
      %457 = vmatmul.mubr.f32.gmra.mrb[0].mxu0 %v320
      %v458 = vpop.f32.mrb[0].mxu0
      %v459 = vadd.f32 0.0, %v458
      %v460 = vpop.f32.mrb[0].mxu0
      %461 = vmatprep.mubr.f32.mxu0 0.0
      %462 = vmatmul.mubr.f32.gmra.mrb[0].mxu0 %v321
      %v463 = vpop.f32.mrb[0].mxu0
      %v464 = vadd.f32 0.0, %v463
      %v465 = vpop.f32.mrb[0].mxu0
      %466 = vmatprep.mubr.f32.mxu0 0.0
      %467 = vmatmul.mubr.f32.gmra.mrb[0].mxu0 %v322
      %v468 = vpop.f32.mrb[0].mxu0
      %v469 = vadd.f32 0.0, %v468
      %v470 = vpop.f32.mrb[0].mxu0
      %471 = vmatprep.mubr.f32.mxu0 0.0
      %472 = vmatmul.mubr.f32.gmra.mrb[0].mxu0 %v323
      %v473 = vpop.f32.mrb[0].mxu0
      %v474 = vadd.f32 0.0, %v473
      %v475 = vpop.f32.mrb[0].mxu0
      %476 = vmatprep.mubr.f32.mxu0 0.0
      %477 = vmatmul.mubr.f32.gmra.mrb[0].mxu0 %v324
      %v478 = vpop.f32.mrb[0].mxu0
      %v479 = vadd.f32 0.0, %v478
      %v480 = vpop.f32.mrb[0].mxu0
      %481 = vmatprep.mubr.f32.mxu0 0.0
      %482 = vmatmul.mubr.f32.gmra.mrb[0].mxu0 %v325
      %v483 = vpop.f32.mrb[0].mxu0
      %v484 = vadd.f32 0.0, %v483
      %v485 = vpop.f32.mrb[0].mxu0
      %486 = vmatprep.mubr.f32.mxu0 0.0
      %487 = vmatmul.mubr.f32.gmra.mrb[0].mxu0 %v326
      %v488 = vpop.f32.mrb[0].mxu0
      %v489 = vadd.f32 0.0, %v488
      %v490 = vpop.f32.mrb[0].mxu0
      %491 = vmatprep.mubr.f32.mxu0 0.0
      %492 = vmatmul.mubr.f32.gmra.mrb[0].mxu0 %v327
      %v493 = vpop.f32.mrb[0].mxu0
      %v494 = vadd.f32 0.0, %v493
      %v495 = vpop.f32.mrb[0].mxu0
      %496 = vmatprep.mubr.f32.mxu0 0.0
      %497 = vmatmul.mubr.f32.gmra.mrb[0].mxu0 %v328
      %v498 = vpop.f32.mrb[0].mxu0
      %v499 = vadd.f32 0.0, %v498
      %v500 = vpop.f32.mrb[0].mxu0
      %501 = vmatprep.mubr.f32.mxu0 0.0
      %502 = vmatmul.mubr.f32.gmra.mrb[0].mxu0 %v329
      %v503 = vpop.f32.mrb[0].mxu0
      %v504 = vadd.f32 0.0, %v503
      %v505 = vpop.f32.mrb[0].mxu0
      %506 = vmatprep.mubr.f32.mxu0 0.0
      %507 = vmatmul.mubr.f32.gmra.mrb[0].mxu0 %v330
      %v508 = vpop.f32.mrb[0].mxu0
      %v509 = vadd.f32 0.0, %v508
      %v510 = vpop.f32.mrb[0].mxu0
      %511 = vmatprep.mubr.f32.mxu0 0.0
      %512 = vmatmul.mubr.f32.gmra.mrb[0].mxu0 %v331
      %v513 = vpop.f32.mrb[0].mxu0
      %v514 = vadd.f32 0.0, %v513
      %v515 = vpop.f32.mrb[0].mxu0
      %516 = vmatprep.mubr.f32.mxu0 0.0
      %517 = vmatmul.mubr.f32.gmra.mrb[0].mxu0 %v332
      %v518 = vpop.f32.mrb[0].mxu0
      %v519 = vadd.f32 0.0, %v518
      %v520 = vpop.f32.mrb[0].mxu0
      %521 = vmatprep.mubr.f32.mxu0 0.0
      %522 = vmatmul.mubr.f32.gmra.mrb[0].mxu0 %v333
      %v523 = vpop.f32.mrb[0].mxu0
      %v524 = vadd.f32 0.0, %v523
      %v525 = vpop.f32.mrb[0].mxu0
      %526 = vmatprep.mubr.f32.mxu0 0.0
      %527 = vmatmul.mubr.f32.gmra.mrb[0].mxu0 %v334
      %v528 = vpop.f32.mrb[0].mxu0
      %v529 = vadd.f32 0.0, %v528
      %v530 = vpop.f32.mrb[0].mxu0
      %531 = vmatprep.mubr.f32.mxu0 0.0
      %532 = vmatmul.mubr.f32.gmra.mrb[0].mxu0 %v335
      %v533 = vpop.f32.mrb[0].mxu0
      %v534 = vadd.f32 0.0, %v533
      %v535 = vpop.f32.mrb[0].mxu0
      %536 = vmatprep.mubr.f32.mxu0 0.0
      %537 = vmatmul.mubr.f32.gmra.mrb[0].mxu0 %v336
      %v538 = vpop.f32.mrb[0].mxu0
      %v539 = vadd.f32 0.0, %v538
      %v540 = vpop.f32.mrb[0].mxu0
      %541 = vmatprep.mubr.f32.mxu0 0.0
      %542 = vmatmul.mubr.f32.gmra.mrb[0].mxu0 %v337
      %v543 = vpop.f32.mrb[0].mxu0
      %v544 = vadd.f32 0.0, %v543
      %v545 = vpop.f32.mrb[0].mxu0
      %546 = vmatprep.mubr.f32.mxu0 0.0
      %547 = vmatmul.mubr.f32.gmra.mrb[0].mxu0 %v338
      %v548 = vpop.f32.mrb[0].mxu0
      %v549 = vadd.f32 0.0, %v548
      %v550 = vpop.f32.mrb[0].mxu0
      %551 = vmatprep.mubr.f32.mxu0 0.0
      %552 = vmatmul.mubr.f32.gmra.mrb[0].mxu0 %v339
      %v553 = vpop.f32.mrb[0].mxu0
      %v554 = vadd.f32 0.0, %v553
      %v555 = vpop.f32.mrb[0].mxu0
      %556 = vmatprep.mubr.f32.mxu0 0.0
      %557 = vmatmul.mubr.f32.gmra.mrb[0].mxu0 %v340
      %v558 = vpop.f32.mrb[0].mxu0
      %v559 = vadd.f32 0.0, %v558
      %v560 = vpop.f32.mrb[0].mxu0
      %561 = vmatprep.mubr.f32.mxu0 0.0
      %562 = vmatmul.mubr.f32.gmra.mrb[0].mxu0 %v341
      %v563 = vpop.f32.mrb[0].mxu0
      %v564 = vadd.f32 0.0, %v563
      %v565 = vpop.f32.mrb[0].mxu0
      %566 = vmatprep.mubr.f32.mxu0 0.0
      %567 = vmatmul.mubr.f32.gmra.mrb[0].mxu0 %v342
      %v568 = vpop.f32.mrb[0].mxu0
      %v569 = vadd.f32 0.0, %v568
      %v570 = vpop.f32.mrb[0].mxu0
      %571 = vmatprep.mubr.f32.mxu0 0.0
      %572 = vmatmul.mubr.f32.gmra.mrb[0].mxu0 %v343
      %v573 = vpop.f32.mrb[0].mxu0
      %v574 = vadd.f32 0.0, %v573
      %v575 = vpop.f32.mrb[0].mxu0
      %576 = vmatprep.mubr.f32.mxu0 0.0
      %577 = vmatmul.mubr.f32.gmra.mrb[0].mxu0 %v344
      %v578 = vpop.f32.mrb[0].mxu0
      %v579 = vadd.f32 0.0, %v578
      %v580 = vpop.f32.mrb[0].mxu0
      %581 = vmatprep.mubr.f32.mxu0 0.0
      %582 = vmatmul.mubr.f32.gmra.mrb[0].mxu0 %v345
      %v583 = vpop.f32.mrb[0].mxu0
      %v584 = vadd.f32 0.0, %v583
      %v585 = vpop.f32.mrb[0].mxu0
      %586 = vdwg.mxu0
      %v587 = vadd.f32 %v282, %v429
      %v588 = vadd.f32 %v283, %v434
      %v589 = vadd.f32 %v284, %v439
      %v590 = vadd.f32 %v285, %v444
      %v591 = vadd.f32 %v286, %v449
      %v592 = vadd.f32 %v287, %v454
      %v593 = vadd.f32 %v288, %v459
      %v594 = vadd.f32 %v289, %v464
      %v595 = vadd.f32 %v290, %v469
      %v596 = vadd.f32 %v291, %v474
      %v597 = vadd.f32 %v292, %v479
      %v598 = vadd.f32 %v293, %v484
      %v599 = vadd.f32 %v294, %v489
      %v600 = vadd.f32 %v295, %v494
      %v601 = vadd.f32 %v296, %v499
      %v602 = vadd.f32 %v297, %v504
      %v603 = vadd.f32 %v298, %v509
      %v604 = vadd.f32 %v299, %v514
      %v605 = vadd.f32 %v300, %v519
      %v606 = vadd.f32 %v301, %v524
      %v607 = vadd.f32 %v302, %v529
      %v608 = vadd.f32 %v303, %v534
      %v609 = vadd.f32 %v304, %v539
      %v610 = vadd.f32 %v305, %v544
      %v611 = vadd.f32 %v306, %v549
      %v612 = vadd.f32 %v307, %v554
      %v613 = vadd.f32 %v308, %v559
      %v614 = vadd.f32 %v309, %v564
      %v615 = vadd.f32 %v310, %v569
      %v616 = vadd.f32 %v311, %v574
      %v617 = vadd.f32 %v312, %v579
      %v618 = vadd.f32 %v313, %v584
      %619 = vst [vmem:[#allocation2] sm:$0xff] %v587
      %620 = vst [vmem:[#allocation2 + $0x8] sm:$0xff] %v588
      %621 = vst [vmem:[#allocation2 + $0x10] sm:$0xff] %v589
      %622 = vst [vmem:[#allocation2 + $0x18] sm:$0xff] %v590
      %623 = vst [vmem:[#allocation2 + $0x20] sm:$0xff] %v591
      %624 = vst [vmem:[#allocation2 + $0x28] sm:$0xff] %v592
      %625 = vst [vmem:[#allocation2 + $0x30] sm:$0xff] %v593
      %626 = vst [vmem:[#allocation2 + $0x38] sm:$0xff] %v594
      %627 = vst [vmem:[#allocation2 + $0x40] sm:$0xff] %v595
      %628 = vst [vmem:[#allocation2 + $0x48] sm:$0xff] %v596
      %629 = vst [vmem:[#allocation2 + $0x50] sm:$0xff] %v597
      %630 = vst [vmem:[#allocation2 + $0x58] sm:$0xff] %v598
      %631 = vst [vmem:[#allocation2 + $0x60] sm:$0xff] %v599
      %632 = vst [vmem:[#allocation2 + $0x68] sm:$0xff] %v600
      %633 = vst [vmem:[#allocation2 + $0x70] sm:$0xff] %v601
      %634 = vst [vmem:[#allocation2 + $0x78] sm:$0xff] %v602
      %635 = vst [vmem:[#allocation2 + $0x80] sm:$0xff] %v603
      %636 = vst [vmem:[#allocation2 + $0x88] sm:$0xff] %v604
      %637 = vst [vmem:[#allocation2 + $0x90] sm:$0xff] %v605
      %638 = vst [vmem:[#allocation2 + $0x98] sm:$0xff] %v606
      %639 = vst [vmem:[#allocation2 + $0xa0] sm:$0xff] %v607
      %640 = vst [vmem:[#allocation2 + $0xa8] sm:$0xff] %v608
      %641 = vst [vmem:[#allocation2 + $0xb0] sm:$0xff] %v609
      %642 = vst [vmem:[#allocation2 + $0xb8] sm:$0xff] %v610
      %643 = vst [vmem:[#allocation2 + $0xc0] sm:$0xff] %v611
      %644 = vst [vmem:[#allocation2 + $0xc8] sm:$0xff] %v612
      %645 = vst [vmem:[#allocation2 + $0xd0] sm:$0xff] %v613
      %646 = vst [vmem:[#allocation2 + $0xd8] sm:$0xff] %v614
      %647 = vst [vmem:[#allocation2 + $0xe0] sm:$0xff] %v615
      %648 = vst [vmem:[#allocation2 + $0xe8] sm:$0xff] %v616
      %649 = vst [vmem:[#allocation2 + $0xf0] sm:$0xff] %v617
      %650 = vst [vmem:[#allocation2 + $0xf8] sm:$0xff] %v618
      // Predicated region
      $region41: #{bottleneck_pallas.4} parent=35 // pred_check
        %p651 = pneg %p246
      $region42: #{bottleneck_pallas.4} parent=35 // pred_check_branch
        %653 = sbr.rel (%p651) target = $region44
      $region43: #{bottleneck_pallas.4} parent=35 // pred_region
        %v654 = vld [vmem:[#allocation2] sm:$0xff]
        %v655 = vld [vmem:[#allocation2 + $0x8] sm:$0xff]
        %v656 = vld [vmem:[#allocation2 + $0x10] sm:$0xff]
        %v657 = vld [vmem:[#allocation2 + $0x18] sm:$0xff]
        %v658 = vld [vmem:[#allocation2 + $0x20] sm:$0xff]
        %v659 = vld [vmem:[#allocation2 + $0x28] sm:$0xff]
        %v660 = vld [vmem:[#allocation2 + $0x30] sm:$0xff]
        %v661 = vld [vmem:[#allocation2 + $0x38] sm:$0xff]
        %v662 = vld [vmem:[#allocation2 + $0x40] sm:$0xff]
        %v663 = vld [vmem:[#allocation2 + $0x48] sm:$0xff]
        %v664 = vld [vmem:[#allocation2 + $0x50] sm:$0xff]
        %v665 = vld [vmem:[#allocation2 + $0x58] sm:$0xff]
        %v666 = vld [vmem:[#allocation2 + $0x60] sm:$0xff]
        %v667 = vld [vmem:[#allocation2 + $0x68] sm:$0xff]
        %v668 = vld [vmem:[#allocation2 + $0x70] sm:$0xff]
        %v669 = vld [vmem:[#allocation2 + $0x78] sm:$0xff]
        %v670 = vld [vmem:[#allocation2 + $0x80] sm:$0xff]
        %v671 = vld [vmem:[#allocation2 + $0x88] sm:$0xff]
        %v672 = vld [vmem:[#allocation2 + $0x90] sm:$0xff]
        %v673 = vld [vmem:[#allocation2 + $0x98] sm:$0xff]
        %v674 = vld [vmem:[#allocation2 + $0xa0] sm:$0xff]
        %v675 = vld [vmem:[#allocation2 + $0xa8] sm:$0xff]
        %v676 = vld [vmem:[#allocation2 + $0xb0] sm:$0xff]
        %v677 = vld [vmem:[#allocation2 + $0xb8] sm:$0xff]
        %v678 = vld [vmem:[#allocation2 + $0xc0] sm:$0xff]
        %v679 = vld [vmem:[#allocation2 + $0xc8] sm:$0xff]
        %v680 = vld [vmem:[#allocation2 + $0xd0] sm:$0xff]
        %v681 = vld [vmem:[#allocation2 + $0xd8] sm:$0xff]
        %v682 = vld [vmem:[#allocation2 + $0xe0] sm:$0xff]
        %v683 = vld [vmem:[#allocation2 + $0xe8] sm:$0xff]
        %v684 = vld [vmem:[#allocation2 + $0xf0] sm:$0xff]
        %v685 = vld [vmem:[#allocation2 + $0xf8] sm:$0xff]
        %v686 = vld [vmem:[%s2] sm:$0x1]
        %v688 = vlaneseq
        %v689 = vshrl.u32 %v688, 7
        %v690 = vsub.s32 0, %v689
        %v691 = vrot.slane %v686, %v690
        %v693 = vmul.f32 %v654, %v691
        %v694 = vmul.f32 %v655, %v691
        %v695 = vmul.f32 %v656, %v691
        %v696 = vmul.f32 %v657, %v691
        %v697 = vmul.f32 %v658, %v691
        %v698 = vmul.f32 %v659, %v691
        %v699 = vmul.f32 %v660, %v691
        %v700 = vmul.f32 %v661, %v691
        %v701 = vmul.f32 %v662, %v691
        %v702 = vmul.f32 %v663, %v691
        %v703 = vmul.f32 %v664, %v691
        %v704 = vmul.f32 %v665, %v691
        %v705 = vmul.f32 %v666, %v691
        %v706 = vmul.f32 %v667, %v691
        %v707 = vmul.f32 %v668, %v691
        %v708 = vmul.f32 %v669, %v691
        %v709 = vmul.f32 %v670, %v691
        %v710 = vmul.f32 %v671, %v691
        %v711 = vmul.f32 %v672, %v691
        %v712 = vmul.f32 %v673, %v691
        %v713 = vmul.f32 %v674, %v691
        %v714 = vmul.f32 %v675, %v691
        %v715 = vmul.f32 %v676, %v691
        %v716 = vmul.f32 %v677, %v691
        %v717 = vmul.f32 %v678, %v691
        %v718 = vmul.f32 %v679, %v691
        %v719 = vmul.f32 %v680, %v691
        %v720 = vmul.f32 %v681, %v691
        %v721 = vmul.f32 %v682, %v691
        %v722 = vmul.f32 %v683, %v691
        %v723 = vmul.f32 %v684, %v691
        %v724 = vmul.f32 %v685, %v691
        %v725 = vld [vmem:[%s3] sm:$0x1]
        %v727 = vlaneseq
        %v728 = vshrl.u32 %v727, 7
        %v729 = vsub.s32 0, %v728
        %v730 = vrot.slane %v725, %v729
        %v732 = vadd.f32 %v693, %v730
        %v733 = vadd.f32 %v694, %v730
        %v734 = vadd.f32 %v695, %v730
        %v735 = vadd.f32 %v696, %v730
        %v736 = vadd.f32 %v697, %v730
        %v737 = vadd.f32 %v698, %v730
        %v738 = vadd.f32 %v699, %v730
        %v739 = vadd.f32 %v700, %v730
        %v740 = vadd.f32 %v701, %v730
        %v741 = vadd.f32 %v702, %v730
        %v742 = vadd.f32 %v703, %v730
        %v743 = vadd.f32 %v704, %v730
        %v744 = vadd.f32 %v705, %v730
        %v745 = vadd.f32 %v706, %v730
        %v746 = vadd.f32 %v707, %v730
        %v747 = vadd.f32 %v708, %v730
        %v748 = vadd.f32 %v709, %v730
        %v749 = vadd.f32 %v710, %v730
        %v750 = vadd.f32 %v711, %v730
        %v751 = vadd.f32 %v712, %v730
        %v752 = vadd.f32 %v713, %v730
        %v753 = vadd.f32 %v714, %v730
        %v754 = vadd.f32 %v715, %v730
        %v755 = vadd.f32 %v716, %v730
        %v756 = vadd.f32 %v717, %v730
        %v757 = vadd.f32 %v718, %v730
        %v758 = vadd.f32 %v719, %v730
        %v759 = vadd.f32 %v720, %v730
        %v760 = vadd.f32 %v721, %v730
        %v761 = vadd.f32 %v722, %v730
        %v762 = vadd.f32 %v723, %v730
        %v763 = vadd.f32 %v724, %v730
        %v764 = vmax.f32 %v732, 0.0
        %v765 = vmax.f32 %v733, 0.0
        %v766 = vmax.f32 %v734, 0.0
        %v767 = vmax.f32 %v735, 0.0
        %v768 = vmax.f32 %v736, 0.0
        %v769 = vmax.f32 %v737, 0.0
        %v770 = vmax.f32 %v738, 0.0
        %v771 = vmax.f32 %v739, 0.0
        %v772 = vmax.f32 %v740, 0.0
        %v773 = vmax.f32 %v741, 0.0
        %v774 = vmax.f32 %v742, 0.0
        %v775 = vmax.f32 %v743, 0.0
        %v776 = vmax.f32 %v744, 0.0
        %v777 = vmax.f32 %v745, 0.0
        %v778 = vmax.f32 %v746, 0.0
        %v779 = vmax.f32 %v747, 0.0
        %v780 = vmax.f32 %v748, 0.0
        %v781 = vmax.f32 %v749, 0.0
        %v782 = vmax.f32 %v750, 0.0
        %v783 = vmax.f32 %v751, 0.0
        %v784 = vmax.f32 %v752, 0.0
        %v785 = vmax.f32 %v753, 0.0
        %v786 = vmax.f32 %v754, 0.0
        %v787 = vmax.f32 %v755, 0.0
        %v788 = vmax.f32 %v756, 0.0
        %v789 = vmax.f32 %v757, 0.0
        %v790 = vmax.f32 %v758, 0.0
        %v791 = vmax.f32 %v759, 0.0
        %v792 = vmax.f32 %v760, 0.0
        %v793 = vmax.f32 %v761, 0.0
        %v794 = vmax.f32 %v762, 0.0
        %v795 = vmax.f32 %v763, 0.0
        %796 = vst [vmem:[%s244] sm:$0xff] %v764
        %797 = vst [vmem:[%s244 + $0x8] sm:$0xff] %v765
        %798 = vst [vmem:[%s244 + $0x10] sm:$0xff] %v766
        %799 = vst [vmem:[%s244 + $0x18] sm:$0xff] %v767
        %800 = vst [vmem:[%s244 + $0x20] sm:$0xff] %v768
        %801 = vst [vmem:[%s244 + $0x28] sm:$0xff] %v769
        %802 = vst [vmem:[%s244 + $0x30] sm:$0xff] %v770
        %803 = vst [vmem:[%s244 + $0x38] sm:$0xff] %v771
        %804 = vst [vmem:[%s244 + $0x40] sm:$0xff] %v772
        %805 = vst [vmem:[%s244 + $0x48] sm:$0xff] %v773
        %806 = vst [vmem:[%s244 + $0x50] sm:$0xff] %v774
        %807 = vst [vmem:[%s244 + $0x58] sm:$0xff] %v775
        %808 = vst [vmem:[%s244 + $0x60] sm:$0xff] %v776
        %809 = vst [vmem:[%s244 + $0x68] sm:$0xff] %v777
        %810 = vst [vmem:[%s244 + $0x70] sm:$0xff] %v778
        %811 = vst [vmem:[%s244 + $0x78] sm:$0xff] %v779
        %812 = vst [vmem:[%s244 + $0x80] sm:$0xff] %v780
        %813 = vst [vmem:[%s244 + $0x88] sm:$0xff] %v781
        %814 = vst [vmem:[%s244 + $0x90] sm:$0xff] %v782
        %815 = vst [vmem:[%s244 + $0x98] sm:$0xff] %v783
        %816 = vst [vmem:[%s244 + $0xa0] sm:$0xff] %v784
        %817 = vst [vmem:[%s244 + $0xa8] sm:$0xff] %v785
        %818 = vst [vmem:[%s244 + $0xb0] sm:$0xff] %v786
        %819 = vst [vmem:[%s244 + $0xb8] sm:$0xff] %v787
        %820 = vst [vmem:[%s244 + $0xc0] sm:$0xff] %v788
        %821 = vst [vmem:[%s244 + $0xc8] sm:$0xff] %v789
        %822 = vst [vmem:[%s244 + $0xd0] sm:$0xff] %v790
        %823 = vst [vmem:[%s244 + $0xd8] sm:$0xff] %v791
        %824 = vst [vmem:[%s244 + $0xe0] sm:$0xff] %v792
        %825 = vst [vmem:[%s244 + $0xe8] sm:$0xff] %v793
        %826 = vst [vmem:[%s244 + $0xf0] sm:$0xff] %v794
        %827 = vst [vmem:[%s244 + $0xf8] sm:$0xff] %v795
      $region44: #{bottleneck_pallas.4} parent=35 // pred_fallthru
        _
      %s828 = smul.u32 32, %s19
      %p829 = scmp.lt.s32.totalorder %s828, 63
      %s830 = scalar_select %p829, %s828, 63
      %s831 = smul.addr %s830, 8
      %s832 = scalar_lea.vmem %s4, %s831
      // Predicated region
      $region45: #{bottleneck_pallas.4} parent=35 // pred_check
        %p833 = pneg %p141
      $region46: #{bottleneck_pallas.4} parent=35 // pred_check_branch
        %835 = sbr.rel (%p833) target = $region48
      $region47: #{bottleneck_pallas.4} parent=35 // pred_region
        %s836 = smul.u32 32, %s19
      $region48: #{bottleneck_pallas.4} parent=35 // pred_fallthru
        _
    $region36: #{bottleneck_pallas.4} parent=5 // pred_fallthru
      _
    %p837 = scmp.le.s32.totalorder 2, %s10
    // Predicated region
    $region49: #{bottleneck_pallas.4} parent=5 // pred_check
      %p838 = pneg %p837
    $region50: #{bottleneck_pallas.4} parent=5 // pred_check_branch
      %840 = sbr.rel (%p838) target = $region52
    $region51: #{bottleneck_pallas.4} parent=5 // pred_region
      %s841 = ssub.s32 %s10, 2
      // Predicated region
      $region53: #{bottleneck_pallas.4} parent=51 // pred_check
        %p842 = pneg %p147
      $region54: #{bottleneck_pallas.4} parent=51 // pred_check_branch
        %844 = sbr.rel (%p842) target = $region56
      $region55: #{bottleneck_pallas.4} parent=51 // pred_region
        %s845 = smul.u32 32, %s21
        %p846 = scmp.lt.s32.totalorder %s845, 63
        %s847 = scalar_select %p846, %s845, 63
        %s848 = smul.addr %s847, 8
        %s849 = scalar_lea.vmem %s4, %s848
      $region56: #{bottleneck_pallas.4} parent=51 // pred_fallthru
        _
    $region52: #{bottleneck_pallas.4} parent=5 // pred_fallthru
      _
  $region6: #{bottleneck_pallas.4} parent=0 // loop_footer
    %s14 = sadd.s32 1, %s10
  $region7: #{bottleneck_pallas.4} parent=0 // loop_footer_branch
    %9 = sbr.rel target = $region3
  $region8: #{bottleneck_pallas.4} parent=0 // loop_exit
    _

// kernel: bottleneck_pallas.5
$region0: #{bottleneck_pallas.5}
  #allocation0 [shape = 'u32[]', space=smem, size = 0x4, offset = 0x4, fixed_abs, tag = 'smem constant byte address 0x4 - core index']
  #allocation1 [shape = 'u32[144,128]{1,0:T(1,128)}', space=vmem, size = 0x12000, scoped, tag = 'internal scratch']
  %s0 = inlined_call_operand.vmem [shape: f32[2,36,9,128], index: 0, kind: input, shape index: {}]
  %s1 = inlined_call_operand.vmem [shape: f32[9,128,128], index: 1, kind: input, shape index: {}]
  %s2 = inlined_call_operand.vmem [shape: f32[1,128], index: 2, kind: input, shape index: {}]
  %s3 = inlined_call_operand.vmem [shape: f32[1,128], index: 3, kind: input, shape index: {}]
  %s4 = inlined_call_operand.vmem [shape: f32[2,64,128], index: 4, kind: output, shape index: {}]
  %s5 = sld [smem:[#allocation0]]
  $region49: #{bottleneck_pallas.5} parent=0
    _
  %s7 = ssub.s32 1, %s5
  %s8 = scalar_select 0, %s7, %s5
  loop: start=0, step=1, limit=4
  $region2: #{bottleneck_pallas.5} parent=0 // loop_pre_header
    _
  $region3: #{bottleneck_pallas.5} parent=0 // loop_header
    %s10 = sphi 0, %s14
    %p11 = scmp.ge.s32.totalorder %s10, 4
    %s20 = sphi 0, %s22
    %s23 = sphi 0, %s20
    %s24 = sphi 0, %s23
    %s40 = sphi 0, %s24
    %s44 = sphi 0, %s44
    %s46 = sphi 0, %s44
    %s47 = sphi 0, %s46
    %s61 = sphi 0, %s47
    %s65 = sphi 0, %s65
    %s67 = sphi 0, %s65
    %s68 = sphi 0, %s67
    %s82 = sphi 0, %s68
    %s86 = sphi 0, %s86
    %s88 = sphi 0, %s86
    %s89 = sphi 0, %s88
    %s103 = sphi 0, %s89
    %s109 = sphi 0, %s111
    %s112 = sphi 0, %s109
    %s113 = sphi 0, %s112
    %s129 = sphi 0, %s113
  $region4: #{bottleneck_pallas.5} parent=0 // loop_header_branch
    %13 = sbr.rel (%p11) target = $region8
  $region5: #{bottleneck_pallas.5} parent=0 // loop_body
    %s15 = ssub.s32 %s10, 1
    %s16 = ssub.s32 %s10, 2
    %s17 = sadd.s32 %s10, 1
    %s18 = ssub.s32 %s10, %s17
    %p19 = scmp.eq.s32.totalorder %s18, 0
    %s21 = sadd.s32 %s20, 1
    %s22 = scalar_select %p19, %s20, %s21
    %p25 = pneg %p19
    %p26 = scmp.eq.s32.totalorder %s10, 1
    %p27 = por %p25, %p26
    %p28 = scmp.ne.s32.totalorder %s20, %s23
    %p29 = scmp.eq.s32.totalorder %s10, 0
    %p30 = por %p28, %p29
    %p31 = scmp.ne.s32.totalorder %s20, %s23
    %p32 = scmp.eq.s32.totalorder %s15, 1
    %p33 = por %p31, %p32
    %p34 = scmp.ne.s32.totalorder %s23, %s24
    %p35 = scmp.eq.s32.totalorder %s15, 0
    %p36 = por %p34, %p35
    %p37 = scmp.ne.s32.totalorder %s23, %s24
    %p38 = scmp.eq.s32.totalorder %s16, 1
    %p39 = por %p37, %p38
    %p41 = scmp.ne.s32.totalorder %s24, %s40
    %p42 = scmp.eq.s32.totalorder %s16, 0
    %p43 = por %p41, %p42
    %s45 = sadd.s32 %s44, 1
    %p48 = scmp.eq.s32.totalorder %s10, 1
    %p49 = scmp.ne.s32.totalorder %s44, %s46
    %p50 = scmp.eq.s32.totalorder %s10, 0
    %p51 = por %p49, %p50
    %p52 = scmp.ne.s32.totalorder %s44, %s46
    %p53 = scmp.eq.s32.totalorder %s15, 1
    %p54 = por %p52, %p53
    %p55 = scmp.ne.s32.totalorder %s46, %s47
    %p56 = scmp.eq.s32.totalorder %s15, 0
    %p57 = por %p55, %p56
    %p58 = scmp.ne.s32.totalorder %s46, %s47
    %p59 = scmp.eq.s32.totalorder %s16, 1
    %p60 = por %p58, %p59
    %p62 = scmp.ne.s32.totalorder %s47, %s61
    %p63 = scmp.eq.s32.totalorder %s16, 0
    %p64 = por %p62, %p63
    %s66 = sadd.s32 %s65, 1
    %p69 = scmp.eq.s32.totalorder %s10, 1
    %p70 = scmp.ne.s32.totalorder %s65, %s67
    %p71 = scmp.eq.s32.totalorder %s10, 0
    %p72 = por %p70, %p71
    %p73 = scmp.ne.s32.totalorder %s65, %s67
    %p74 = scmp.eq.s32.totalorder %s15, 1
    %p75 = por %p73, %p74
    %p76 = scmp.ne.s32.totalorder %s67, %s68
    %p77 = scmp.eq.s32.totalorder %s15, 0
    %p78 = por %p76, %p77
    %p79 = scmp.ne.s32.totalorder %s67, %s68
    %p80 = scmp.eq.s32.totalorder %s16, 1
    %p81 = por %p79, %p80
    %p83 = scmp.ne.s32.totalorder %s68, %s82
    %p84 = scmp.eq.s32.totalorder %s16, 0
    %p85 = por %p83, %p84
    %s87 = sadd.s32 %s86, 1
    %p90 = scmp.eq.s32.totalorder %s10, 1
    %p91 = scmp.ne.s32.totalorder %s86, %s88
    %p92 = scmp.eq.s32.totalorder %s10, 0
    %p93 = por %p91, %p92
    %p94 = scmp.ne.s32.totalorder %s86, %s88
    %p95 = scmp.eq.s32.totalorder %s15, 1
    %p96 = por %p94, %p95
    %p97 = scmp.ne.s32.totalorder %s88, %s89
    %p98 = scmp.eq.s32.totalorder %s15, 0
    %p99 = por %p97, %p98
    %p100 = scmp.ne.s32.totalorder %s88, %s89
    %p101 = scmp.eq.s32.totalorder %s16, 1
    %p102 = por %p100, %p101
    %p104 = scmp.ne.s32.totalorder %s89, %s103
    %p105 = scmp.eq.s32.totalorder %s16, 0
    %p106 = por %p104, %p105
    %s107 = ssub.s32 %s10, %s17
    %p108 = scmp.eq.s32.totalorder %s107, 0
    %s110 = sadd.s32 %s109, 1
    %s111 = scalar_select %p108, %s109, %s110
    %p114 = pneg %p108
    %p115 = scmp.eq.s32.totalorder %s10, 1
    %p116 = por %p114, %p115
    %p117 = scmp.ne.s32.totalorder %s109, %s112
    %p118 = scmp.eq.s32.totalorder %s10, 0
    %p119 = por %p117, %p118
    %p120 = scmp.ne.s32.totalorder %s109, %s112
    %p121 = scmp.eq.s32.totalorder %s15, 1
    %p122 = por %p120, %p121
    %p123 = scmp.ne.s32.totalorder %s112, %s113
    %p124 = scmp.eq.s32.totalorder %s15, 0
    %p125 = por %p123, %p124
    %p126 = scmp.ne.s32.totalorder %s112, %s113
    %p127 = scmp.eq.s32.totalorder %s16, 1
    %p128 = por %p126, %p127
    %p130 = scmp.ne.s32.totalorder %s113, %s129
    %p131 = scmp.eq.s32.totalorder %s16, 0
    %p132 = por %p130, %p131
    %p133 = scmp.le.s32.totalorder 1, %s10
    %p134 = scmp.lt.s32.totalorder %s10, 3
    %p135 = pnand %p133, %p134
    %p136 = pneg %p135
    // Predicated region
    $region9: #{bottleneck_pallas.5} parent=5 // pred_check
      _
    $region10: #{bottleneck_pallas.5} parent=5 // pred_check_branch
      %138 = sbr.rel (%p135) target = $region12
    $region11: #{bottleneck_pallas.5} parent=5 // pred_region
      %s139 = ssub.s32 %s10, 1
      // Predicated region
      $region13: #{bottleneck_pallas.5} parent=11 // pred_check
        %p140 = pneg %p57
      $region14: #{bottleneck_pallas.5} parent=11 // pred_check_branch
        %142 = sbr.rel (%p140) target = $region16
      $region15: #{bottleneck_pallas.5} parent=11 // pred_region
        _
      $region16: #{bottleneck_pallas.5} parent=11 // pred_fallthru
        _
      // Predicated region
      $region17: #{bottleneck_pallas.5} parent=11 // pred_check
        %p143 = pneg %p78
      $region18: #{bottleneck_pallas.5} parent=11 // pred_check_branch
        %145 = sbr.rel (%p143) target = $region20
      $region19: #{bottleneck_pallas.5} parent=11 // pred_region
        _
      $region20: #{bottleneck_pallas.5} parent=11 // pred_fallthru
        _
      // Predicated region
      $region21: #{bottleneck_pallas.5} parent=11 // pred_check
        %p146 = pneg %p99
      $region22: #{bottleneck_pallas.5} parent=11 // pred_check_branch
        %148 = sbr.rel (%p146) target = $region24
      $region23: #{bottleneck_pallas.5} parent=11 // pred_region
        _
      $region24: #{bottleneck_pallas.5} parent=11 // pred_fallthru
        _
    $region12: #{bottleneck_pallas.5} parent=5 // pred_fallthru
      _
    %p149 = scmp.lt.s32.totalorder %s10, 2
    // Predicated region
    $region25: #{bottleneck_pallas.5} parent=5 // pred_check
      %p150 = pneg %p149
    $region26: #{bottleneck_pallas.5} parent=5 // pred_check_branch
      %152 = sbr.rel (%p150) target = $region28
    $region27: #{bottleneck_pallas.5} parent=5 // pred_region
      // Predicated region
      $region29: #{bottleneck_pallas.5} parent=27 // pred_check
        %p153 = pneg %p30
      $region30: #{bottleneck_pallas.5} parent=27 // pred_check_branch
        %155 = sbr.rel (%p153) target = $region32
      $region31: #{bottleneck_pallas.5} parent=27 // pred_region
        %p156 = scmp.lt.s32.totalorder %s10, 1
        %s157 = scalar_select %p156, %s10, 1
        %s158 = smul.addr %s157, 72
        %s159 = smul.addr %s158, 8
        %s160 = scalar_lea.vmem %s0, %s159
      $region32: #{bottleneck_pallas.5} parent=27 // pred_fallthru
        _
    $region28: #{bottleneck_pallas.5} parent=5 // pred_fallthru
      _
    %p161 = scmp.le.s32.totalorder 1, %s10
    %p162 = scmp.lt.s32.totalorder %s10, 3
    %p163 = pnand %p161, %p162
    %p164 = pneg %p163
    // Predicated region
    $region33: #{bottleneck_pallas.5} parent=5 // pred_check
      _
    $region34: #{bottleneck_pallas.5} parent=5 // pred_check_branch
      %166 = sbr.rel (%p163) target = $region36
    $region35: #{bottleneck_pallas.5} parent=5 // pred_region
      %s167 = ssub.s32 %s10, 1
      %p168 = scmp.lt.s32.totalorder %s15, 1
      %s169 = scalar_select %p168, %s15, 1
      %s170 = smul.addr %s169, 72
      %s171 = smul.addr %s170, 8
      %s172 = scalar_lea.vmem %s0, %s171
      %p173 = pneg %p36
      %p174 = pneg %p33
      %p175 = pneg %p57
      %p176 = pneg %p54
      %p177 = pneg %p78
      %p178 = pneg %p75
      %p179 = pneg %p99
      %p180 = pneg %p96
      %p181 = pneg %p125
      %p182 = pneg %p122
      %p183 = scmp.lt.s32.totalorder %s15, 1
      %s184 = scalar_select %p183, %s15, 1
      %s185 = smul.addr %s184, 8
      %s186 = smul.addr %s185, 8
      %s187 = scalar_lea.vmem %s4, %s186
      %p188 = scmp.lt.s32.totalorder %s15, 1
      %s189 = scalar_select %p188, %s15, 1
      %s190 = smul.addr %s189, 72
      %s191 = smul.addr %s190, 8
      %s192 = scalar_lea.vmem %s0, %s191
      %p193 = scmp.lt.s32.totalorder %s15, 1
      %s194 = scalar_select %p193, %s15, 1
      %s195 = smul.addr %s194, 8
      %s196 = smul.addr %s195, 8
      %s197 = scalar_lea.vmem %s4, %s196
      %v198 = vld [vmem:[%s192] sm:$0xff]
      %v199 = vld [vmem:[%s192 + $0x10] sm:$0xff]
      %v200 = vld [vmem:[%s192 + $0x20] sm:$0xff]
      %v201 = vld [vmem:[%s192 + $0x30] sm:$0xff]
      %v202 = vld [vmem:[%s192 + $0x40] sm:$0xff]
      %v203 = vld [vmem:[%s192 + $0x50] sm:$0xff]
      %v204 = vld [vmem:[%s192 + $0x60] sm:$0xff]
      %v205 = vld [vmem:[%s192 + $0x70] sm:$0xff]
      %v206 = vld [vmem:[%s1] sm:$0xff]
      %v207 = vld [vmem:[%s1 + $0x8] sm:$0xff]
      %v208 = vld [vmem:[%s1 + $0x10] sm:$0xff]
      %v209 = vld [vmem:[%s1 + $0x18] sm:$0xff]
      %v210 = vld [vmem:[%s1 + $0x20] sm:$0xff]
      %v211 = vld [vmem:[%s1 + $0x28] sm:$0xff]
      %v212 = vld [vmem:[%s1 + $0x30] sm:$0xff]
      %v213 = vld [vmem:[%s1 + $0x38] sm:$0xff]
      %v214 = vld [vmem:[%s1 + $0x40] sm:$0xff]
      %v215 = vld [vmem:[%s1 + $0x48] sm:$0xff]
      %v216 = vld [vmem:[%s1 + $0x50] sm:$0xff]
      %v217 = vld [vmem:[%s1 + $0x58] sm:$0xff]
      %v218 = vld [vmem:[%s1 + $0x60] sm:$0xff]
      %v219 = vld [vmem:[%s1 + $0x68] sm:$0xff]
      %v220 = vld [vmem:[%s1 + $0x70] sm:$0xff]
      %v221 = vld [vmem:[%s1 + $0x78] sm:$0xff]
      %s222 = scalar_lea.vmem %s192, 144
      %v223 = vld [vmem:[%s222] sm:$0xff]
      %v224 = vld [vmem:[%s222 + $0x10] sm:$0xff]
      %v225 = vld [vmem:[%s222 + $0x20] sm:$0xff]
      %v226 = vld [vmem:[%s222 + $0x30] sm:$0xff]
      %v227 = vld [vmem:[%s222 + $0x40] sm:$0xff]
      %v228 = vld [vmem:[%s222 + $0x50] sm:$0xff]
      %v229 = vld [vmem:[%s222 + $0x60] sm:$0xff]
      %v230 = vld [vmem:[%s222 + $0x70] sm:$0xff]
      %s231 = scalar_lea.vmem %s1, 128
      %v232 = vld [vmem:[%s231] sm:$0xff]
      %v233 = vld [vmem:[%s231 + $0x8] sm:$0xff]
      %v234 = vld [vmem:[%s231 + $0x10] sm:$0xff]
      %v235 = vld [vmem:[%s231 + $0x18] sm:$0xff]
      %v236 = vld [vmem:[%s231 + $0x20] sm:$0xff]
      %v237 = vld [vmem:[%s231 + $0x28] sm:$0xff]
      %v238 = vld [vmem:[%s231 + $0x30] sm:$0xff]
      %v239 = vld [vmem:[%s231 + $0x38] sm:$0xff]
      %v240 = vld [vmem:[%s231 + $0x40] sm:$0xff]
      %v241 = vld [vmem:[%s231 + $0x48] sm:$0xff]
      %v242 = vld [vmem:[%s231 + $0x50] sm:$0xff]
      %v243 = vld [vmem:[%s231 + $0x58] sm:$0xff]
      %v244 = vld [vmem:[%s231 + $0x60] sm:$0xff]
      %v245 = vld [vmem:[%s231 + $0x68] sm:$0xff]
      %v246 = vld [vmem:[%s231 + $0x70] sm:$0xff]
      %v247 = vld [vmem:[%s231 + $0x78] sm:$0xff]
      %248 = vmatprep.subr.mxu0 0.0
      %249 = vmatpush1.msra.mxu0 %v232
      %250 = vmatprep.subr.mxu0 0.0
      %251 = vmatpush1.msra.mxu0 %v233
      %252 = vmatprep.subr.mxu0 0.0
      %253 = vmatpush1.msra.mxu0 %v234
      %254 = vmatprep.subr.mxu0 0.0
      %255 = vmatpush1.msra.mxu0 %v235
      %256 = vmatprep.subr.mxu0 0.0
      %257 = vmatpush1.msra.mxu0 %v236
      %258 = vmatprep.subr.mxu0 0.0
      %259 = vmatpush1.msra.mxu0 %v237
      %260 = vmatprep.subr.mxu0 0.0
      %261 = vmatpush1.msra.mxu0 %v238
      %262 = vmatprep.subr.mxu0 0.0
      %263 = vmatpush1.msra.mxu0 %v239
      %264 = vmatprep.subr.mxu0 0.0
      %265 = vmatpush1.msra.mxu0 %v240
      %266 = vmatprep.subr.mxu0 0.0
      %267 = vmatpush1.msra.mxu0 %v241
      %268 = vmatprep.subr.mxu0 0.0
      %269 = vmatpush1.msra.mxu0 %v242
      %270 = vmatprep.subr.mxu0 0.0
      %271 = vmatpush1.msra.mxu0 %v243
      %272 = vmatprep.subr.mxu0 0.0
      %273 = vmatpush1.msra.mxu0 %v244
      %274 = vmatprep.subr.mxu0 0.0
      %275 = vmatpush1.msra.mxu0 %v245
      %276 = vmatprep.subr.mxu0 0.0
      %277 = vmatpush1.msra.mxu0 %v246
      %278 = vmatprep.subr.mxu0 0.0
      %279 = vmatpush1.msra.mxu0 %v247
      %280 = vmatprep.subr.mxu0 0.0
      %281 = vmatpush1.msra.mxu0 0.0
      %282 = vmatprep.subr.mxu0 0.0
      %283 = vmatpush1.msra.mxu0 0.0
      %284 = vmatprep.subr.mxu0 0.0
      %285 = vmatpush1.msra.mxu0 0.0
      %286 = vmatprep.subr.mxu0 0.0
      %287 = vmatpush1.msra.mxu0 0.0
      %288 = vmatprep.subr.mxu0 0.0
      %289 = vmatpush1.msra.mxu0 0.0
      %290 = vmatprep.subr.mxu0 0.0
      %291 = vmatpush1.msra.mxu0 0.0
      %292 = vmatprep.subr.mxu0 0.0
      %293 = vmatpush1.msra.mxu0 0.0
      %294 = vmatprep.subr.mxu0 0.0
      %295 = vmatpush1.msra.mxu0 0.0
      %296 = vmatprep.subr.mxu0 0.0
      %297 = vmatpush1.msra.mxu0 0.0
      %298 = vmatprep.subr.mxu0 0.0
      %299 = vmatpush1.msra.mxu0 0.0
      %300 = vmatprep.subr.mxu0 0.0
      %301 = vmatpush1.msra.mxu0 0.0
      %302 = vmatprep.subr.mxu0 0.0
      %303 = vmatpush1.msra.mxu0 0.0
      %304 = vmatprep.subr.mxu0 0.0
      %305 = vmatpush1.msra.mxu0 0.0
      %306 = vmatprep.subr.mxu0 0.0
      %307 = vmatpush1.msra.mxu0 0.0
      %308 = vmatprep.subr.mxu0 0.0
      %309 = vmatpush1.msra.mxu0 0.0
      %310 = vmatprep.subr.mxu0 0.0
      %311 = vmatpush1.msra.mxu0 0.0
      %312 = vmatprep.mubr.f32.mxu0 0.0
      %313 = vmatmul.mubr.f32.gmra.mrb[0].mxu0 %v223
      %v314 = vpop.f32.mrb[0].mxu0
      %v315 = vadd.f32 0.0, %v314
      %v316 = vpop.f32.mrb[0].mxu0
      %317 = vmatprep.mubr.f32.mxu0 0.0
      %318 = vmatmul.mubr.f32.gmra.mrb[0].mxu0 %v224
      %v319 = vpop.f32.mrb[0].mxu0
      %v320 = vadd.f32 0.0, %v319
      %v321 = vpop.f32.mrb[0].mxu0
      %322 = vmatprep.mubr.f32.mxu0 0.0
      %323 = vmatmul.mubr.f32.gmra.mrb[0].mxu0 %v225
      %v324 = vpop.f32.mrb[0].mxu0
      %v325 = vadd.f32 0.0, %v324
      %v326 = vpop.f32.mrb[0].mxu0
      %327 = vmatprep.mubr.f32.mxu0 0.0
      %328 = vmatmul.mubr.f32.gmra.mrb[0].mxu0 %v226
      %v329 = vpop.f32.mrb[0].mxu0
      %v330 = vadd.f32 0.0, %v329
      %v331 = vpop.f32.mrb[0].mxu0
      %332 = vmatprep.mubr.f32.mxu0 0.0
      %333 = vmatmul.mubr.f32.gmra.mrb[0].mxu0 %v227
      %v334 = vpop.f32.mrb[0].mxu0
      %v335 = vadd.f32 0.0, %v334
      %v336 = vpop.f32.mrb[0].mxu0
      %337 = vmatprep.mubr.f32.mxu0 0.0
      %338 = vmatmul.mubr.f32.gmra.mrb[0].mxu0 %v228
      %v339 = vpop.f32.mrb[0].mxu0
      %v340 = vadd.f32 0.0, %v339
      %v341 = vpop.f32.mrb[0].mxu0
      %342 = vmatprep.mubr.f32.mxu0 0.0
      %343 = vmatmul.mubr.f32.gmra.mrb[0].mxu0 %v229
      %v344 = vpop.f32.mrb[0].mxu0
      %v345 = vadd.f32 0.0, %v344
      %v346 = vpop.f32.mrb[0].mxu0
      %347 = vmatprep.mubr.f32.mxu0 0.0
      %348 = vmatmul.mubr.f32.gmra.mrb[0].mxu0 %v230
      %v349 = vpop.f32.mrb[0].mxu0
      %v350 = vadd.f32 0.0, %v349
      %v351 = vpop.f32.mrb[0].mxu0
      %352 = vdwg.mxu0
      %353 = vmatprep.subr.mxu0 0.0
      %354 = vmatpush1.msra.mxu0 %v206
      %355 = vmatprep.subr.mxu0 0.0
      %356 = vmatpush1.msra.mxu0 %v207
      %357 = vmatprep.subr.mxu0 0.0
      %358 = vmatpush1.msra.mxu0 %v208
      %359 = vmatprep.subr.mxu0 0.0
      %360 = vmatpush1.msra.mxu0 %v209
      %361 = vmatprep.subr.mxu0 0.0
      %362 = vmatpush1.msra.mxu0 %v210
      %363 = vmatprep.subr.mxu0 0.0
      %364 = vmatpush1.msra.mxu0 %v211
      %365 = vmatprep.subr.mxu0 0.0
      %366 = vmatpush1.msra.mxu0 %v212
      %367 = vmatprep.subr.mxu0 0.0
      %368 = vmatpush1.msra.mxu0 %v213
      %369 = vmatprep.subr.mxu0 0.0
      %370 = vmatpush1.msra.mxu0 %v214
      %371 = vmatprep.subr.mxu0 0.0
      %372 = vmatpush1.msra.mxu0 %v215
      %373 = vmatprep.subr.mxu0 0.0
      %374 = vmatpush1.msra.mxu0 %v216
      %375 = vmatprep.subr.mxu0 0.0
      %376 = vmatpush1.msra.mxu0 %v217
      %377 = vmatprep.subr.mxu0 0.0
      %378 = vmatpush1.msra.mxu0 %v218
      %379 = vmatprep.subr.mxu0 0.0
      %380 = vmatpush1.msra.mxu0 %v219
      %381 = vmatprep.subr.mxu0 0.0
      %382 = vmatpush1.msra.mxu0 %v220
      %383 = vmatprep.subr.mxu0 0.0
      %384 = vmatpush1.msra.mxu0 %v221
      %385 = vmatprep.subr.mxu0 0.0
      %386 = vmatpush1.msra.mxu0 0.0
      %387 = vmatprep.subr.mxu0 0.0
      %388 = vmatpush1.msra.mxu0 0.0
      %389 = vmatprep.subr.mxu0 0.0
      %390 = vmatpush1.msra.mxu0 0.0
      %391 = vmatprep.subr.mxu0 0.0
      %392 = vmatpush1.msra.mxu0 0.0
      %393 = vmatprep.subr.mxu0 0.0
      %394 = vmatpush1.msra.mxu0 0.0
      %395 = vmatprep.subr.mxu0 0.0
      %396 = vmatpush1.msra.mxu0 0.0
      %397 = vmatprep.subr.mxu0 0.0
      %398 = vmatpush1.msra.mxu0 0.0
      %399 = vmatprep.subr.mxu0 0.0
      %400 = vmatpush1.msra.mxu0 0.0
      %401 = vmatprep.subr.mxu0 0.0
      %402 = vmatpush1.msra.mxu0 0.0
      %403 = vmatprep.subr.mxu0 0.0
      %404 = vmatpush1.msra.mxu0 0.0
      %405 = vmatprep.subr.mxu0 0.0
      %406 = vmatpush1.msra.mxu0 0.0
      %407 = vmatprep.subr.mxu0 0.0
      %408 = vmatpush1.msra.mxu0 0.0
      %409 = vmatprep.subr.mxu0 0.0
      %410 = vmatpush1.msra.mxu0 0.0
      %411 = vmatprep.subr.mxu0 0.0
      %412 = vmatpush1.msra.mxu0 0.0
      %413 = vmatprep.subr.mxu0 0.0
      %414 = vmatpush1.msra.mxu0 0.0
      %415 = vmatprep.subr.mxu0 0.0
      %416 = vmatpush1.msra.mxu0 0.0
      %417 = vmatprep.mubr.f32.mxu0 0.0
      %418 = vmatmul.mubr.f32.gmra.mrb[0].mxu0 %v198
      %v419 = vpop.f32.mrb[0].mxu0
      %v420 = vadd.f32 %v315, %v419
      %v421 = vpop.f32.mrb[0].mxu0
      %422 = vmatprep.mubr.f32.mxu0 0.0
      %423 = vmatmul.mubr.f32.gmra.mrb[0].mxu0 %v199
      %v424 = vpop.f32.mrb[0].mxu0
      %v425 = vadd.f32 %v320, %v424
      %v426 = vpop.f32.mrb[0].mxu0
      %427 = vmatprep.mubr.f32.mxu0 0.0
      %428 = vmatmul.mubr.f32.gmra.mrb[0].mxu0 %v200
      %v429 = vpop.f32.mrb[0].mxu0
      %v430 = vadd.f32 %v325, %v429
      %v431 = vpop.f32.mrb[0].mxu0
      %432 = vmatprep.mubr.f32.mxu0 0.0
      %433 = vmatmul.mubr.f32.gmra.mrb[0].mxu0 %v201
      %v434 = vpop.f32.mrb[0].mxu0
      %v435 = vadd.f32 %v330, %v434
      %v436 = vpop.f32.mrb[0].mxu0
      %437 = vmatprep.mubr.f32.mxu0 0.0
      %438 = vmatmul.mubr.f32.gmra.mrb[0].mxu0 %v202
      %v439 = vpop.f32.mrb[0].mxu0
      %v440 = vadd.f32 %v335, %v439
      %v441 = vpop.f32.mrb[0].mxu0
      %442 = vmatprep.mubr.f32.mxu0 0.0
      %443 = vmatmul.mubr.f32.gmra.mrb[0].mxu0 %v203
      %v444 = vpop.f32.mrb[0].mxu0
      %v445 = vadd.f32 %v340, %v444
      %v446 = vpop.f32.mrb[0].mxu0
      %447 = vmatprep.mubr.f32.mxu0 0.0
      %448 = vmatmul.mubr.f32.gmra.mrb[0].mxu0 %v204
      %v449 = vpop.f32.mrb[0].mxu0
      %v450 = vadd.f32 %v345, %v449
      %v451 = vpop.f32.mrb[0].mxu0
      %452 = vmatprep.mubr.f32.mxu0 0.0
      %453 = vmatmul.mubr.f32.gmra.mrb[0].mxu0 %v205
      %v454 = vpop.f32.mrb[0].mxu0
      %v455 = vadd.f32 %v350, %v454
      %v456 = vpop.f32.mrb[0].mxu0
      %457 = vdwg.mxu0
      %v458 = vld [vmem:[%s192 + $0x1] sm:$0xff]
      %v459 = vld [vmem:[%s192 + $0x11] sm:$0xff]
      %v460 = vld [vmem:[%s192 + $0x21] sm:$0xff]
      %v461 = vld [vmem:[%s192 + $0x31] sm:$0xff]
      %v462 = vld [vmem:[%s192 + $0x41] sm:$0xff]
      %v463 = vld [vmem:[%s192 + $0x51] sm:$0xff]
      %v464 = vld [vmem:[%s192 + $0x61] sm:$0xff]
      %v465 = vld [vmem:[%s192 + $0x71] sm:$0xff]
      %s466 = scalar_lea.vmem %s1, 256
      %v467 = vld [vmem:[%s466] sm:$0xff]
      %v468 = vld [vmem:[%s466 + $0x8] sm:$0xff]
      %v469 = vld [vmem:[%s466 + $0x10] sm:$0xff]
      %v470 = vld [vmem:[%s466 + $0x18] sm:$0xff]
      %v471 = vld [vmem:[%s466 + $0x20] sm:$0xff]
      %v472 = vld [vmem:[%s466 + $0x28] sm:$0xff]
      %v473 = vld [vmem:[%s466 + $0x30] sm:$0xff]
      %v474 = vld [vmem:[%s466 + $0x38] sm:$0xff]
      %v475 = vld [vmem:[%s466 + $0x40] sm:$0xff]
      %v476 = vld [vmem:[%s466 + $0x48] sm:$0xff]
      %v477 = vld [vmem:[%s466 + $0x50] sm:$0xff]
      %v478 = vld [vmem:[%s466 + $0x58] sm:$0xff]
      %v479 = vld [vmem:[%s466 + $0x60] sm:$0xff]
      %v480 = vld [vmem:[%s466 + $0x68] sm:$0xff]
      %v481 = vld [vmem:[%s466 + $0x70] sm:$0xff]
      %v482 = vld [vmem:[%s466 + $0x78] sm:$0xff]
      %483 = vmatprep.subr.mxu0 0.0
      %484 = vmatpush1.msra.mxu0 %v467
      %485 = vmatprep.subr.mxu0 0.0
      %486 = vmatpush1.msra.mxu0 %v468
      %487 = vmatprep.subr.mxu0 0.0
      %488 = vmatpush1.msra.mxu0 %v469
      %489 = vmatprep.subr.mxu0 0.0
      %490 = vmatpush1.msra.mxu0 %v470
      %491 = vmatprep.subr.mxu0 0.0
      %492 = vmatpush1.msra.mxu0 %v471
      %493 = vmatprep.subr.mxu0 0.0
      %494 = vmatpush1.msra.mxu0 %v472
      %495 = vmatprep.subr.mxu0 0.0
      %496 = vmatpush1.msra.mxu0 %v473
      %497 = vmatprep.subr.mxu0 0.0
      %498 = vmatpush1.msra.mxu0 %v474
      %499 = vmatprep.subr.mxu0 0.0
      %500 = vmatpush1.msra.mxu0 %v475
      %501 = vmatprep.subr.mxu0 0.0
      %502 = vmatpush1.msra.mxu0 %v476
      %503 = vmatprep.subr.mxu0 0.0
      %504 = vmatpush1.msra.mxu0 %v477
      %505 = vmatprep.subr.mxu0 0.0
      %506 = vmatpush1.msra.mxu0 %v478
      %507 = vmatprep.subr.mxu0 0.0
      %508 = vmatpush1.msra.mxu0 %v479
      %509 = vmatprep.subr.mxu0 0.0
      %510 = vmatpush1.msra.mxu0 %v480
      %511 = vmatprep.subr.mxu0 0.0
      %512 = vmatpush1.msra.mxu0 %v481
      %513 = vmatprep.subr.mxu0 0.0
      %514 = vmatpush1.msra.mxu0 %v482
      %515 = vmatprep.subr.mxu0 0.0
      %516 = vmatpush1.msra.mxu0 0.0
      %517 = vmatprep.subr.mxu0 0.0
      %518 = vmatpush1.msra.mxu0 0.0
      %519 = vmatprep.subr.mxu0 0.0
      %520 = vmatpush1.msra.mxu0 0.0
      %521 = vmatprep.subr.mxu0 0.0
      %522 = vmatpush1.msra.mxu0 0.0
      %523 = vmatprep.subr.mxu0 0.0
      %524 = vmatpush1.msra.mxu0 0.0
      %525 = vmatprep.subr.mxu0 0.0
      %526 = vmatpush1.msra.mxu0 0.0
      %527 = vmatprep.subr.mxu0 0.0
      %528 = vmatpush1.msra.mxu0 0.0
      %529 = vmatprep.subr.mxu0 0.0
      %530 = vmatpush1.msra.mxu0 0.0
      %531 = vmatprep.subr.mxu0 0.0
      %532 = vmatpush1.msra.mxu0 0.0
      %533 = vmatprep.subr.mxu0 0.0
      %534 = vmatpush1.msra.mxu0 0.0
      %535 = vmatprep.subr.mxu0 0.0
      %536 = vmatpush1.msra.mxu0 0.0
      %537 = vmatprep.subr.mxu0 0.0
      %538 = vmatpush1.msra.mxu0 0.0
      %539 = vmatprep.subr.mxu0 0.0
      %540 = vmatpush1.msra.mxu0 0.0
      %541 = vmatprep.subr.mxu0 0.0
      %542 = vmatpush1.msra.mxu0 0.0
      %543 = vmatprep.subr.mxu0 0.0
      %544 = vmatpush1.msra.mxu0 0.0
      %545 = vmatprep.subr.mxu0 0.0
      %546 = vmatpush1.msra.mxu0 0.0
      %547 = vmatprep.mubr.f32.mxu0 0.0
      %548 = vmatmul.mubr.f32.gmra.mrb[0].mxu0 %v458
      %v549 = vpop.f32.mrb[0].mxu0
      %v550 = vadd.f32 0.0, %v549
      %v551 = vpop.f32.mrb[0].mxu0
      %552 = vmatprep.mubr.f32.mxu0 0.0
      %553 = vmatmul.mubr.f32.gmra.mrb[0].mxu0 %v459
      %v554 = vpop.f32.mrb[0].mxu0
      %v555 = vadd.f32 0.0, %v554
      %v556 = vpop.f32.mrb[0].mxu0
      %557 = vmatprep.mubr.f32.mxu0 0.0
      %558 = vmatmul.mubr.f32.gmra.mrb[0].mxu0 %v460
      %v559 = vpop.f32.mrb[0].mxu0
      %v560 = vadd.f32 0.0, %v559
      %v561 = vpop.f32.mrb[0].mxu0
      %562 = vmatprep.mubr.f32.mxu0 0.0
      %563 = vmatmul.mubr.f32.gmra.mrb[0].mxu0 %v461
      %v564 = vpop.f32.mrb[0].mxu0
      %v565 = vadd.f32 0.0, %v564
      %v566 = vpop.f32.mrb[0].mxu0
      %567 = vmatprep.mubr.f32.mxu0 0.0
      %568 = vmatmul.mubr.f32.gmra.mrb[0].mxu0 %v462
      %v569 = vpop.f32.mrb[0].mxu0
      %v570 = vadd.f32 0.0, %v569
      %v571 = vpop.f32.mrb[0].mxu0
      %572 = vmatprep.mubr.f32.mxu0 0.0
      %573 = vmatmul.mubr.f32.gmra.mrb[0].mxu0 %v463
      %v574 = vpop.f32.mrb[0].mxu0
      %v575 = vadd.f32 0.0, %v574
      %v576 = vpop.f32.mrb[0].mxu0
      %577 = vmatprep.mubr.f32.mxu0 0.0
      %578 = vmatmul.mubr.f32.gmra.mrb[0].mxu0 %v464
      %v579 = vpop.f32.mrb[0].mxu0
      %v580 = vadd.f32 0.0, %v579
      %v581 = vpop.f32.mrb[0].mxu0
      %582 = vmatprep.mubr.f32.mxu0 0.0
      %583 = vmatmul.mubr.f32.gmra.mrb[0].mxu0 %v465
      %v584 = vpop.f32.mrb[0].mxu0
      %v585 = vadd.f32 0.0, %v584
      %v586 = vpop.f32.mrb[0].mxu0
      %587 = vdwg.mxu0
      %v588 = vadd.f32 %v420, %v550
      %v589 = vadd.f32 %v425, %v555
      %v590 = vadd.f32 %v430, %v560
      %v591 = vadd.f32 %v435, %v565
      %v592 = vadd.f32 %v440, %v570
      %v593 = vadd.f32 %v445, %v575
      %v594 = vadd.f32 %v450, %v580
      %v595 = vadd.f32 %v455, %v585
      %s596 = scalar_lea.vmem %s192, 288
      %v597 = vld [vmem:[%s596] sm:$0xff]
      %v598 = vld [vmem:[%s596 + $0x10] sm:$0xff]
      %v599 = vld [vmem:[%s596 + $0x20] sm:$0xff]
      %v600 = vld [vmem:[%s596 + $0x30] sm:$0xff]
      %v601 = vld [vmem:[%s596 + $0x40] sm:$0xff]
      %v602 = vld [vmem:[%s596 + $0x50] sm:$0xff]
      %v603 = vld [vmem:[%s596 + $0x60] sm:$0xff]
      %v604 = vld [vmem:[%s596 + $0x70] sm:$0xff]
      %s605 = scalar_lea.vmem %s1, 384
      %v606 = vld [vmem:[%s605] sm:$0xff]
      %v607 = vld [vmem:[%s605 + $0x8] sm:$0xff]
      %v608 = vld [vmem:[%s605 + $0x10] sm:$0xff]
      %v609 = vld [vmem:[%s605 + $0x18] sm:$0xff]
      %v610 = vld [vmem:[%s605 + $0x20] sm:$0xff]
      %v611 = vld [vmem:[%s605 + $0x28] sm:$0xff]
      %v612 = vld [vmem:[%s605 + $0x30] sm:$0xff]
      %v613 = vld [vmem:[%s605 + $0x38] sm:$0xff]
      %v614 = vld [vmem:[%s605 + $0x40] sm:$0xff]
      %v615 = vld [vmem:[%s605 + $0x48] sm:$0xff]
      %v616 = vld [vmem:[%s605 + $0x50] sm:$0xff]
      %v617 = vld [vmem:[%s605 + $0x58] sm:$0xff]
      %v618 = vld [vmem:[%s605 + $0x60] sm:$0xff]
      %v619 = vld [vmem:[%s605 + $0x68] sm:$0xff]
      %v620 = vld [vmem:[%s605 + $0x70] sm:$0xff]
      %v621 = vld [vmem:[%s605 + $0x78] sm:$0xff]
      %622 = vmatprep.subr.mxu0 0.0
      %623 = vmatpush1.msra.mxu0 %v606
      %624 = vmatprep.subr.mxu0 0.0
      %625 = vmatpush1.msra.mxu0 %v607
      %626 = vmatprep.subr.mxu0 0.0
      %627 = vmatpush1.msra.mxu0 %v608
      %628 = vmatprep.subr.mxu0 0.0
      %629 = vmatpush1.msra.mxu0 %v609
      %630 = vmatprep.subr.mxu0 0.0
      %631 = vmatpush1.msra.mxu0 %v610
      %632 = vmatprep.subr.mxu0 0.0
      %633 = vmatpush1.msra.mxu0 %v611
      %634 = vmatprep.subr.mxu0 0.0
      %635 = vmatpush1.msra.mxu0 %v612
      %636 = vmatprep.subr.mxu0 0.0
      %637 = vmatpush1.msra.mxu0 %v613
      %638 = vmatprep.subr.mxu0 0.0
      %639 = vmatpush1.msra.mxu0 %v614
      %640 = vmatprep.subr.mxu0 0.0
      %641 = vmatpush1.msra.mxu0 %v615
      %642 = vmatprep.subr.mxu0 0.0
      %643 = vmatpush1.msra.mxu0 %v616
      %644 = vmatprep.subr.mxu0 0.0
      %645 = vmatpush1.msra.mxu0 %v617
      %646 = vmatprep.subr.mxu0 0.0
      %647 = vmatpush1.msra.mxu0 %v618
      %648 = vmatprep.subr.mxu0 0.0
      %649 = vmatpush1.msra.mxu0 %v619
      %650 = vmatprep.subr.mxu0 0.0
      %651 = vmatpush1.msra.mxu0 %v620
      %652 = vmatprep.subr.mxu0 0.0
      %653 = vmatpush1.msra.mxu0 %v621
      %654 = vmatprep.subr.mxu0 0.0
      %655 = vmatpush1.msra.mxu0 0.0
      %656 = vmatprep.subr.mxu0 0.0
      %657 = vmatpush1.msra.mxu0 0.0
      %658 = vmatprep.subr.mxu0 0.0
      %659 = vmatpush1.msra.mxu0 0.0
      %660 = vmatprep.subr.mxu0 0.0
      %661 = vmatpush1.msra.mxu0 0.0
      %662 = vmatprep.subr.mxu0 0.0
      %663 = vmatpush1.msra.mxu0 0.0
      %664 = vmatprep.subr.mxu0 0.0
      %665 = vmatpush1.msra.mxu0 0.0
      %666 = vmatprep.subr.mxu0 0.0
      %667 = vmatpush1.msra.mxu0 0.0
      %668 = vmatprep.subr.mxu0 0.0
      %669 = vmatpush1.msra.mxu0 0.0
      %670 = vmatprep.subr.mxu0 0.0
      %671 = vmatpush1.msra.mxu0 0.0
      %672 = vmatprep.subr.mxu0 0.0
      %673 = vmatpush1.msra.mxu0 0.0
      %674 = vmatprep.subr.mxu0 0.0
      %675 = vmatpush1.msra.mxu0 0.0
      %676 = vmatprep.subr.mxu0 0.0
      %677 = vmatpush1.msra.mxu0 0.0
      %678 = vmatprep.subr.mxu0 0.0
      %679 = vmatpush1.msra.mxu0 0.0
      %680 = vmatprep.subr.mxu0 0.0
      %681 = vmatpush1.msra.mxu0 0.0
      %682 = vmatprep.subr.mxu0 0.0
      %683 = vmatpush1.msra.mxu0 0.0
      %684 = vmatprep.subr.mxu0 0.0
      %685 = vmatpush1.msra.mxu0 0.0
      %686 = vmatprep.mubr.f32.mxu0 0.0
      %687 = vmatmul.mubr.f32.gmra.mrb[0].mxu0 %v597
      %v688 = vpop.f32.mrb[0].mxu0
      %v689 = vadd.f32 0.0, %v688
      %v690 = vpop.f32.mrb[0].mxu0
      %691 = vmatprep.mubr.f32.mxu0 0.0
      %692 = vmatmul.mubr.f32.gmra.mrb[0].mxu0 %v598
      %v693 = vpop.f32.mrb[0].mxu0
      %v694 = vadd.f32 0.0, %v693
      %v695 = vpop.f32.mrb[0].mxu0
      %696 = vmatprep.mubr.f32.mxu0 0.0
      %697 = vmatmul.mubr.f32.gmra.mrb[0].mxu0 %v599
      %v698 = vpop.f32.mrb[0].mxu0
      %v699 = vadd.f32 0.0, %v698
      %v700 = vpop.f32.mrb[0].mxu0
      %701 = vmatprep.mubr.f32.mxu0 0.0
      %702 = vmatmul.mubr.f32.gmra.mrb[0].mxu0 %v600
      %v703 = vpop.f32.mrb[0].mxu0
      %v704 = vadd.f32 0.0, %v703
      %v705 = vpop.f32.mrb[0].mxu0
      %706 = vmatprep.mubr.f32.mxu0 0.0
      %707 = vmatmul.mubr.f32.gmra.mrb[0].mxu0 %v601
      %v708 = vpop.f32.mrb[0].mxu0
      %v709 = vadd.f32 0.0, %v708
      %v710 = vpop.f32.mrb[0].mxu0
      %711 = vmatprep.mubr.f32.mxu0 0.0
      %712 = vmatmul.mubr.f32.gmra.mrb[0].mxu0 %v602
      %v713 = vpop.f32.mrb[0].mxu0
      %v714 = vadd.f32 0.0, %v713
      %v715 = vpop.f32.mrb[0].mxu0
      %716 = vmatprep.mubr.f32.mxu0 0.0
      %717 = vmatmul.mubr.f32.gmra.mrb[0].mxu0 %v603
      %v718 = vpop.f32.mrb[0].mxu0
      %v719 = vadd.f32 0.0, %v718
      %v720 = vpop.f32.mrb[0].mxu0
      %721 = vmatprep.mubr.f32.mxu0 0.0
      %722 = vmatmul.mubr.f32.gmra.mrb[0].mxu0 %v604
      %v723 = vpop.f32.mrb[0].mxu0
      %v724 = vadd.f32 0.0, %v723
      %v725 = vpop.f32.mrb[0].mxu0
      %726 = vdwg.mxu0
      %v727 = vadd.f32 %v588, %v689
      %v728 = vadd.f32 %v589, %v694
      %v729 = vadd.f32 %v590, %v699
      %v730 = vadd.f32 %v591, %v704
      %v731 = vadd.f32 %v592, %v709
      %v732 = vadd.f32 %v593, %v714
      %v733 = vadd.f32 %v594, %v719
      %v734 = vadd.f32 %v595, %v724
      %s735 = scalar_lea.vmem %s192, 432
      %v736 = vld [vmem:[%s735] sm:$0xff]
      %v737 = vld [vmem:[%s735 + $0x10] sm:$0xff]
      %v738 = vld [vmem:[%s735 + $0x20] sm:$0xff]
      %v739 = vld [vmem:[%s735 + $0x30] sm:$0xff]
      %v740 = vld [vmem:[%s735 + $0x40] sm:$0xff]
      %v741 = vld [vmem:[%s735 + $0x50] sm:$0xff]
      %v742 = vld [vmem:[%s735 + $0x60] sm:$0xff]
      %v743 = vld [vmem:[%s735 + $0x70] sm:$0xff]
      %s744 = scalar_lea.vmem %s1, 512
      %v745 = vld [vmem:[%s744] sm:$0xff]
      %v746 = vld [vmem:[%s744 + $0x8] sm:$0xff]
      %v747 = vld [vmem:[%s744 + $0x10] sm:$0xff]
      %v748 = vld [vmem:[%s744 + $0x18] sm:$0xff]
      %v749 = vld [vmem:[%s744 + $0x20] sm:$0xff]
      %v750 = vld [vmem:[%s744 + $0x28] sm:$0xff]
      %v751 = vld [vmem:[%s744 + $0x30] sm:$0xff]
      %v752 = vld [vmem:[%s744 + $0x38] sm:$0xff]
      %v753 = vld [vmem:[%s744 + $0x40] sm:$0xff]
      %v754 = vld [vmem:[%s744 + $0x48] sm:$0xff]
      %v755 = vld [vmem:[%s744 + $0x50] sm:$0xff]
      %v756 = vld [vmem:[%s744 + $0x58] sm:$0xff]
      %v757 = vld [vmem:[%s744 + $0x60] sm:$0xff]
      %v758 = vld [vmem:[%s744 + $0x68] sm:$0xff]
      %v759 = vld [vmem:[%s744 + $0x70] sm:$0xff]
      %v760 = vld [vmem:[%s744 + $0x78] sm:$0xff]
      %761 = vmatprep.subr.mxu0 0.0
      %762 = vmatpush1.msra.mxu0 %v745
      %763 = vmatprep.subr.mxu0 0.0
      %764 = vmatpush1.msra.mxu0 %v746
      %765 = vmatprep.subr.mxu0 0.0
      %766 = vmatpush1.msra.mxu0 %v747
      %767 = vmatprep.subr.mxu0 0.0
      %768 = vmatpush1.msra.mxu0 %v748
      %769 = vmatprep.subr.mxu0 0.0
      %770 = vmatpush1.msra.mxu0 %v749
      %771 = vmatprep.subr.mxu0 0.0
      %772 = vmatpush1.msra.mxu0 %v750
      %773 = vmatprep.subr.mxu0 0.0
      %774 = vmatpush1.msra.mxu0 %v751
      %775 = vmatprep.subr.mxu0 0.0
      %776 = vmatpush1.msra.mxu0 %v752
      %777 = vmatprep.subr.mxu0 0.0
      %778 = vmatpush1.msra.mxu0 %v753
      %779 = vmatprep.subr.mxu0 0.0
      %780 = vmatpush1.msra.mxu0 %v754
      %781 = vmatprep.subr.mxu0 0.0
      %782 = vmatpush1.msra.mxu0 %v755
      %783 = vmatprep.subr.mxu0 0.0
      %784 = vmatpush1.msra.mxu0 %v756
      %785 = vmatprep.subr.mxu0 0.0
      %786 = vmatpush1.msra.mxu0 %v757
      %787 = vmatprep.subr.mxu0 0.0
      %788 = vmatpush1.msra.mxu0 %v758
      %789 = vmatprep.subr.mxu0 0.0
      %790 = vmatpush1.msra.mxu0 %v759
      %791 = vmatprep.subr.mxu0 0.0
      %792 = vmatpush1.msra.mxu0 %v760
      %793 = vmatprep.subr.mxu0 0.0
      %794 = vmatpush1.msra.mxu0 0.0
      %795 = vmatprep.subr.mxu0 0.0
      %796 = vmatpush1.msra.mxu0 0.0
      %797 = vmatprep.subr.mxu0 0.0
      %798 = vmatpush1.msra.mxu0 0.0
      %799 = vmatprep.subr.mxu0 0.0
      %800 = vmatpush1.msra.mxu0 0.0
      %801 = vmatprep.subr.mxu0 0.0
      %802 = vmatpush1.msra.mxu0 0.0
      %803 = vmatprep.subr.mxu0 0.0
      %804 = vmatpush1.msra.mxu0 0.0
      %805 = vmatprep.subr.mxu0 0.0
      %806 = vmatpush1.msra.mxu0 0.0
      %807 = vmatprep.subr.mxu0 0.0
      %808 = vmatpush1.msra.mxu0 0.0
      %809 = vmatprep.subr.mxu0 0.0
      %810 = vmatpush1.msra.mxu0 0.0
      %811 = vmatprep.subr.mxu0 0.0
      %812 = vmatpush1.msra.mxu0 0.0
      %813 = vmatprep.subr.mxu0 0.0
      %814 = vmatpush1.msra.mxu0 0.0
      %815 = vmatprep.subr.mxu0 0.0
      %816 = vmatpush1.msra.mxu0 0.0
      %817 = vmatprep.subr.mxu0 0.0
      %818 = vmatpush1.msra.mxu0 0.0
      %819 = vmatprep.subr.mxu0 0.0
      %820 = vmatpush1.msra.mxu0 0.0
      %821 = vmatprep.subr.mxu0 0.0
      %822 = vmatpush1.msra.mxu0 0.0
      %823 = vmatprep.subr.mxu0 0.0
      %824 = vmatpush1.msra.mxu0 0.0
      %825 = vmatprep.mubr.f32.mxu0 0.0
      %826 = vmatmul.mubr.f32.gmra.mrb[0].mxu0 %v736
      %v827 = vpop.f32.mrb[0].mxu0
      %v828 = vadd.f32 0.0, %v827
      %v829 = vpop.f32.mrb[0].mxu0
      %830 = vmatprep.mubr.f32.mxu0 0.0
      %831 = vmatmul.mubr.f32.gmra.mrb[0].mxu0 %v737
      %v832 = vpop.f32.mrb[0].mxu0
      %v833 = vadd.f32 0.0, %v832
      %v834 = vpop.f32.mrb[0].mxu0
      %835 = vmatprep.mubr.f32.mxu0 0.0
      %836 = vmatmul.mubr.f32.gmra.mrb[0].mxu0 %v738
      %v837 = vpop.f32.mrb[0].mxu0
      %v838 = vadd.f32 0.0, %v837
      %v839 = vpop.f32.mrb[0].mxu0
      %840 = vmatprep.mubr.f32.mxu0 0.0
      %841 = vmatmul.mubr.f32.gmra.mrb[0].mxu0 %v739
      %v842 = vpop.f32.mrb[0].mxu0
      %v843 = vadd.f32 0.0, %v842
      %v844 = vpop.f32.mrb[0].mxu0
      %845 = vmatprep.mubr.f32.mxu0 0.0
      %846 = vmatmul.mubr.f32.gmra.mrb[0].mxu0 %v740
      %v847 = vpop.f32.mrb[0].mxu0
      %v848 = vadd.f32 0.0, %v847
      %v849 = vpop.f32.mrb[0].mxu0
      %850 = vmatprep.mubr.f32.mxu0 0.0
      %851 = vmatmul.mubr.f32.gmra.mrb[0].mxu0 %v741
      %v852 = vpop.f32.mrb[0].mxu0
      %v853 = vadd.f32 0.0, %v852
      %v854 = vpop.f32.mrb[0].mxu0
      %855 = vmatprep.mubr.f32.mxu0 0.0
      %856 = vmatmul.mubr.f32.gmra.mrb[0].mxu0 %v742
      %v857 = vpop.f32.mrb[0].mxu0
      %v858 = vadd.f32 0.0, %v857
      %v859 = vpop.f32.mrb[0].mxu0
      %860 = vmatprep.mubr.f32.mxu0 0.0
      %861 = vmatmul.mubr.f32.gmra.mrb[0].mxu0 %v743
      %v862 = vpop.f32.mrb[0].mxu0
      %v863 = vadd.f32 0.0, %v862
      %v864 = vpop.f32.mrb[0].mxu0
      %865 = vdwg.mxu0
      %v866 = vadd.f32 %v727, %v828
      %v867 = vadd.f32 %v728, %v833
      %v868 = vadd.f32 %v729, %v838
      %v869 = vadd.f32 %v730, %v843
      %v870 = vadd.f32 %v731, %v848
      %v871 = vadd.f32 %v732, %v853
      %v872 = vadd.f32 %v733, %v858
      %v873 = vadd.f32 %v734, %v863
      %v874 = vld [vmem:[%s596 + $0x1] sm:$0xff]
      %v875 = vld [vmem:[%s596 + $0x11] sm:$0xff]
      %v876 = vld [vmem:[%s596 + $0x21] sm:$0xff]
      %v877 = vld [vmem:[%s596 + $0x31] sm:$0xff]
      %v878 = vld [vmem:[%s596 + $0x41] sm:$0xff]
      %v879 = vld [vmem:[%s596 + $0x51] sm:$0xff]
      %v880 = vld [vmem:[%s596 + $0x61] sm:$0xff]
      %v881 = vld [vmem:[%s596 + $0x71] sm:$0xff]
      %s882 = scalar_lea.vmem %s1, 640
      %v883 = vld [vmem:[%s882] sm:$0xff]
      %v884 = vld [vmem:[%s882 + $0x8] sm:$0xff]
      %v885 = vld [vmem:[%s882 + $0x10] sm:$0xff]
      %v886 = vld [vmem:[%s882 + $0x18] sm:$0xff]
      %v887 = vld [vmem:[%s882 + $0x20] sm:$0xff]
      %v888 = vld [vmem:[%s882 + $0x28] sm:$0xff]
      %v889 = vld [vmem:[%s882 + $0x30] sm:$0xff]
      %v890 = vld [vmem:[%s882 + $0x38] sm:$0xff]
      %v891 = vld [vmem:[%s882 + $0x40] sm:$0xff]
      %v892 = vld [vmem:[%s882 + $0x48] sm:$0xff]
      %v893 = vld [vmem:[%s882 + $0x50] sm:$0xff]
      %v894 = vld [vmem:[%s882 + $0x58] sm:$0xff]
      %v895 = vld [vmem:[%s882 + $0x60] sm:$0xff]
      %v896 = vld [vmem:[%s882 + $0x68] sm:$0xff]
      %v897 = vld [vmem:[%s882 + $0x70] sm:$0xff]
      %v898 = vld [vmem:[%s882 + $0x78] sm:$0xff]
      %899 = vmatprep.subr.mxu0 0.0
      %900 = vmatpush1.msra.mxu0 %v883
      %901 = vmatprep.subr.mxu0 0.0
      %902 = vmatpush1.msra.mxu0 %v884
      %903 = vmatprep.subr.mxu0 0.0
      %904 = vmatpush1.msra.mxu0 %v885
      %905 = vmatprep.subr.mxu0 0.0
      %906 = vmatpush1.msra.mxu0 %v886
      %907 = vmatprep.subr.mxu0 0.0
      %908 = vmatpush1.msra.mxu0 %v887
      %909 = vmatprep.subr.mxu0 0.0
      %910 = vmatpush1.msra.mxu0 %v888
      %911 = vmatprep.subr.mxu0 0.0
      %912 = vmatpush1.msra.mxu0 %v889
      %913 = vmatprep.subr.mxu0 0.0
      %914 = vmatpush1.msra.mxu0 %v890
      %915 = vmatprep.subr.mxu0 0.0
      %916 = vmatpush1.msra.mxu0 %v891
      %917 = vmatprep.subr.mxu0 0.0
      %918 = vmatpush1.msra.mxu0 %v892
      %919 = vmatprep.subr.mxu0 0.0
      %920 = vmatpush1.msra.mxu0 %v893
      %921 = vmatprep.subr.mxu0 0.0
      %922 = vmatpush1.msra.mxu0 %v894
      %923 = vmatprep.subr.mxu0 0.0
      %924 = vmatpush1.msra.mxu0 %v895
      %925 = vmatprep.subr.mxu0 0.0
      %926 = vmatpush1.msra.mxu0 %v896
      %927 = vmatprep.subr.mxu0 0.0
      %928 = vmatpush1.msra.mxu0 %v897
      %929 = vmatprep.subr.mxu0 0.0
      %930 = vmatpush1.msra.mxu0 %v898
      %931 = vmatprep.subr.mxu0 0.0
      %932 = vmatpush1.msra.mxu0 0.0
      %933 = vmatprep.subr.mxu0 0.0
      %934 = vmatpush1.msra.mxu0 0.0
      %935 = vmatprep.subr.mxu0 0.0
      %936 = vmatpush1.msra.mxu0 0.0
      %937 = vmatprep.subr.mxu0 0.0
      %938 = vmatpush1.msra.mxu0 0.0
      %939 = vmatprep.subr.mxu0 0.0
      %940 = vmatpush1.msra.mxu0 0.0
      %941 = vmatprep.subr.mxu0 0.0
      %942 = vmatpush1.msra.mxu0 0.0
      %943 = vmatprep.subr.mxu0 0.0
      %944 = vmatpush1.msra.mxu0 0.0
      %945 = vmatprep.subr.mxu0 0.0
      %946 = vmatpush1.msra.mxu0 0.0
      %947 = vmatprep.subr.mxu0 0.0
      %948 = vmatpush1.msra.mxu0 0.0
      %949 = vmatprep.subr.mxu0 0.0
      %950 = vmatpush1.msra.mxu0 0.0
      %951 = vmatprep.subr.mxu0 0.0
      %952 = vmatpush1.msra.mxu0 0.0
      %953 = vmatprep.subr.mxu0 0.0
      %954 = vmatpush1.msra.mxu0 0.0
      %955 = vmatprep.subr.mxu0 0.0
      %956 = vmatpush1.msra.mxu0 0.0
      %957 = vmatprep.subr.mxu0 0.0
      %958 = vmatpush1.msra.mxu0 0.0
      %959 = vmatprep.subr.mxu0 0.0
      %960 = vmatpush1.msra.mxu0 0.0
      %961 = vmatprep.subr.mxu0 0.0
      %962 = vmatpush1.msra.mxu0 0.0
      %963 = vmatprep.mubr.f32.mxu0 0.0
      %964 = vmatmul.mubr.f32.gmra.mrb[0].mxu0 %v874
      %v965 = vpop.f32.mrb[0].mxu0
      %v966 = vadd.f32 0.0, %v965
      %v967 = vpop.f32.mrb[0].mxu0
      %968 = vmatprep.mubr.f32.mxu0 0.0
      %969 = vmatmul.mubr.f32.gmra.mrb[0].mxu0 %v875
      %v970 = vpop.f32.mrb[0].mxu0
      %v971 = vadd.f32 0.0, %v970
      %v972 = vpop.f32.mrb[0].mxu0
      %973 = vmatprep.mubr.f32.mxu0 0.0
      %974 = vmatmul.mubr.f32.gmra.mrb[0].mxu0 %v876
      %v975 = vpop.f32.mrb[0].mxu0
      %v976 = vadd.f32 0.0, %v975
      %v977 = vpop.f32.mrb[0].mxu0
      %978 = vmatprep.mubr.f32.mxu0 0.0
      %979 = vmatmul.mubr.f32.gmra.mrb[0].mxu0 %v877
      %v980 = vpop.f32.mrb[0].mxu0
      %v981 = vadd.f32 0.0, %v980
      %v982 = vpop.f32.mrb[0].mxu0
      %983 = vmatprep.mubr.f32.mxu0 0.0
      %984 = vmatmul.mubr.f32.gmra.mrb[0].mxu0 %v878
      %v985 = vpop.f32.mrb[0].mxu0
      %v986 = vadd.f32 0.0, %v985
      %v987 = vpop.f32.mrb[0].mxu0
      %988 = vmatprep.mubr.f32.mxu0 0.0
      %989 = vmatmul.mubr.f32.gmra.mrb[0].mxu0 %v879
      %v990 = vpop.f32.mrb[0].mxu0
      %v991 = vadd.f32 0.0, %v990
      %v992 = vpop.f32.mrb[0].mxu0
      %993 = vmatprep.mubr.f32.mxu0 0.0
      %994 = vmatmul.mubr.f32.gmra.mrb[0].mxu0 %v880
      %v995 = vpop.f32.mrb[0].mxu0
      %v996 = vadd.f32 0.0, %v995
      %v997 = vpop.f32.mrb[0].mxu0
      %998 = vmatprep.mubr.f32.mxu0 0.0
      %999 = vmatmul.mubr.f32.gmra.mrb[0].mxu0 %v881
      %v1000 = vpop.f32.mrb[0].mxu0
      %v1001 = vadd.f32 0.0, %v1000
      %v1002 = vpop.f32.mrb[0].mxu0
      %1003 = vdwg.mxu0
      %v1004 = vadd.f32 %v866, %v966
      %v1005 = vadd.f32 %v867, %v971
      %v1006 = vadd.f32 %v868, %v976
      %v1007 = vadd.f32 %v869, %v981
      %v1008 = vadd.f32 %v870, %v986
      %v1009 = vadd.f32 %v871, %v991
      %v1010 = vadd.f32 %v872, %v996
      %v1011 = vadd.f32 %v873, %v1001
      %s1012 = scalar_lea.vmem %s192, 16
      %v1013 = vld [vmem:[%s1012] sm:$0xff]
      %v1014 = vld [vmem:[%s1012 + $0x10] sm:$0xff]
      %v1015 = vld [vmem:[%s1012 + $0x20] sm:$0xff]
      %v1016 = vld [vmem:[%s1012 + $0x30] sm:$0xff]
      %v1017 = vld [vmem:[%s1012 + $0x40] sm:$0xff]
      %v1018 = vld [vmem:[%s1012 + $0x50] sm:$0xff]
      %v1019 = vld [vmem:[%s1012 + $0x60] sm:$0xff]
      %v1020 = vld [vmem:[%s1012 + $0x70] sm:$0xff]
      %s1021 = scalar_lea.vmem %s1, 768
      %v1022 = vld [vmem:[%s1021] sm:$0xff]
      %v1023 = vld [vmem:[%s1021 + $0x8] sm:$0xff]
      %v1024 = vld [vmem:[%s1021 + $0x10] sm:$0xff]
      %v1025 = vld [vmem:[%s1021 + $0x18] sm:$0xff]
      %v1026 = vld [vmem:[%s1021 + $0x20] sm:$0xff]
      %v1027 = vld [vmem:[%s1021 + $0x28] sm:$0xff]
      %v1028 = vld [vmem:[%s1021 + $0x30] sm:$0xff]
      %v1029 = vld [vmem:[%s1021 + $0x38] sm:$0xff]
      %v1030 = vld [vmem:[%s1021 + $0x40] sm:$0xff]
      %v1031 = vld [vmem:[%s1021 + $0x48] sm:$0xff]
      %v1032 = vld [vmem:[%s1021 + $0x50] sm:$0xff]
      %v1033 = vld [vmem:[%s1021 + $0x58] sm:$0xff]
      %v1034 = vld [vmem:[%s1021 + $0x60] sm:$0xff]
      %v1035 = vld [vmem:[%s1021 + $0x68] sm:$0xff]
      %v1036 = vld [vmem:[%s1021 + $0x70] sm:$0xff]
      %v1037 = vld [vmem:[%s1021 + $0x78] sm:$0xff]
      %1038 = vmatprep.subr.mxu0 0.0
      %1039 = vmatpush1.msra.mxu0 %v1022
      %1040 = vmatprep.subr.mxu0 0.0
      %1041 = vmatpush1.msra.mxu0 %v1023
      %1042 = vmatprep.subr.mxu0 0.0
      %1043 = vmatpush1.msra.mxu0 %v1024
      %1044 = vmatprep.subr.mxu0 0.0
      %1045 = vmatpush1.msra.mxu0 %v1025
      %1046 = vmatprep.subr.mxu0 0.0
      %1047 = vmatpush1.msra.mxu0 %v1026
      %1048 = vmatprep.subr.mxu0 0.0
      %1049 = vmatpush1.msra.mxu0 %v1027
      %1050 = vmatprep.subr.mxu0 0.0
      %1051 = vmatpush1.msra.mxu0 %v1028
      %1052 = vmatprep.subr.mxu0 0.0
      %1053 = vmatpush1.msra.mxu0 %v1029
      %1054 = vmatprep.subr.mxu0 0.0
      %1055 = vmatpush1.msra.mxu0 %v1030
      %1056 = vmatprep.subr.mxu0 0.0
      %1057 = vmatpush1.msra.mxu0 %v1031
      %1058 = vmatprep.subr.mxu0 0.0
      %1059 = vmatpush1.msra.mxu0 %v1032
      %1060 = vmatprep.subr.mxu0 0.0
      %1061 = vmatpush1.msra.mxu0 %v1033
      %1062 = vmatprep.subr.mxu0 0.0
      %1063 = vmatpush1.msra.mxu0 %v1034
      %1064 = vmatprep.subr.mxu0 0.0
      %1065 = vmatpush1.msra.mxu0 %v1035
      %1066 = vmatprep.subr.mxu0 0.0
      %1067 = vmatpush1.msra.mxu0 %v1036
      %1068 = vmatprep.subr.mxu0 0.0
      %1069 = vmatpush1.msra.mxu0 %v1037
      %1070 = vmatprep.subr.mxu0 0.0
      %1071 = vmatpush1.msra.mxu0 0.0
      %1072 = vmatprep.subr.mxu0 0.0
      %1073 = vmatpush1.msra.mxu0 0.0
      %1074 = vmatprep.subr.mxu0 0.0
      %1075 = vmatpush1.msra.mxu0 0.0
      %1076 = vmatprep.subr.mxu0 0.0
      %1077 = vmatpush1.msra.mxu0 0.0
      %1078 = vmatprep.subr.mxu0 0.0
      %1079 = vmatpush1.msra.mxu0 0.0
      %1080 = vmatprep.subr.mxu0 0.0
      %1081 = vmatpush1.msra.mxu0 0.0
      %1082 = vmatprep.subr.mxu0 0.0
      %1083 = vmatpush1.msra.mxu0 0.0
      %1084 = vmatprep.subr.mxu0 0.0
      %1085 = vmatpush1.msra.mxu0 0.0
      %1086 = vmatprep.subr.mxu0 0.0
      %1087 = vmatpush1.msra.mxu0 0.0
      %1088 = vmatprep.subr.mxu0 0.0
      %1089 = vmatpush1.msra.mxu0 0.0
      %1090 = vmatprep.subr.mxu0 0.0
      %1091 = vmatpush1.msra.mxu0 0.0
      %1092 = vmatprep.subr.mxu0 0.0
      %1093 = vmatpush1.msra.mxu0 0.0
      %1094 = vmatprep.subr.mxu0 0.0
      %1095 = vmatpush1.msra.mxu0 0.0
      %1096 = vmatprep.subr.mxu0 0.0
      %1097 = vmatpush1.msra.mxu0 0.0
      %1098 = vmatprep.subr.mxu0 0.0
      %1099 = vmatpush1.msra.mxu0 0.0
      %1100 = vmatprep.subr.mxu0 0.0
      %1101 = vmatpush1.msra.mxu0 0.0
      %1102 = vmatprep.mubr.f32.mxu0 0.0
      %1103 = vmatmul.mubr.f32.gmra.mrb[0].mxu0 %v1013
      %v1104 = vpop.f32.mrb[0].mxu0
      %v1105 = vadd.f32 0.0, %v1104
      %v1106 = vpop.f32.mrb[0].mxu0
      %1107 = vmatprep.mubr.f32.mxu0 0.0
      %1108 = vmatmul.mubr.f32.gmra.mrb[0].mxu0 %v1014
      %v1109 = vpop.f32.mrb[0].mxu0
      %v1110 = vadd.f32 0.0, %v1109
      %v1111 = vpop.f32.mrb[0].mxu0
      %1112 = vmatprep.mubr.f32.mxu0 0.0
      %1113 = vmatmul.mubr.f32.gmra.mrb[0].mxu0 %v1015
      %v1114 = vpop.f32.mrb[0].mxu0
      %v1115 = vadd.f32 0.0, %v1114
      %v1116 = vpop.f32.mrb[0].mxu0
      %1117 = vmatprep.mubr.f32.mxu0 0.0
      %1118 = vmatmul.mubr.f32.gmra.mrb[0].mxu0 %v1016
      %v1119 = vpop.f32.mrb[0].mxu0
      %v1120 = vadd.f32 0.0, %v1119
      %v1121 = vpop.f32.mrb[0].mxu0
      %1122 = vmatprep.mubr.f32.mxu0 0.0
      %1123 = vmatmul.mubr.f32.gmra.mrb[0].mxu0 %v1017
      %v1124 = vpop.f32.mrb[0].mxu0
      %v1125 = vadd.f32 0.0, %v1124
      %v1126 = vpop.f32.mrb[0].mxu0
      %1127 = vmatprep.mubr.f32.mxu0 0.0
      %1128 = vmatmul.mubr.f32.gmra.mrb[0].mxu0 %v1018
      %v1129 = vpop.f32.mrb[0].mxu0
      %v1130 = vadd.f32 0.0, %v1129
      %v1131 = vpop.f32.mrb[0].mxu0
      %1132 = vmatprep.mubr.f32.mxu0 0.0
      %1133 = vmatmul.mubr.f32.gmra.mrb[0].mxu0 %v1019
      %v1134 = vpop.f32.mrb[0].mxu0
      %v1135 = vadd.f32 0.0, %v1134
      %v1136 = vpop.f32.mrb[0].mxu0
      %1137 = vmatprep.mubr.f32.mxu0 0.0
      %1138 = vmatmul.mubr.f32.gmra.mrb[0].mxu0 %v1020
      %v1139 = vpop.f32.mrb[0].mxu0
      %v1140 = vadd.f32 0.0, %v1139
      %v1141 = vpop.f32.mrb[0].mxu0
      %1142 = vdwg.mxu0
      %v1143 = vadd.f32 %v1004, %v1105
      %v1144 = vadd.f32 %v1005, %v1110
      %v1145 = vadd.f32 %v1006, %v1115
      %v1146 = vadd.f32 %v1007, %v1120
      %v1147 = vadd.f32 %v1008, %v1125
      %v1148 = vadd.f32 %v1009, %v1130
      %v1149 = vadd.f32 %v1010, %v1135
      %v1150 = vadd.f32 %v1011, %v1140
      %s1151 = scalar_lea.vmem %s192, 160
      %v1152 = vld [vmem:[%s1151] sm:$0xff]
      %v1153 = vld [vmem:[%s1151 + $0x10] sm:$0xff]
      %v1154 = vld [vmem:[%s1151 + $0x20] sm:$0xff]
      %v1155 = vld [vmem:[%s1151 + $0x30] sm:$0xff]
      %v1156 = vld [vmem:[%s1151 + $0x40] sm:$0xff]
      %v1157 = vld [vmem:[%s1151 + $0x50] sm:$0xff]
      %v1158 = vld [vmem:[%s1151 + $0x60] sm:$0xff]
      %v1159 = vld [vmem:[%s1151 + $0x70] sm:$0xff]
      %s1160 = scalar_lea.vmem %s1, 896
      %v1161 = vld [vmem:[%s1160] sm:$0xff]
      %v1162 = vld [vmem:[%s1160 + $0x8] sm:$0xff]
      %v1163 = vld [vmem:[%s1160 + $0x10] sm:$0xff]
      %v1164 = vld [vmem:[%s1160 + $0x18] sm:$0xff]
      %v1165 = vld [vmem:[%s1160 + $0x20] sm:$0xff]
      %v1166 = vld [vmem:[%s1160 + $0x28] sm:$0xff]
      %v1167 = vld [vmem:[%s1160 + $0x30] sm:$0xff]
      %v1168 = vld [vmem:[%s1160 + $0x38] sm:$0xff]
      %v1169 = vld [vmem:[%s1160 + $0x40] sm:$0xff]
      %v1170 = vld [vmem:[%s1160 + $0x48] sm:$0xff]
      %v1171 = vld [vmem:[%s1160 + $0x50] sm:$0xff]
      %v1172 = vld [vmem:[%s1160 + $0x58] sm:$0xff]
      %v1173 = vld [vmem:[%s1160 + $0x60] sm:$0xff]
      %v1174 = vld [vmem:[%s1160 + $0x68] sm:$0xff]
      %v1175 = vld [vmem:[%s1160 + $0x70] sm:$0xff]
      %v1176 = vld [vmem:[%s1160 + $0x78] sm:$0xff]
      %1177 = vmatprep.subr.mxu0 0.0
      %1178 = vmatpush1.msra.mxu0 %v1161
      %1179 = vmatprep.subr.mxu0 0.0
      %1180 = vmatpush1.msra.mxu0 %v1162
      %1181 = vmatprep.subr.mxu0 0.0
      %1182 = vmatpush1.msra.mxu0 %v1163
      %1183 = vmatprep.subr.mxu0 0.0
      %1184 = vmatpush1.msra.mxu0 %v1164
      %1185 = vmatprep.subr.mxu0 0.0
      %1186 = vmatpush1.msra.mxu0 %v1165
      %1187 = vmatprep.subr.mxu0 0.0
      %1188 = vmatpush1.msra.mxu0 %v1166
      %1189 = vmatprep.subr.mxu0 0.0
      %1190 = vmatpush1.msra.mxu0 %v1167
      %1191 = vmatprep.subr.mxu0 0.0
      %1192 = vmatpush1.msra.mxu0 %v1168
      %1193 = vmatprep.subr.mxu0 0.0
      %1194 = vmatpush1.msra.mxu0 %v1169
      %1195 = vmatprep.subr.mxu0 0.0
      %1196 = vmatpush1.msra.mxu0 %v1170
      %1197 = vmatprep.subr.mxu0 0.0
      %1198 = vmatpush1.msra.mxu0 %v1171
      %1199 = vmatprep.subr.mxu0 0.0
      %1200 = vmatpush1.msra.mxu0 %v1172
      %1201 = vmatprep.subr.mxu0 0.0
      %1202 = vmatpush1.msra.mxu0 %v1173
      %1203 = vmatprep.subr.mxu0 0.0
      %1204 = vmatpush1.msra.mxu0 %v1174
      %1205 = vmatprep.subr.mxu0 0.0
      %1206 = vmatpush1.msra.mxu0 %v1175
      %1207 = vmatprep.subr.mxu0 0.0
      %1208 = vmatpush1.msra.mxu0 %v1176
      %1209 = vmatprep.subr.mxu0 0.0
      %1210 = vmatpush1.msra.mxu0 0.0
      %1211 = vmatprep.subr.mxu0 0.0
      %1212 = vmatpush1.msra.mxu0 0.0
      %1213 = vmatprep.subr.mxu0 0.0
      %1214 = vmatpush1.msra.mxu0 0.0
      %1215 = vmatprep.subr.mxu0 0.0
      %1216 = vmatpush1.msra.mxu0 0.0
      %1217 = vmatprep.subr.mxu0 0.0
      %1218 = vmatpush1.msra.mxu0 0.0
      %1219 = vmatprep.subr.mxu0 0.0
      %1220 = vmatpush1.msra.mxu0 0.0
      %1221 = vmatprep.subr.mxu0 0.0
      %1222 = vmatpush1.msra.mxu0 0.0
      %1223 = vmatprep.subr.mxu0 0.0
      %1224 = vmatpush1.msra.mxu0 0.0
      %1225 = vmatprep.subr.mxu0 0.0
      %1226 = vmatpush1.msra.mxu0 0.0
      %1227 = vmatprep.subr.mxu0 0.0
      %1228 = vmatpush1.msra.mxu0 0.0
      %1229 = vmatprep.subr.mxu0 0.0
      %1230 = vmatpush1.msra.mxu0 0.0
      %1231 = vmatprep.subr.mxu0 0.0
      %1232 = vmatpush1.msra.mxu0 0.0
      %1233 = vmatprep.subr.mxu0 0.0
      %1234 = vmatpush1.msra.mxu0 0.0
      %1235 = vmatprep.subr.mxu0 0.0
      %1236 = vmatpush1.msra.mxu0 0.0
      %1237 = vmatprep.subr.mxu0 0.0
      %1238 = vmatpush1.msra.mxu0 0.0
      %1239 = vmatprep.subr.mxu0 0.0
      %1240 = vmatpush1.msra.mxu0 0.0
      %1241 = vmatprep.mubr.f32.mxu0 0.0
      %1242 = vmatmul.mubr.f32.gmra.mrb[0].mxu0 %v1152
      %v1243 = vpop.f32.mrb[0].mxu0
      %v1244 = vadd.f32 0.0, %v1243
      %v1245 = vpop.f32.mrb[0].mxu0
      %1246 = vmatprep.mubr.f32.mxu0 0.0
      %1247 = vmatmul.mubr.f32.gmra.mrb[0].mxu0 %v1153
      %v1248 = vpop.f32.mrb[0].mxu0
      %v1249 = vadd.f32 0.0, %v1248
      %v1250 = vpop.f32.mrb[0].mxu0
      %1251 = vmatprep.mubr.f32.mxu0 0.0
      %1252 = vmatmul.mubr.f32.gmra.mrb[0].mxu0 %v1154
      %v1253 = vpop.f32.mrb[0].mxu0
      %v1254 = vadd.f32 0.0, %v1253
      %v1255 = vpop.f32.mrb[0].mxu0
      %1256 = vmatprep.mubr.f32.mxu0 0.0
      %1257 = vmatmul.mubr.f32.gmra.mrb[0].mxu0 %v1155
      %v1258 = vpop.f32.mrb[0].mxu0
      %v1259 = vadd.f32 0.0, %v1258
      %v1260 = vpop.f32.mrb[0].mxu0
      %1261 = vmatprep.mubr.f32.mxu0 0.0
      %1262 = vmatmul.mubr.f32.gmra.mrb[0].mxu0 %v1156
      %v1263 = vpop.f32.mrb[0].mxu0
      %v1264 = vadd.f32 0.0, %v1263
      %v1265 = vpop.f32.mrb[0].mxu0
      %1266 = vmatprep.mubr.f32.mxu0 0.0
      %1267 = vmatmul.mubr.f32.gmra.mrb[0].mxu0 %v1157
      %v1268 = vpop.f32.mrb[0].mxu0
      %v1269 = vadd.f32 0.0, %v1268
      %v1270 = vpop.f32.mrb[0].mxu0
      %1271 = vmatprep.mubr.f32.mxu0 0.0
      %1272 = vmatmul.mubr.f32.gmra.mrb[0].mxu0 %v1158
      %v1273 = vpop.f32.mrb[0].mxu0
      %v1274 = vadd.f32 0.0, %v1273
      %v1275 = vpop.f32.mrb[0].mxu0
      %1276 = vmatprep.mubr.f32.mxu0 0.0
      %1277 = vmatmul.mubr.f32.gmra.mrb[0].mxu0 %v1159
      %v1278 = vpop.f32.mrb[0].mxu0
      %v1279 = vadd.f32 0.0, %v1278
      %v1280 = vpop.f32.mrb[0].mxu0
      %1281 = vdwg.mxu0
      %v1282 = vadd.f32 %v1143, %v1244
      %v1283 = vadd.f32 %v1144, %v1249
      %v1284 = vadd.f32 %v1145, %v1254
      %v1285 = vadd.f32 %v1146, %v1259
      %v1286 = vadd.f32 %v1147, %v1264
      %v1287 = vadd.f32 %v1148, %v1269
      %v1288 = vadd.f32 %v1149, %v1274
      %v1289 = vadd.f32 %v1150, %v1279
      %v1290 = vld [vmem:[%s1012 + $0x1] sm:$0xff]
      %v1291 = vld [vmem:[%s1012 + $0x11] sm:$0xff]
      %v1292 = vld [vmem:[%s1012 + $0x21] sm:$0xff]
      %v1293 = vld [vmem:[%s1012 + $0x31] sm:$0xff]
      %v1294 = vld [vmem:[%s1012 + $0x41] sm:$0xff]
      %v1295 = vld [vmem:[%s1012 + $0x51] sm:$0xff]
      %v1296 = vld [vmem:[%s1012 + $0x61] sm:$0xff]
      %v1297 = vld [vmem:[%s1012 + $0x71] sm:$0xff]
      %s1298 = scalar_lea.vmem %s1, 1024
      %v1299 = vld [vmem:[%s1298] sm:$0xff]
      %v1300 = vld [vmem:[%s1298 + $0x8] sm:$0xff]
      %v1301 = vld [vmem:[%s1298 + $0x10] sm:$0xff]
      %v1302 = vld [vmem:[%s1298 + $0x18] sm:$0xff]
      %v1303 = vld [vmem:[%s1298 + $0x20] sm:$0xff]
      %v1304 = vld [vmem:[%s1298 + $0x28] sm:$0xff]
      %v1305 = vld [vmem:[%s1298 + $0x30] sm:$0xff]
      %v1306 = vld [vmem:[%s1298 + $0x38] sm:$0xff]
      %v1307 = vld [vmem:[%s1298 + $0x40] sm:$0xff]
      %v1308 = vld [vmem:[%s1298 + $0x48] sm:$0xff]
      %v1309 = vld [vmem:[%s1298 + $0x50] sm:$0xff]
      %v1310 = vld [vmem:[%s1298 + $0x58] sm:$0xff]
      %v1311 = vld [vmem:[%s1298 + $0x60] sm:$0xff]
      %v1312 = vld [vmem:[%s1298 + $0x68] sm:$0xff]
      %v1313 = vld [vmem:[%s1298 + $0x70] sm:$0xff]
      %v1314 = vld [vmem:[%s1298 + $0x78] sm:$0xff]
      %1315 = vmatprep.subr.mxu0 0.0
      %1316 = vmatpush1.msra.mxu0 %v1299
      %1317 = vmatprep.subr.mxu0 0.0
      %1318 = vmatpush1.msra.mxu0 %v1300
      %1319 = vmatprep.subr.mxu0 0.0
      %1320 = vmatpush1.msra.mxu0 %v1301
      %1321 = vmatprep.subr.mxu0 0.0
      %1322 = vmatpush1.msra.mxu0 %v1302
      %1323 = vmatprep.subr.mxu0 0.0
      %1324 = vmatpush1.msra.mxu0 %v1303
      %1325 = vmatprep.subr.mxu0 0.0
      %1326 = vmatpush1.msra.mxu0 %v1304
      %1327 = vmatprep.subr.mxu0 0.0
      %1328 = vmatpush1.msra.mxu0 %v1305
      %1329 = vmatprep.subr.mxu0 0.0
      %1330 = vmatpush1.msra.mxu0 %v1306
      %1331 = vmatprep.subr.mxu0 0.0
      %1332 = vmatpush1.msra.mxu0 %v1307
      %1333 = vmatprep.subr.mxu0 0.0
      %1334 = vmatpush1.msra.mxu0 %v1308
      %1335 = vmatprep.subr.mxu0 0.0
      %1336 = vmatpush1.msra.mxu0 %v1309
      %1337 = vmatprep.subr.mxu0 0.0
      %1338 = vmatpush1.msra.mxu0 %v1310
      %1339 = vmatprep.subr.mxu0 0.0
      %1340 = vmatpush1.msra.mxu0 %v1311
      %1341 = vmatprep.subr.mxu0 0.0
      %1342 = vmatpush1.msra.mxu0 %v1312
      %1343 = vmatprep.subr.mxu0 0.0
      %1344 = vmatpush1.msra.mxu0 %v1313
      %1345 = vmatprep.subr.mxu0 0.0
      %1346 = vmatpush1.msra.mxu0 %v1314
      %1347 = vmatprep.subr.mxu0 0.0
      %1348 = vmatpush1.msra.mxu0 0.0
      %1349 = vmatprep.subr.mxu0 0.0
      %1350 = vmatpush1.msra.mxu0 0.0
      %1351 = vmatprep.subr.mxu0 0.0
      %1352 = vmatpush1.msra.mxu0 0.0
      %1353 = vmatprep.subr.mxu0 0.0
      %1354 = vmatpush1.msra.mxu0 0.0
      %1355 = vmatprep.subr.mxu0 0.0
      %1356 = vmatpush1.msra.mxu0 0.0
      %1357 = vmatprep.subr.mxu0 0.0
      %1358 = vmatpush1.msra.mxu0 0.0
      %1359 = vmatprep.subr.mxu0 0.0
      %1360 = vmatpush1.msra.mxu0 0.0
      %1361 = vmatprep.subr.mxu0 0.0
      %1362 = vmatpush1.msra.mxu0 0.0
      %1363 = vmatprep.subr.mxu0 0.0
      %1364 = vmatpush1.msra.mxu0 0.0
      %1365 = vmatprep.subr.mxu0 0.0
      %1366 = vmatpush1.msra.mxu0 0.0
      %1367 = vmatprep.subr.mxu0 0.0
      %1368 = vmatpush1.msra.mxu0 0.0
      %1369 = vmatprep.subr.mxu0 0.0
      %1370 = vmatpush1.msra.mxu0 0.0
      %1371 = vmatprep.subr.mxu0 0.0
      %1372 = vmatpush1.msra.mxu0 0.0
      %1373 = vmatprep.subr.mxu0 0.0
      %1374 = vmatpush1.msra.mxu0 0.0
      %1375 = vmatprep.subr.mxu0 0.0
      %1376 = vmatpush1.msra.mxu0 0.0
      %1377 = vmatprep.subr.mxu0 0.0
      %1378 = vmatpush1.msra.mxu0 0.0
      %1379 = vmatprep.mubr.f32.mxu0 0.0
      %1380 = vmatmul.mubr.f32.gmra.mrb[0].mxu0 %v1290
      %v1381 = vpop.f32.mrb[0].mxu0
      %v1382 = vadd.f32 0.0, %v1381
      %v1383 = vpop.f32.mrb[0].mxu0
      %1384 = vmatprep.mubr.f32.mxu0 0.0
      %1385 = vmatmul.mubr.f32.gmra.mrb[0].mxu0 %v1291
      %v1386 = vpop.f32.mrb[0].mxu0
      %v1387 = vadd.f32 0.0, %v1386
      %v1388 = vpop.f32.mrb[0].mxu0
      %1389 = vmatprep.mubr.f32.mxu0 0.0
      %1390 = vmatmul.mubr.f32.gmra.mrb[0].mxu0 %v1292
      %v1391 = vpop.f32.mrb[0].mxu0
      %v1392 = vadd.f32 0.0, %v1391
      %v1393 = vpop.f32.mrb[0].mxu0
      %1394 = vmatprep.mubr.f32.mxu0 0.0
      %1395 = vmatmul.mubr.f32.gmra.mrb[0].mxu0 %v1293
      %v1396 = vpop.f32.mrb[0].mxu0
      %v1397 = vadd.f32 0.0, %v1396
      %v1398 = vpop.f32.mrb[0].mxu0
      %1399 = vmatprep.mubr.f32.mxu0 0.0
      %1400 = vmatmul.mubr.f32.gmra.mrb[0].mxu0 %v1294
      %v1401 = vpop.f32.mrb[0].mxu0
      %v1402 = vadd.f32 0.0, %v1401
      %v1403 = vpop.f32.mrb[0].mxu0
      %1404 = vmatprep.mubr.f32.mxu0 0.0
      %1405 = vmatmul.mubr.f32.gmra.mrb[0].mxu0 %v1295
      %v1406 = vpop.f32.mrb[0].mxu0
      %v1407 = vadd.f32 0.0, %v1406
      %v1408 = vpop.f32.mrb[0].mxu0
      %1409 = vmatprep.mubr.f32.mxu0 0.0
      %1410 = vmatmul.mubr.f32.gmra.mrb[0].mxu0 %v1296
      %v1411 = vpop.f32.mrb[0].mxu0
      %v1412 = vadd.f32 0.0, %v1411
      %v1413 = vpop.f32.mrb[0].mxu0
      %1414 = vmatprep.mubr.f32.mxu0 0.0
      %1415 = vmatmul.mubr.f32.gmra.mrb[0].mxu0 %v1297
      %v1416 = vpop.f32.mrb[0].mxu0
      %v1417 = vadd.f32 0.0, %v1416
      %v1418 = vpop.f32.mrb[0].mxu0
      %1419 = vdwg.mxu0
      %v1420 = vadd.f32 %v1282, %v1382
      %v1421 = vadd.f32 %v1283, %v1387
      %v1422 = vadd.f32 %v1284, %v1392
      %v1423 = vadd.f32 %v1285, %v1397
      %v1424 = vadd.f32 %v1286, %v1402
      %v1425 = vadd.f32 %v1287, %v1407
      %v1426 = vadd.f32 %v1288, %v1412
      %v1427 = vadd.f32 %v1289, %v1417
      %v1428 = vld [vmem:[%s2] sm:$0x1]
      %v1430 = vlaneseq
      %v1431 = vshrl.u32 %v1430, 7
      %v1432 = vsub.s32 0, %v1431
      %v1433 = vrot.slane %v1428, %v1432
      %v1435 = vmul.f32 %v1420, %v1433
      %v1436 = vmul.f32 %v1421, %v1433
      %v1437 = vmul.f32 %v1422, %v1433
      %v1438 = vmul.f32 %v1423, %v1433
      %v1439 = vmul.f32 %v1424, %v1433
      %v1440 = vmul.f32 %v1425, %v1433
      %v1441 = vmul.f32 %v1426, %v1433
      %v1442 = vmul.f32 %v1427, %v1433
      %v1443 = vld [vmem:[%s3] sm:$0x1]
      %v1445 = vlaneseq
      %v1446 = vshrl.u32 %v1445, 7
      %v1447 = vsub.s32 0, %v1446
      %v1448 = vrot.slane %v1443, %v1447
      %v1450 = vadd.f32 %v1435, %v1448
      %v1451 = vadd.f32 %v1436, %v1448
      %v1452 = vadd.f32 %v1437, %v1448
      %v1453 = vadd.f32 %v1438, %v1448
      %v1454 = vadd.f32 %v1439, %v1448
      %v1455 = vadd.f32 %v1440, %v1448
      %v1456 = vadd.f32 %v1441, %v1448
      %v1457 = vadd.f32 %v1442, %v1448
      %v1458 = vmax.f32 %v1450, 0.0
      %v1459 = vmax.f32 %v1451, 0.0
      %v1460 = vmax.f32 %v1452, 0.0
      %v1461 = vmax.f32 %v1453, 0.0
      %v1462 = vmax.f32 %v1454, 0.0
      %v1463 = vmax.f32 %v1455, 0.0
      %v1464 = vmax.f32 %v1456, 0.0
      %v1465 = vmax.f32 %v1457, 0.0
      %1466 = vst [vmem:[%s197] sm:$0xff] %v1458
      %1467 = vst [vmem:[%s197 + $0x8] sm:$0xff] %v1459
      %1468 = vst [vmem:[%s197 + $0x10] sm:$0xff] %v1460
      %1469 = vst [vmem:[%s197 + $0x18] sm:$0xff] %v1461
      %1470 = vst [vmem:[%s197 + $0x20] sm:$0xff] %v1462
      %1471 = vst [vmem:[%s197 + $0x28] sm:$0xff] %v1463
      %1472 = vst [vmem:[%s197 + $0x30] sm:$0xff] %v1464
      %1473 = vst [vmem:[%s197 + $0x38] sm:$0xff] %v1465
      %p1474 = scmp.lt.s32.totalorder %s15, 1
      %s1475 = scalar_select %p1474, %s15, 1
      %s1476 = smul.addr %s1475, 8
      %s1477 = smul.addr %s1476, 8
      %s1478 = scalar_lea.vmem %s4, %s1477
      // Predicated region
      $region37: #{bottleneck_pallas.5} parent=35 // pred_check
        %p1479 = pneg %p122
      $region38: #{bottleneck_pallas.5} parent=35 // pred_check_branch
        %1481 = sbr.rel (%p1479) target = $region40
      $region39: #{bottleneck_pallas.5} parent=35 // pred_region
        _
      $region40: #{bottleneck_pallas.5} parent=35 // pred_fallthru
        _
    $region36: #{bottleneck_pallas.5} parent=5 // pred_fallthru
      _
    %p1482 = scmp.le.s32.totalorder 2, %s10
    // Predicated region
    $region41: #{bottleneck_pallas.5} parent=5 // pred_check
      %p1483 = pneg %p1482
    $region42: #{bottleneck_pallas.5} parent=5 // pred_check_branch
      %1485 = sbr.rel (%p1483) target = $region44
    $region43: #{bottleneck_pallas.5} parent=5 // pred_region
      %s1486 = ssub.s32 %s10, 2
      // Predicated region
      $region45: #{bottleneck_pallas.5} parent=43 // pred_check
        %p1487 = pneg %p128
      $region46: #{bottleneck_pallas.5} parent=43 // pred_check_branch
        %1489 = sbr.rel (%p1487) target = $region48
      $region47: #{bottleneck_pallas.5} parent=43 // pred_region
        %p1490 = scmp.lt.s32.totalorder %s16, 1
        %s1491 = scalar_select %p1490, %s16, 1
        %s1492 = smul.addr %s1491, 8
        %s1493 = smul.addr %s1492, 8
        %s1494 = scalar_lea.vmem %s4, %s1493
      $region48: #{bottleneck_pallas.5} parent=43 // pred_fallthru
        _
    $region44: #{bottleneck_pallas.5} parent=5 // pred_fallthru
      _
  $region6: #{bottleneck_pallas.5} parent=0 // loop_footer
    %s14 = sadd.s32 1, %s10
  $region7: #{bottleneck_pallas.5} parent=0 // loop_footer_branch
    %9 = sbr.rel target = $region3
  $region8: #{bottleneck_pallas.5} parent=0 // loop_exit
    _

// kernel: bottleneck_pallas.6
$region0: #{bottleneck_pallas.6}
  #allocation0 [shape = 'u32[]', space=smem, size = 0x4, offset = 0x4, fixed_abs, tag = 'smem constant byte address 0x4 - core index']
  #allocation1 [shape = 'u32[144,128]{1,0:T(1,128)}', space=vmem, size = 0x12000, scoped, tag = 'internal scratch']
  #allocation2 [shape = 'f32[128,128]{1,0:T(8,128)}', space=vmem, size = 0x10000, scoped, tag = 'scratch operand']
  %s0 = inlined_call_operand.vmem [shape: f32[128,128], index: 0, kind: input, shape index: {}]
  %s1 = inlined_call_operand.vmem [shape: f32[128,128], index: 1, kind: input, shape index: {}]
  %s2 = inlined_call_operand.vmem [shape: f32[1,128], index: 2, kind: input, shape index: {}]
  %s3 = inlined_call_operand.vmem [shape: f32[1,128], index: 3, kind: input, shape index: {}]
  %s4 = inlined_call_operand.vmem [shape: f32[128,128], index: 4, kind: output, shape index: {}]
  %s5 = sld [smem:[#allocation0]]
  $region34: #{bottleneck_pallas.6} parent=0
    _
  %s7 = ssub.s32 1, %s5
  %s8 = scalar_select 0, %s7, %s5
  // Predicated region
  $region2: #{bottleneck_pallas.6} parent=0 // pred_check
    _
  $region3: #{bottleneck_pallas.6} parent=0 // pred_check_branch
    %10 = sbr.rel (0) target = $region5
  $region4: #{bottleneck_pallas.6} parent=0 // pred_region
    _
  $region5: #{bottleneck_pallas.6} parent=0 // pred_fallthru
    _
  // Predicated region
  $region6: #{bottleneck_pallas.6} parent=0 // pred_check
    _
  $region7: #{bottleneck_pallas.6} parent=0 // pred_check_branch
    %12 = sbr.rel (0) target = $region9
  $region8: #{bottleneck_pallas.6} parent=0 // pred_region
    _
  $region9: #{bottleneck_pallas.6} parent=0 // pred_fallthru
    _
  // Predicated region
  $region10: #{bottleneck_pallas.6} parent=0 // pred_check
    _
  $region11: #{bottleneck_pallas.6} parent=0 // pred_check_branch
    %14 = sbr.rel (0) target = $region13
  $region12: #{bottleneck_pallas.6} parent=0 // pred_region
    _
  $region13: #{bottleneck_pallas.6} parent=0 // pred_fallthru
    _
  // Predicated region
  $region14: #{bottleneck_pallas.6} parent=0 // pred_check
    _
  $region15: #{bottleneck_pallas.6} parent=0 // pred_check_branch
    %16 = sbr.rel (0) target = $region17
  $region16: #{bottleneck_pallas.6} parent=0 // pred_region
    _
  $region17: #{bottleneck_pallas.6} parent=0 // pred_fallthru
    _
  %p17 = scmp.eq.s32.totalorder 0, 0
  // Predicated region
  $region18: #{bottleneck_pallas.6} parent=0 // pred_check
    %p18 = pneg %p17
  $region19: #{bottleneck_pallas.6} parent=0 // pred_check_branch
    %20 = sbr.rel (%p18) target = $region21
  $region20: #{bottleneck_pallas.6} parent=0 // pred_region
    %21 = vst [vmem:[#allocation2] sm:$0xff] 0.0
    %22 = vst [vmem:[#allocation2 + $0x8] sm:$0xff] 0.0
    %23 = vst [vmem:[#allocation2 + $0x10] sm:$0xff] 0.0
    %24 = vst [vmem:[#allocation2 + $0x18] sm:$0xff] 0.0
    %25 = vst [vmem:[#allocation2 + $0x20] sm:$0xff] 0.0
    %26 = vst [vmem:[#allocation2 + $0x28] sm:$0xff] 0.0
    %27 = vst [vmem:[#allocation2 + $0x30] sm:$0xff] 0.0
    %28 = vst [vmem:[#allocation2 + $0x38] sm:$0xff] 0.0
    %29 = vst [vmem:[#allocation2 + $0x40] sm:$0xff] 0.0
    %30 = vst [vmem:[#allocation2 + $0x48] sm:$0xff] 0.0
    %31 = vst [vmem:[#allocation2 + $0x50] sm:$0xff] 0.0
    %32 = vst [vmem:[#allocation2 + $0x58] sm:$0xff] 0.0
    %33 = vst [vmem:[#allocation2 + $0x60] sm:$0xff] 0.0
    %34 = vst [vmem:[#allocation2 + $0x68] sm:$0xff] 0.0
    %35 = vst [vmem:[#allocation2 + $0x70] sm:$0xff] 0.0
    %36 = vst [vmem:[#allocation2 + $0x78] sm:$0xff] 0.0
  $region21: #{bottleneck_pallas.6} parent=0 // pred_fallthru
    _
  %v37 = vld [vmem:[#allocation2] sm:$0xff]
  %v38 = vld [vmem:[#allocation2 + $0x8] sm:$0xff]
  %v39 = vld [vmem:[#allocation2 + $0x10] sm:$0xff]
  %v40 = vld [vmem:[#allocation2 + $0x18] sm:$0xff]
  %v41 = vld [vmem:[#allocation2 + $0x20] sm:$0xff]
  %v42 = vld [vmem:[#allocation2 + $0x28] sm:$0xff]
  %v43 = vld [vmem:[#allocation2 + $0x30] sm:$0xff]
  %v44 = vld [vmem:[#allocation2 + $0x38] sm:$0xff]
  %v45 = vld [vmem:[#allocation2 + $0x40] sm:$0xff]
  %v46 = vld [vmem:[#allocation2 + $0x48] sm:$0xff]
  %v47 = vld [vmem:[#allocation2 + $0x50] sm:$0xff]
  %v48 = vld [vmem:[#allocation2 + $0x58] sm:$0xff]
  %v49 = vld [vmem:[#allocation2 + $0x60] sm:$0xff]
  %v50 = vld [vmem:[#allocation2 + $0x68] sm:$0xff]
  %v51 = vld [vmem:[#allocation2 + $0x70] sm:$0xff]
  %v52 = vld [vmem:[#allocation2 + $0x78] sm:$0xff]
  %v53 = vld [vmem:[%s0] sm:$0xff]
  %v54 = vld [vmem:[%s0 + $0x8] sm:$0xff]
  %v55 = vld [vmem:[%s0 + $0x10] sm:$0xff]
  %v56 = vld [vmem:[%s0 + $0x18] sm:$0xff]
  %v57 = vld [vmem:[%s0 + $0x20] sm:$0xff]
  %v58 = vld [vmem:[%s0 + $0x28] sm:$0xff]
  %v59 = vld [vmem:[%s0 + $0x30] sm:$0xff]
  %v60 = vld [vmem:[%s0 + $0x38] sm:$0xff]
  %v61 = vld [vmem:[%s0 + $0x40] sm:$0xff]
  %v62 = vld [vmem:[%s0 + $0x48] sm:$0xff]
  %v63 = vld [vmem:[%s0 + $0x50] sm:$0xff]
  %v64 = vld [vmem:[%s0 + $0x58] sm:$0xff]
  %v65 = vld [vmem:[%s0 + $0x60] sm:$0xff]
  %v66 = vld [vmem:[%s0 + $0x68] sm:$0xff]
  %v67 = vld [vmem:[%s0 + $0x70] sm:$0xff]
  %v68 = vld [vmem:[%s0 + $0x78] sm:$0xff]
  %v69 = vld [vmem:[%s1] sm:$0xff]
  %v70 = vld [vmem:[%s1 + $0x8] sm:$0xff]
  %v71 = vld [vmem:[%s1 + $0x10] sm:$0xff]
  %v72 = vld [vmem:[%s1 + $0x18] sm:$0xff]
  %v73 = vld [vmem:[%s1 + $0x20] sm:$0xff]
  %v74 = vld [vmem:[%s1 + $0x28] sm:$0xff]
  %v75 = vld [vmem:[%s1 + $0x30] sm:$0xff]
  %v76 = vld [vmem:[%s1 + $0x38] sm:$0xff]
  %v77 = vld [vmem:[%s1 + $0x40] sm:$0xff]
  %v78 = vld [vmem:[%s1 + $0x48] sm:$0xff]
  %v79 = vld [vmem:[%s1 + $0x50] sm:$0xff]
  %v80 = vld [vmem:[%s1 + $0x58] sm:$0xff]
  %v81 = vld [vmem:[%s1 + $0x60] sm:$0xff]
  %v82 = vld [vmem:[%s1 + $0x68] sm:$0xff]
  %v83 = vld [vmem:[%s1 + $0x70] sm:$0xff]
  %v84 = vld [vmem:[%s1 + $0x78] sm:$0xff]
  %85 = vmatprep.subr.mxu0 0.0
  %86 = vmatpush1.msra.mxu0 %v69
  %87 = vmatprep.subr.mxu0 0.0
  %88 = vmatpush1.msra.mxu0 %v70
  %89 = vmatprep.subr.mxu0 0.0
  %90 = vmatpush1.msra.mxu0 %v71
  %91 = vmatprep.subr.mxu0 0.0
  %92 = vmatpush1.msra.mxu0 %v72
  %93 = vmatprep.subr.mxu0 0.0
  %94 = vmatpush1.msra.mxu0 %v73
  %95 = vmatprep.subr.mxu0 0.0
  %96 = vmatpush1.msra.mxu0 %v74
  %97 = vmatprep.subr.mxu0 0.0
  %98 = vmatpush1.msra.mxu0 %v75
  %99 = vmatprep.subr.mxu0 0.0
  %100 = vmatpush1.msra.mxu0 %v76
  %101 = vmatprep.subr.mxu0 0.0
  %102 = vmatpush1.msra.mxu0 %v77
  %103 = vmatprep.subr.mxu0 0.0
  %104 = vmatpush1.msra.mxu0 %v78
  %105 = vmatprep.subr.mxu0 0.0
  %106 = vmatpush1.msra.mxu0 %v79
  %107 = vmatprep.subr.mxu0 0.0
  %108 = vmatpush1.msra.mxu0 %v80
  %109 = vmatprep.subr.mxu0 0.0
  %110 = vmatpush1.msra.mxu0 %v81
  %111 = vmatprep.subr.mxu0 0.0
  %112 = vmatpush1.msra.mxu0 %v82
  %113 = vmatprep.subr.mxu0 0.0
  %114 = vmatpush1.msra.mxu0 %v83
  %115 = vmatprep.subr.mxu0 0.0
  %116 = vmatpush1.msra.mxu0 %v84
  %117 = vmatprep.subr.mxu0 0.0
  %118 = vmatpush1.msra.mxu0 0.0
  %119 = vmatprep.subr.mxu0 0.0
  %120 = vmatpush1.msra.mxu0 0.0
  %121 = vmatprep.subr.mxu0 0.0
  %122 = vmatpush1.msra.mxu0 0.0
  %123 = vmatprep.subr.mxu0 0.0
  %124 = vmatpush1.msra.mxu0 0.0
  %125 = vmatprep.subr.mxu0 0.0
  %126 = vmatpush1.msra.mxu0 0.0
  %127 = vmatprep.subr.mxu0 0.0
  %128 = vmatpush1.msra.mxu0 0.0
  %129 = vmatprep.subr.mxu0 0.0
  %130 = vmatpush1.msra.mxu0 0.0
  %131 = vmatprep.subr.mxu0 0.0
  %132 = vmatpush1.msra.mxu0 0.0
  %133 = vmatprep.subr.mxu0 0.0
  %134 = vmatpush1.msra.mxu0 0.0
  %135 = vmatprep.subr.mxu0 0.0
  %136 = vmatpush1.msra.mxu0 0.0
  %137 = vmatprep.subr.mxu0 0.0
  %138 = vmatpush1.msra.mxu0 0.0
  %139 = vmatprep.subr.mxu0 0.0
  %140 = vmatpush1.msra.mxu0 0.0
  %141 = vmatprep.subr.mxu0 0.0
  %142 = vmatpush1.msra.mxu0 0.0
  %143 = vmatprep.subr.mxu0 0.0
  %144 = vmatpush1.msra.mxu0 0.0
  %145 = vmatprep.subr.mxu0 0.0
  %146 = vmatpush1.msra.mxu0 0.0
  %147 = vmatprep.subr.mxu0 0.0
  %148 = vmatpush1.msra.mxu0 0.0
  %149 = vmatprep.mubr.f32.mxu0 0.0
  %150 = vmatmul.mubr.f32.gmra.mrb[0].mxu0 %v53
  %v151 = vpop.f32.mrb[0].mxu0
  %v152 = vadd.f32 0.0, %v151
  %v153 = vpop.f32.mrb[0].mxu0
  %154 = vmatprep.mubr.f32.mxu0 0.0
  %155 = vmatmul.mubr.f32.gmra.mrb[0].mxu0 %v54
  %v156 = vpop.f32.mrb[0].mxu0
  %v157 = vadd.f32 0.0, %v156
  %v158 = vpop.f32.mrb[0].mxu0
  %159 = vmatprep.mubr.f32.mxu0 0.0
  %160 = vmatmul.mubr.f32.gmra.mrb[0].mxu0 %v55
  %v161 = vpop.f32.mrb[0].mxu0
  %v162 = vadd.f32 0.0, %v161
  %v163 = vpop.f32.mrb[0].mxu0
  %164 = vmatprep.mubr.f32.mxu0 0.0
  %165 = vmatmul.mubr.f32.gmra.mrb[0].mxu0 %v56
  %v166 = vpop.f32.mrb[0].mxu0
  %v167 = vadd.f32 0.0, %v166
  %v168 = vpop.f32.mrb[0].mxu0
  %169 = vmatprep.mubr.f32.mxu0 0.0
  %170 = vmatmul.mubr.f32.gmra.mrb[0].mxu0 %v57
  %v171 = vpop.f32.mrb[0].mxu0
  %v172 = vadd.f32 0.0, %v171
  %v173 = vpop.f32.mrb[0].mxu0
  %174 = vmatprep.mubr.f32.mxu0 0.0
  %175 = vmatmul.mubr.f32.gmra.mrb[0].mxu0 %v58
  %v176 = vpop.f32.mrb[0].mxu0
  %v177 = vadd.f32 0.0, %v176
  %v178 = vpop.f32.mrb[0].mxu0
  %179 = vmatprep.mubr.f32.mxu0 0.0
  %180 = vmatmul.mubr.f32.gmra.mrb[0].mxu0 %v59
  %v181 = vpop.f32.mrb[0].mxu0
  %v182 = vadd.f32 0.0, %v181
  %v183 = vpop.f32.mrb[0].mxu0
  %184 = vmatprep.mubr.f32.mxu0 0.0
  %185 = vmatmul.mubr.f32.gmra.mrb[0].mxu0 %v60
  %v186 = vpop.f32.mrb[0].mxu0
  %v187 = vadd.f32 0.0, %v186
  %v188 = vpop.f32.mrb[0].mxu0
  %189 = vmatprep.mubr.f32.mxu0 0.0
  %190 = vmatmul.mubr.f32.gmra.mrb[0].mxu0 %v61
  %v191 = vpop.f32.mrb[0].mxu0
  %v192 = vadd.f32 0.0, %v191
  %v193 = vpop.f32.mrb[0].mxu0
  %194 = vmatprep.mubr.f32.mxu0 0.0
  %195 = vmatmul.mubr.f32.gmra.mrb[0].mxu0 %v62
  %v196 = vpop.f32.mrb[0].mxu0
  %v197 = vadd.f32 0.0, %v196
  %v198 = vpop.f32.mrb[0].mxu0
  %199 = vmatprep.mubr.f32.mxu0 0.0
  %200 = vmatmul.mubr.f32.gmra.mrb[0].mxu0 %v63
  %v201 = vpop.f32.mrb[0].mxu0
  %v202 = vadd.f32 0.0, %v201
  %v203 = vpop.f32.mrb[0].mxu0
  %204 = vmatprep.mubr.f32.mxu0 0.0
  %205 = vmatmul.mubr.f32.gmra.mrb[0].mxu0 %v64
  %v206 = vpop.f32.mrb[0].mxu0
  %v207 = vadd.f32 0.0, %v206
  %v208 = vpop.f32.mrb[0].mxu0
  %209 = vmatprep.mubr.f32.mxu0 0.0
  %210 = vmatmul.mubr.f32.gmra.mrb[0].mxu0 %v65
  %v211 = vpop.f32.mrb[0].mxu0
  %v212 = vadd.f32 0.0, %v211
  %v213 = vpop.f32.mrb[0].mxu0
  %214 = vmatprep.mubr.f32.mxu0 0.0
  %215 = vmatmul.mubr.f32.gmra.mrb[0].mxu0 %v66
  %v216 = vpop.f32.mrb[0].mxu0
  %v217 = vadd.f32 0.0, %v216
  %v218 = vpop.f32.mrb[0].mxu0
  %219 = vmatprep.mubr.f32.mxu0 0.0
  %220 = vmatmul.mubr.f32.gmra.mrb[0].mxu0 %v67
  %v221 = vpop.f32.mrb[0].mxu0
  %v222 = vadd.f32 0.0, %v221
  %v223 = vpop.f32.mrb[0].mxu0
  %224 = vmatprep.mubr.f32.mxu0 0.0
  %225 = vmatmul.mubr.f32.gmra.mrb[0].mxu0 %v68
  %v226 = vpop.f32.mrb[0].mxu0
  %v227 = vadd.f32 0.0, %v226
  %v228 = vpop.f32.mrb[0].mxu0
  %229 = vdwg.mxu0
  %v230 = vadd.f32 %v37, %v152
  %v231 = vadd.f32 %v38, %v157
  %v232 = vadd.f32 %v39, %v162
  %v233 = vadd.f32 %v40, %v167
  %v234 = vadd.f32 %v41, %v172
  %v235 = vadd.f32 %v42, %v177
  %v236 = vadd.f32 %v43, %v182
  %v237 = vadd.f32 %v44, %v187
  %v238 = vadd.f32 %v45, %v192
  %v239 = vadd.f32 %v46, %v197
  %v240 = vadd.f32 %v47, %v202
  %v241 = vadd.f32 %v48, %v207
  %v242 = vadd.f32 %v49, %v212
  %v243 = vadd.f32 %v50, %v217
  %v244 = vadd.f32 %v51, %v222
  %v245 = vadd.f32 %v52, %v227
  %246 = vst [vmem:[#allocation2] sm:$0xff] %v230
  %247 = vst [vmem:[#allocation2 + $0x8] sm:$0xff] %v231
  %248 = vst [vmem:[#allocation2 + $0x10] sm:$0xff] %v232
  %249 = vst [vmem:[#allocation2 + $0x18] sm:$0xff] %v233
  %250 = vst [vmem:[#allocation2 + $0x20] sm:$0xff] %v234
  %251 = vst [vmem:[#allocation2 + $0x28] sm:$0xff] %v235
  %252 = vst [vmem:[#allocation2 + $0x30] sm:$0xff] %v236
  %253 = vst [vmem:[#allocation2 + $0x38] sm:$0xff] %v237
  %254 = vst [vmem:[#allocation2 + $0x40] sm:$0xff] %v238
  %255 = vst [vmem:[#allocation2 + $0x48] sm:$0xff] %v239
  %256 = vst [vmem:[#allocation2 + $0x50] sm:$0xff] %v240
  %257 = vst [vmem:[#allocation2 + $0x58] sm:$0xff] %v241
  %258 = vst [vmem:[#allocation2 + $0x60] sm:$0xff] %v242
  %259 = vst [vmem:[#allocation2 + $0x68] sm:$0xff] %v243
  %260 = vst [vmem:[#allocation2 + $0x70] sm:$0xff] %v244
  %261 = vst [vmem:[#allocation2 + $0x78] sm:$0xff] %v245
  // Predicated region
  $region22: #{bottleneck_pallas.6} parent=0 // pred_check
    %p262 = pneg %p17
  $region23: #{bottleneck_pallas.6} parent=0 // pred_check_branch
    %264 = sbr.rel (%p262) target = $region25
  $region24: #{bottleneck_pallas.6} parent=0 // pred_region
    %v265 = vld [vmem:[#allocation2] sm:$0xff]
    %v266 = vld [vmem:[#allocation2 + $0x8] sm:$0xff]
    %v267 = vld [vmem:[#allocation2 + $0x10] sm:$0xff]
    %v268 = vld [vmem:[#allocation2 + $0x18] sm:$0xff]
    %v269 = vld [vmem:[#allocation2 + $0x20] sm:$0xff]
    %v270 = vld [vmem:[#allocation2 + $0x28] sm:$0xff]
    %v271 = vld [vmem:[#allocation2 + $0x30] sm:$0xff]
    %v272 = vld [vmem:[#allocation2 + $0x38] sm:$0xff]
    %v273 = vld [vmem:[#allocation2 + $0x40] sm:$0xff]
    %v274 = vld [vmem:[#allocation2 + $0x48] sm:$0xff]
    %v275 = vld [vmem:[#allocation2 + $0x50] sm:$0xff]
    %v276 = vld [vmem:[#allocation2 + $0x58] sm:$0xff]
    %v277 = vld [vmem:[#allocation2 + $0x60] sm:$0xff]
    %v278 = vld [vmem:[#allocation2 + $0x68] sm:$0xff]
    %v279 = vld [vmem:[#allocation2 + $0x70] sm:$0xff]
    %v280 = vld [vmem:[#allocation2 + $0x78] sm:$0xff]
    %v281 = vld [vmem:[%s2] sm:$0x1]
    %v283 = vlaneseq
    %v284 = vshrl.u32 %v283, 7
    %v285 = vsub.s32 0, %v284
    %v286 = vrot.slane %v281, %v285
    %v288 = vmul.f32 %v265, %v286
    %v289 = vmul.f32 %v266, %v286
    %v290 = vmul.f32 %v267, %v286
    %v291 = vmul.f32 %v268, %v286
    %v292 = vmul.f32 %v269, %v286
    %v293 = vmul.f32 %v270, %v286
    %v294 = vmul.f32 %v271, %v286
    %v295 = vmul.f32 %v272, %v286
    %v296 = vmul.f32 %v273, %v286
    %v297 = vmul.f32 %v274, %v286
    %v298 = vmul.f32 %v275, %v286
    %v299 = vmul.f32 %v276, %v286
    %v300 = vmul.f32 %v277, %v286
    %v301 = vmul.f32 %v278, %v286
    %v302 = vmul.f32 %v279, %v286
    %v303 = vmul.f32 %v280, %v286
    %v304 = vld [vmem:[%s3] sm:$0x1]
    %v306 = vlaneseq
    %v307 = vshrl.u32 %v306, 7
    %v308 = vsub.s32 0, %v307
    %v309 = vrot.slane %v304, %v308
    %v311 = vadd.f32 %v288, %v309
    %v312 = vadd.f32 %v289, %v309
    %v313 = vadd.f32 %v290, %v309
    %v314 = vadd.f32 %v291, %v309
    %v315 = vadd.f32 %v292, %v309
    %v316 = vadd.f32 %v293, %v309
    %v317 = vadd.f32 %v294, %v309
    %v318 = vadd.f32 %v295, %v309
    %v319 = vadd.f32 %v296, %v309
    %v320 = vadd.f32 %v297, %v309
    %v321 = vadd.f32 %v298, %v309
    %v322 = vadd.f32 %v299, %v309
    %v323 = vadd.f32 %v300, %v309
    %v324 = vadd.f32 %v301, %v309
    %v325 = vadd.f32 %v302, %v309
    %v326 = vadd.f32 %v303, %v309
    %327 = vst [vmem:[%s4] sm:$0xff] %v311
    %328 = vst [vmem:[%s4 + $0x8] sm:$0xff] %v312
    %329 = vst [vmem:[%s4 + $0x10] sm:$0xff] %v313
    %330 = vst [vmem:[%s4 + $0x18] sm:$0xff] %v314
    %331 = vst [vmem:[%s4 + $0x20] sm:$0xff] %v315
    %332 = vst [vmem:[%s4 + $0x28] sm:$0xff] %v316
    %333 = vst [vmem:[%s4 + $0x30] sm:$0xff] %v317
    %334 = vst [vmem:[%s4 + $0x38] sm:$0xff] %v318
    %335 = vst [vmem:[%s4 + $0x40] sm:$0xff] %v319
    %336 = vst [vmem:[%s4 + $0x48] sm:$0xff] %v320
    %337 = vst [vmem:[%s4 + $0x50] sm:$0xff] %v321
    %338 = vst [vmem:[%s4 + $0x58] sm:$0xff] %v322
    %339 = vst [vmem:[%s4 + $0x60] sm:$0xff] %v323
    %340 = vst [vmem:[%s4 + $0x68] sm:$0xff] %v324
    %341 = vst [vmem:[%s4 + $0x70] sm:$0xff] %v325
    %342 = vst [vmem:[%s4 + $0x78] sm:$0xff] %v326
  $region25: #{bottleneck_pallas.6} parent=0 // pred_fallthru
    _
  // Predicated region
  $region26: #{bottleneck_pallas.6} parent=0 // pred_check
    _
  $region27: #{bottleneck_pallas.6} parent=0 // pred_check_branch
    %344 = sbr.rel (0) target = $region29
  $region28: #{bottleneck_pallas.6} parent=0 // pred_region
    _
  $region29: #{bottleneck_pallas.6} parent=0 // pred_fallthru
    _
  // Predicated region
  $region30: #{bottleneck_pallas.6} parent=0 // pred_check
    _
  $region31: #{bottleneck_pallas.6} parent=0 // pred_check_branch
    %346 = sbr.rel (0) target = $region33
  $region32: #{bottleneck_pallas.6} parent=0 // pred_region
    _
  $region33: #{bottleneck_pallas.6} parent=0 // pred_fallthru
    _

// kernel: bottleneck_pallas.7
$region0: #{bottleneck_pallas.7}
  #allocation0 [shape = 'u32[]', space=smem, size = 0x4, offset = 0x4, fixed_abs, tag = 'smem constant byte address 0x4 - core index']
  #allocation1 [shape = 'u32[144,128]{1,0:T(1,128)}', space=vmem, size = 0x12000, scoped, tag = 'internal scratch']
  #allocation2 [shape = 'f32[128,128]{1,0:T(8,128)}', space=vmem, size = 0x10000, scoped, tag = 'scratch operand']
  %s0 = inlined_call_operand.vmem [shape: f32[128,128], index: 0, kind: input, shape index: {}]
  %s1 = inlined_call_operand.vmem [shape: f32[128,128], index: 1, kind: input, shape index: {}]
  %s2 = inlined_call_operand.vmem [shape: f32[1,128], index: 2, kind: input, shape index: {}]
  %s3 = inlined_call_operand.vmem [shape: f32[1,128], index: 3, kind: input, shape index: {}]
  %s4 = inlined_call_operand.vmem [shape: f32[128,128], index: 4, kind: input, shape index: {}]
  %s5 = inlined_call_operand.hbm [shape: f32[128,128], index: 5, kind: output, shape index: {0}]
  %s6 = inlined_call_operand.hbm [shape: f32[128,128], index: 6, kind: output, shape index: {1}]
  %7 = xla_tuple %s5, %s6
  %s8 = sld [smem:[#allocation0]]
  $region46: #{bottleneck_pallas.7} parent=0
    _
  %s10 = ssub.s32 1, %s8
  %s11 = scalar_select 0, %s10, %s8
  $region1: #{bottleneck_pallas.7} parent=0
    #allocation3 [shape = 'u8[65536]{0}', space=vmem, size = 0x10000, scoped, tag = 'output window, operand 0, single buffered']
    #allocation4 [shape = 's32[1]{0}', space=sflag, size = 0x4, scoped, tag = 'scoped memory for bottleneck_pallas.7']
    #allocation5 [shape = 'u8[65536]{0}', space=vmem, size = 0x10000, scoped, tag = 'output window, operand 1, single buffered']
    #allocation6 [shape = 's32[1]{0}', space=sflag, size = 0x4, scoped, tag = 'scoped memory for bottleneck_pallas.7']
    %12 = vsyncpa [#allocation4], 0
    %13 = vsyncpa [#allocation6], 0
    // Predicated region
    $region2: #{bottleneck_pallas.7} parent=1 // pred_check
      _
    $region3: #{bottleneck_pallas.7} parent=1 // pred_check_branch
      %15 = sbr.rel (0) target = $region5
    $region4: #{bottleneck_pallas.7} parent=1 // pred_region
      _
    $region5: #{bottleneck_pallas.7} parent=1 // pred_fallthru
      _
    // Predicated region
    $region6: #{bottleneck_pallas.7} parent=1 // pred_check
      _
    $region7: #{bottleneck_pallas.7} parent=1 // pred_check_branch
      %17 = sbr.rel (0) target = $region9
    $region8: #{bottleneck_pallas.7} parent=1 // pred_region
      _
    $region9: #{bottleneck_pallas.7} parent=1 // pred_fallthru
      _
    // Predicated region
    $region10: #{bottleneck_pallas.7} parent=1 // pred_check
      _
    $region11: #{bottleneck_pallas.7} parent=1 // pred_check_branch
      %19 = sbr.rel (0) target = $region13
    $region12: #{bottleneck_pallas.7} parent=1 // pred_region
      _
    $region13: #{bottleneck_pallas.7} parent=1 // pred_fallthru
      _
    // Predicated region
    $region14: #{bottleneck_pallas.7} parent=1 // pred_check
      _
    $region15: #{bottleneck_pallas.7} parent=1 // pred_check_branch
      %21 = sbr.rel (0) target = $region17
    $region16: #{bottleneck_pallas.7} parent=1 // pred_region
      _
    $region17: #{bottleneck_pallas.7} parent=1 // pred_fallthru
      _
    // Predicated region
    $region18: #{bottleneck_pallas.7} parent=1 // pred_check
      _
    $region19: #{bottleneck_pallas.7} parent=1 // pred_check_branch
      %23 = sbr.rel (0) target = $region21
    $region20: #{bottleneck_pallas.7} parent=1 // pred_region
      _
    $region21: #{bottleneck_pallas.7} parent=1 // pred_fallthru
      _
    %p24 = scmp.eq.s32.totalorder 0, 0
    // Predicated region
    $region22: #{bottleneck_pallas.7} parent=1 // pred_check
      %p25 = pneg %p24
    $region23: #{bottleneck_pallas.7} parent=1 // pred_check_branch
      %27 = sbr.rel (%p25) target = $region25
    $region24: #{bottleneck_pallas.7} parent=1 // pred_region
      %28 = vst [vmem:[#allocation2] sm:$0xff] 0.0
      %29 = vst [vmem:[#allocation2 + $0x8] sm:$0xff] 0.0
      %30 = vst [vmem:[#allocation2 + $0x10] sm:$0xff] 0.0
      %31 = vst [vmem:[#allocation2 + $0x18] sm:$0xff] 0.0
      %32 = vst [vmem:[#allocation2 + $0x20] sm:$0xff] 0.0
      %33 = vst [vmem:[#allocation2 + $0x28] sm:$0xff] 0.0
      %34 = vst [vmem:[#allocation2 + $0x30] sm:$0xff] 0.0
      %35 = vst [vmem:[#allocation2 + $0x38] sm:$0xff] 0.0
      %36 = vst [vmem:[#allocation2 + $0x40] sm:$0xff] 0.0
      %37 = vst [vmem:[#allocation2 + $0x48] sm:$0xff] 0.0
      %38 = vst [vmem:[#allocation2 + $0x50] sm:$0xff] 0.0
      %39 = vst [vmem:[#allocation2 + $0x58] sm:$0xff] 0.0
      %40 = vst [vmem:[#allocation2 + $0x60] sm:$0xff] 0.0
      %41 = vst [vmem:[#allocation2 + $0x68] sm:$0xff] 0.0
      %42 = vst [vmem:[#allocation2 + $0x70] sm:$0xff] 0.0
      %43 = vst [vmem:[#allocation2 + $0x78] sm:$0xff] 0.0
    $region25: #{bottleneck_pallas.7} parent=1 // pred_fallthru
      _
    %v44 = vld [vmem:[#allocation2] sm:$0xff]
    %v45 = vld [vmem:[#allocation2 + $0x8] sm:$0xff]
    %v46 = vld [vmem:[#allocation2 + $0x10] sm:$0xff]
    %v47 = vld [vmem:[#allocation2 + $0x18] sm:$0xff]
    %v48 = vld [vmem:[#allocation2 + $0x20] sm:$0xff]
    %v49 = vld [vmem:[#allocation2 + $0x28] sm:$0xff]
    %v50 = vld [vmem:[#allocation2 + $0x30] sm:$0xff]
    %v51 = vld [vmem:[#allocation2 + $0x38] sm:$0xff]
    %v52 = vld [vmem:[#allocation2 + $0x40] sm:$0xff]
    %v53 = vld [vmem:[#allocation2 + $0x48] sm:$0xff]
    %v54 = vld [vmem:[#allocation2 + $0x50] sm:$0xff]
    %v55 = vld [vmem:[#allocation2 + $0x58] sm:$0xff]
    %v56 = vld [vmem:[#allocation2 + $0x60] sm:$0xff]
    %v57 = vld [vmem:[#allocation2 + $0x68] sm:$0xff]
    %v58 = vld [vmem:[#allocation2 + $0x70] sm:$0xff]
    %v59 = vld [vmem:[#allocation2 + $0x78] sm:$0xff]
    %v60 = vld [vmem:[%s0] sm:$0xff]
    %v61 = vld [vmem:[%s0 + $0x8] sm:$0xff]
    %v62 = vld [vmem:[%s0 + $0x10] sm:$0xff]
    %v63 = vld [vmem:[%s0 + $0x18] sm:$0xff]
    %v64 = vld [vmem:[%s0 + $0x20] sm:$0xff]
    %v65 = vld [vmem:[%s0 + $0x28] sm:$0xff]
    %v66 = vld [vmem:[%s0 + $0x30] sm:$0xff]
    %v67 = vld [vmem:[%s0 + $0x38] sm:$0xff]
    %v68 = vld [vmem:[%s0 + $0x40] sm:$0xff]
    %v69 = vld [vmem:[%s0 + $0x48] sm:$0xff]
    %v70 = vld [vmem:[%s0 + $0x50] sm:$0xff]
    %v71 = vld [vmem:[%s0 + $0x58] sm:$0xff]
    %v72 = vld [vmem:[%s0 + $0x60] sm:$0xff]
    %v73 = vld [vmem:[%s0 + $0x68] sm:$0xff]
    %v74 = vld [vmem:[%s0 + $0x70] sm:$0xff]
    %v75 = vld [vmem:[%s0 + $0x78] sm:$0xff]
    %v76 = vld [vmem:[%s1] sm:$0xff]
    %v77 = vld [vmem:[%s1 + $0x8] sm:$0xff]
    %v78 = vld [vmem:[%s1 + $0x10] sm:$0xff]
    %v79 = vld [vmem:[%s1 + $0x18] sm:$0xff]
    %v80 = vld [vmem:[%s1 + $0x20] sm:$0xff]
    %v81 = vld [vmem:[%s1 + $0x28] sm:$0xff]
    %v82 = vld [vmem:[%s1 + $0x30] sm:$0xff]
    %v83 = vld [vmem:[%s1 + $0x38] sm:$0xff]
    %v84 = vld [vmem:[%s1 + $0x40] sm:$0xff]
    %v85 = vld [vmem:[%s1 + $0x48] sm:$0xff]
    %v86 = vld [vmem:[%s1 + $0x50] sm:$0xff]
    %v87 = vld [vmem:[%s1 + $0x58] sm:$0xff]
    %v88 = vld [vmem:[%s1 + $0x60] sm:$0xff]
    %v89 = vld [vmem:[%s1 + $0x68] sm:$0xff]
    %v90 = vld [vmem:[%s1 + $0x70] sm:$0xff]
    %v91 = vld [vmem:[%s1 + $0x78] sm:$0xff]
    %92 = vmatprep.subr.mxu0 0.0
    %93 = vmatpush1.msra.mxu0 %v76
    %94 = vmatprep.subr.mxu0 0.0
    %95 = vmatpush1.msra.mxu0 %v77
    %96 = vmatprep.subr.mxu0 0.0
    %97 = vmatpush1.msra.mxu0 %v78
    %98 = vmatprep.subr.mxu0 0.0
    %99 = vmatpush1.msra.mxu0 %v79
    %100 = vmatprep.subr.mxu0 0.0
    %101 = vmatpush1.msra.mxu0 %v80
    %102 = vmatprep.subr.mxu0 0.0
    %103 = vmatpush1.msra.mxu0 %v81
    %104 = vmatprep.subr.mxu0 0.0
    %105 = vmatpush1.msra.mxu0 %v82
    %106 = vmatprep.subr.mxu0 0.0
    %107 = vmatpush1.msra.mxu0 %v83
    %108 = vmatprep.subr.mxu0 0.0
    %109 = vmatpush1.msra.mxu0 %v84
    %110 = vmatprep.subr.mxu0 0.0
    %111 = vmatpush1.msra.mxu0 %v85
    %112 = vmatprep.subr.mxu0 0.0
    %113 = vmatpush1.msra.mxu0 %v86
    %114 = vmatprep.subr.mxu0 0.0
    %115 = vmatpush1.msra.mxu0 %v87
    %116 = vmatprep.subr.mxu0 0.0
    %117 = vmatpush1.msra.mxu0 %v88
    %118 = vmatprep.subr.mxu0 0.0
    %119 = vmatpush1.msra.mxu0 %v89
    %120 = vmatprep.subr.mxu0 0.0
    %121 = vmatpush1.msra.mxu0 %v90
    %122 = vmatprep.subr.mxu0 0.0
    %123 = vmatpush1.msra.mxu0 %v91
    %124 = vmatprep.subr.mxu0 0.0
    %125 = vmatpush1.msra.mxu0 0.0
    %126 = vmatprep.subr.mxu0 0.0
    %127 = vmatpush1.msra.mxu0 0.0
    %128 = vmatprep.subr.mxu0 0.0
    %129 = vmatpush1.msra.mxu0 0.0
    %130 = vmatprep.subr.mxu0 0.0
    %131 = vmatpush1.msra.mxu0 0.0
    %132 = vmatprep.subr.mxu0 0.0
    %133 = vmatpush1.msra.mxu0 0.0
    %134 = vmatprep.subr.mxu0 0.0
    %135 = vmatpush1.msra.mxu0 0.0
    %136 = vmatprep.subr.mxu0 0.0
    %137 = vmatpush1.msra.mxu0 0.0
    %138 = vmatprep.subr.mxu0 0.0
    %139 = vmatpush1.msra.mxu0 0.0
    %140 = vmatprep.subr.mxu0 0.0
    %141 = vmatpush1.msra.mxu0 0.0
    %142 = vmatprep.subr.mxu0 0.0
    %143 = vmatpush1.msra.mxu0 0.0
    %144 = vmatprep.subr.mxu0 0.0
    %145 = vmatpush1.msra.mxu0 0.0
    %146 = vmatprep.subr.mxu0 0.0
    %147 = vmatpush1.msra.mxu0 0.0
    %148 = vmatprep.subr.mxu0 0.0
    %149 = vmatpush1.msra.mxu0 0.0
    %150 = vmatprep.subr.mxu0 0.0
    %151 = vmatpush1.msra.mxu0 0.0
    %152 = vmatprep.subr.mxu0 0.0
    %153 = vmatpush1.msra.mxu0 0.0
    %154 = vmatprep.subr.mxu0 0.0
    %155 = vmatpush1.msra.mxu0 0.0
    %156 = vmatprep.mubr.f32.mxu0 0.0
    %157 = vmatmul.mubr.f32.gmra.mrb[0].mxu0 %v60
    %v158 = vpop.f32.mrb[0].mxu0
    %v159 = vadd.f32 0.0, %v158
    %v160 = vpop.f32.mrb[0].mxu0
    %161 = vmatprep.mubr.f32.mxu0 0.0
    %162 = vmatmul.mubr.f32.gmra.mrb[0].mxu0 %v61
    %v163 = vpop.f32.mrb[0].mxu0
    %v164 = vadd.f32 0.0, %v163
    %v165 = vpop.f32.mrb[0].mxu0
    %166 = vmatprep.mubr.f32.mxu0 0.0
    %167 = vmatmul.mubr.f32.gmra.mrb[0].mxu0 %v62
    %v168 = vpop.f32.mrb[0].mxu0
    %v169 = vadd.f32 0.0, %v168
    %v170 = vpop.f32.mrb[0].mxu0
    %171 = vmatprep.mubr.f32.mxu0 0.0
    %172 = vmatmul.mubr.f32.gmra.mrb[0].mxu0 %v63
    %v173 = vpop.f32.mrb[0].mxu0
    %v174 = vadd.f32 0.0, %v173
    %v175 = vpop.f32.mrb[0].mxu0
    %176 = vmatprep.mubr.f32.mxu0 0.0
    %177 = vmatmul.mubr.f32.gmra.mrb[0].mxu0 %v64
    %v178 = vpop.f32.mrb[0].mxu0
    %v179 = vadd.f32 0.0, %v178
    %v180 = vpop.f32.mrb[0].mxu0
    %181 = vmatprep.mubr.f32.mxu0 0.0
    %182 = vmatmul.mubr.f32.gmra.mrb[0].mxu0 %v65
    %v183 = vpop.f32.mrb[0].mxu0
    %v184 = vadd.f32 0.0, %v183
    %v185 = vpop.f32.mrb[0].mxu0
    %186 = vmatprep.mubr.f32.mxu0 0.0
    %187 = vmatmul.mubr.f32.gmra.mrb[0].mxu0 %v66
    %v188 = vpop.f32.mrb[0].mxu0
    %v189 = vadd.f32 0.0, %v188
    %v190 = vpop.f32.mrb[0].mxu0
    %191 = vmatprep.mubr.f32.mxu0 0.0
    %192 = vmatmul.mubr.f32.gmra.mrb[0].mxu0 %v67
    %v193 = vpop.f32.mrb[0].mxu0
    %v194 = vadd.f32 0.0, %v193
    %v195 = vpop.f32.mrb[0].mxu0
    %196 = vmatprep.mubr.f32.mxu0 0.0
    %197 = vmatmul.mubr.f32.gmra.mrb[0].mxu0 %v68
    %v198 = vpop.f32.mrb[0].mxu0
    %v199 = vadd.f32 0.0, %v198
    %v200 = vpop.f32.mrb[0].mxu0
    %201 = vmatprep.mubr.f32.mxu0 0.0
    %202 = vmatmul.mubr.f32.gmra.mrb[0].mxu0 %v69
    %v203 = vpop.f32.mrb[0].mxu0
    %v204 = vadd.f32 0.0, %v203
    %v205 = vpop.f32.mrb[0].mxu0
    %206 = vmatprep.mubr.f32.mxu0 0.0
    %207 = vmatmul.mubr.f32.gmra.mrb[0].mxu0 %v70
    %v208 = vpop.f32.mrb[0].mxu0
    %v209 = vadd.f32 0.0, %v208
    %v210 = vpop.f32.mrb[0].mxu0
    %211 = vmatprep.mubr.f32.mxu0 0.0
    %212 = vmatmul.mubr.f32.gmra.mrb[0].mxu0 %v71
    %v213 = vpop.f32.mrb[0].mxu0
    %v214 = vadd.f32 0.0, %v213
    %v215 = vpop.f32.mrb[0].mxu0
    %216 = vmatprep.mubr.f32.mxu0 0.0
    %217 = vmatmul.mubr.f32.gmra.mrb[0].mxu0 %v72
    %v218 = vpop.f32.mrb[0].mxu0
    %v219 = vadd.f32 0.0, %v218
    %v220 = vpop.f32.mrb[0].mxu0
    %221 = vmatprep.mubr.f32.mxu0 0.0
    %222 = vmatmul.mubr.f32.gmra.mrb[0].mxu0 %v73
    %v223 = vpop.f32.mrb[0].mxu0
    %v224 = vadd.f32 0.0, %v223
    %v225 = vpop.f32.mrb[0].mxu0
    %226 = vmatprep.mubr.f32.mxu0 0.0
    %227 = vmatmul.mubr.f32.gmra.mrb[0].mxu0 %v74
    %v228 = vpop.f32.mrb[0].mxu0
    %v229 = vadd.f32 0.0, %v228
    %v230 = vpop.f32.mrb[0].mxu0
    %231 = vmatprep.mubr.f32.mxu0 0.0
    %232 = vmatmul.mubr.f32.gmra.mrb[0].mxu0 %v75
    %v233 = vpop.f32.mrb[0].mxu0
    %v234 = vadd.f32 0.0, %v233
    %v235 = vpop.f32.mrb[0].mxu0
    %236 = vdwg.mxu0
    %v237 = vadd.f32 %v44, %v159
    %v238 = vadd.f32 %v45, %v164
    %v239 = vadd.f32 %v46, %v169
    %v240 = vadd.f32 %v47, %v174
    %v241 = vadd.f32 %v48, %v179
    %v242 = vadd.f32 %v49, %v184
    %v243 = vadd.f32 %v50, %v189
    %v244 = vadd.f32 %v51, %v194
    %v245 = vadd.f32 %v52, %v199
    %v246 = vadd.f32 %v53, %v204
    %v247 = vadd.f32 %v54, %v209
    %v248 = vadd.f32 %v55, %v214
    %v249 = vadd.f32 %v56, %v219
    %v250 = vadd.f32 %v57, %v224
    %v251 = vadd.f32 %v58, %v229
    %v252 = vadd.f32 %v59, %v234
    %253 = vst [vmem:[#allocation2] sm:$0xff] %v237
    %254 = vst [vmem:[#allocation2 + $0x8] sm:$0xff] %v238
    %255 = vst [vmem:[#allocation2 + $0x10] sm:$0xff] %v239
    %256 = vst [vmem:[#allocation2 + $0x18] sm:$0xff] %v240
    %257 = vst [vmem:[#allocation2 + $0x20] sm:$0xff] %v241
    %258 = vst [vmem:[#allocation2 + $0x28] sm:$0xff] %v242
    %259 = vst [vmem:[#allocation2 + $0x30] sm:$0xff] %v243
    %260 = vst [vmem:[#allocation2 + $0x38] sm:$0xff] %v244
    %261 = vst [vmem:[#allocation2 + $0x40] sm:$0xff] %v245
    %262 = vst [vmem:[#allocation2 + $0x48] sm:$0xff] %v246
    %263 = vst [vmem:[#allocation2 + $0x50] sm:$0xff] %v247
    %264 = vst [vmem:[#allocation2 + $0x58] sm:$0xff] %v248
    %265 = vst [vmem:[#allocation2 + $0x60] sm:$0xff] %v249
    %266 = vst [vmem:[#allocation2 + $0x68] sm:$0xff] %v250
    %267 = vst [vmem:[#allocation2 + $0x70] sm:$0xff] %v251
    %268 = vst [vmem:[#allocation2 + $0x78] sm:$0xff] %v252
    // Predicated region
    $region26: #{bottleneck_pallas.7} parent=1 // pred_check
      %p269 = pneg %p24
    $region27: #{bottleneck_pallas.7} parent=1 // pred_check_branch
      %271 = sbr.rel (%p269) target = $region29
    $region28: #{bottleneck_pallas.7} parent=1 // pred_region
      %v272 = vld [vmem:[#allocation2] sm:$0xff]
      %v273 = vld [vmem:[#allocation2 + $0x8] sm:$0xff]
      %v274 = vld [vmem:[#allocation2 + $0x10] sm:$0xff]
      %v275 = vld [vmem:[#allocation2 + $0x18] sm:$0xff]
      %v276 = vld [vmem:[#allocation2 + $0x20] sm:$0xff]
      %v277 = vld [vmem:[#allocation2 + $0x28] sm:$0xff]
      %v278 = vld [vmem:[#allocation2 + $0x30] sm:$0xff]
      %v279 = vld [vmem:[#allocation2 + $0x38] sm:$0xff]
      %v280 = vld [vmem:[#allocation2 + $0x40] sm:$0xff]
      %v281 = vld [vmem:[#allocation2 + $0x48] sm:$0xff]
      %v282 = vld [vmem:[#allocation2 + $0x50] sm:$0xff]
      %v283 = vld [vmem:[#allocation2 + $0x58] sm:$0xff]
      %v284 = vld [vmem:[#allocation2 + $0x60] sm:$0xff]
      %v285 = vld [vmem:[#allocation2 + $0x68] sm:$0xff]
      %v286 = vld [vmem:[#allocation2 + $0x70] sm:$0xff]
      %v287 = vld [vmem:[#allocation2 + $0x78] sm:$0xff]
      %v288 = vld [vmem:[%s2] sm:$0x1]
      %v290 = vlaneseq
      %v291 = vshrl.u32 %v290, 7
      %v292 = vsub.s32 0, %v291
      %v293 = vrot.slane %v288, %v292
      %v295 = vmul.f32 %v272, %v293
      %v296 = vmul.f32 %v273, %v293
      %v297 = vmul.f32 %v274, %v293
      %v298 = vmul.f32 %v275, %v293
      %v299 = vmul.f32 %v276, %v293
      %v300 = vmul.f32 %v277, %v293
      %v301 = vmul.f32 %v278, %v293
      %v302 = vmul.f32 %v279, %v293
      %v303 = vmul.f32 %v280, %v293
      %v304 = vmul.f32 %v281, %v293
      %v305 = vmul.f32 %v282, %v293
      %v306 = vmul.f32 %v283, %v293
      %v307 = vmul.f32 %v284, %v293
      %v308 = vmul.f32 %v285, %v293
      %v309 = vmul.f32 %v286, %v293
      %v310 = vmul.f32 %v287, %v293
      %v311 = vld [vmem:[%s3] sm:$0x1]
      %v313 = vlaneseq
      %v314 = vshrl.u32 %v313, 7
      %v315 = vsub.s32 0, %v314
      %v316 = vrot.slane %v311, %v315
      %v318 = vadd.f32 %v295, %v316
      %v319 = vadd.f32 %v296, %v316
      %v320 = vadd.f32 %v297, %v316
      %v321 = vadd.f32 %v298, %v316
      %v322 = vadd.f32 %v299, %v316
      %v323 = vadd.f32 %v300, %v316
      %v324 = vadd.f32 %v301, %v316
      %v325 = vadd.f32 %v302, %v316
      %v326 = vadd.f32 %v303, %v316
      %v327 = vadd.f32 %v304, %v316
      %v328 = vadd.f32 %v305, %v316
      %v329 = vadd.f32 %v306, %v316
      %v330 = vadd.f32 %v307, %v316
      %v331 = vadd.f32 %v308, %v316
      %v332 = vadd.f32 %v309, %v316
      %v333 = vadd.f32 %v310, %v316
      %v334 = vld [vmem:[%s4] sm:$0xff]
      %v335 = vld [vmem:[%s4 + $0x8] sm:$0xff]
      %v336 = vld [vmem:[%s4 + $0x10] sm:$0xff]
      %v337 = vld [vmem:[%s4 + $0x18] sm:$0xff]
      %v338 = vld [vmem:[%s4 + $0x20] sm:$0xff]
      %v339 = vld [vmem:[%s4 + $0x28] sm:$0xff]
      %v340 = vld [vmem:[%s4 + $0x30] sm:$0xff]
      %v341 = vld [vmem:[%s4 + $0x38] sm:$0xff]
      %v342 = vld [vmem:[%s4 + $0x40] sm:$0xff]
      %v343 = vld [vmem:[%s4 + $0x48] sm:$0xff]
      %v344 = vld [vmem:[%s4 + $0x50] sm:$0xff]
      %v345 = vld [vmem:[%s4 + $0x58] sm:$0xff]
      %v346 = vld [vmem:[%s4 + $0x60] sm:$0xff]
      %v347 = vld [vmem:[%s4 + $0x68] sm:$0xff]
      %v348 = vld [vmem:[%s4 + $0x70] sm:$0xff]
      %v349 = vld [vmem:[%s4 + $0x78] sm:$0xff]
      %v350 = vadd.f32 %v318, %v334
      %v351 = vadd.f32 %v319, %v335
      %v352 = vadd.f32 %v320, %v336
      %v353 = vadd.f32 %v321, %v337
      %v354 = vadd.f32 %v322, %v338
      %v355 = vadd.f32 %v323, %v339
      %v356 = vadd.f32 %v324, %v340
      %v357 = vadd.f32 %v325, %v341
      %v358 = vadd.f32 %v326, %v342
      %v359 = vadd.f32 %v327, %v343
      %v360 = vadd.f32 %v328, %v344
      %v361 = vadd.f32 %v329, %v345
      %v362 = vadd.f32 %v330, %v346
      %v363 = vadd.f32 %v331, %v347
      %v364 = vadd.f32 %v332, %v348
      %v365 = vadd.f32 %v333, %v349
      %366 = vst [vmem:[#allocation5] sm:$0xff] %v350
      %367 = vst [vmem:[#allocation5 + $0x8] sm:$0xff] %v351
      %368 = vst [vmem:[#allocation5 + $0x10] sm:$0xff] %v352
      %369 = vst [vmem:[#allocation5 + $0x18] sm:$0xff] %v353
      %370 = vst [vmem:[#allocation5 + $0x20] sm:$0xff] %v354
      %371 = vst [vmem:[#allocation5 + $0x28] sm:$0xff] %v355
      %372 = vst [vmem:[#allocation5 + $0x30] sm:$0xff] %v356
      %373 = vst [vmem:[#allocation5 + $0x38] sm:$0xff] %v357
      %374 = vst [vmem:[#allocation5 + $0x40] sm:$0xff] %v358
      %375 = vst [vmem:[#allocation5 + $0x48] sm:$0xff] %v359
      %376 = vst [vmem:[#allocation5 + $0x50] sm:$0xff] %v360
      %377 = vst [vmem:[#allocation5 + $0x58] sm:$0xff] %v361
      %378 = vst [vmem:[#allocation5 + $0x60] sm:$0xff] %v362
      %379 = vst [vmem:[#allocation5 + $0x68] sm:$0xff] %v363
      %380 = vst [vmem:[#allocation5 + $0x70] sm:$0xff] %v364
      %381 = vst [vmem:[#allocation5 + $0x78] sm:$0xff] %v365
      %v382 = vmax.f32 %v350, 0.0
      %v383 = vmax.f32 %v351, 0.0
      %v384 = vmax.f32 %v352, 0.0
      %v385 = vmax.f32 %v353, 0.0
      %v386 = vmax.f32 %v354, 0.0
      %v387 = vmax.f32 %v355, 0.0
      %v388 = vmax.f32 %v356, 0.0
      %v389 = vmax.f32 %v357, 0.0
      %v390 = vmax.f32 %v358, 0.0
      %v391 = vmax.f32 %v359, 0.0
      %v392 = vmax.f32 %v360, 0.0
      %v393 = vmax.f32 %v361, 0.0
      %v394 = vmax.f32 %v362, 0.0
      %v395 = vmax.f32 %v363, 0.0
      %v396 = vmax.f32 %v364, 0.0
      %v397 = vmax.f32 %v365, 0.0
      %398 = vst [vmem:[#allocation3] sm:$0xff] %v382
      %399 = vst [vmem:[#allocation3 + $0x8] sm:$0xff] %v383
      %400 = vst [vmem:[#allocation3 + $0x10] sm:$0xff] %v384
      %401 = vst [vmem:[#allocation3 + $0x18] sm:$0xff] %v385
      %402 = vst [vmem:[#allocation3 + $0x20] sm:$0xff] %v386
      %403 = vst [vmem:[#allocation3 + $0x28] sm:$0xff] %v387
      %404 = vst [vmem:[#allocation3 + $0x30] sm:$0xff] %v388
      %405 = vst [vmem:[#allocation3 + $0x38] sm:$0xff] %v389
      %406 = vst [vmem:[#allocation3 + $0x40] sm:$0xff] %v390
      %407 = vst [vmem:[#allocation3 + $0x48] sm:$0xff] %v391
      %408 = vst [vmem:[#allocation3 + $0x50] sm:$0xff] %v392
      %409 = vst [vmem:[#allocation3 + $0x58] sm:$0xff] %v393
      %410 = vst [vmem:[#allocation3 + $0x60] sm:$0xff] %v394
      %411 = vst [vmem:[#allocation3 + $0x68] sm:$0xff] %v395
      %412 = vst [vmem:[#allocation3 + $0x70] sm:$0xff] %v396
      %413 = vst [vmem:[#allocation3 + $0x78] sm:$0xff] %v397
    $region29: #{bottleneck_pallas.7} parent=1 // pred_fallthru
      _
    // Predicated region
    $region30: #{bottleneck_pallas.7} parent=1 // pred_check
      _
    $region31: #{bottleneck_pallas.7} parent=1 // pred_check_branch
      %415 = sbr.rel (0) target = $region33
    $region32: #{bottleneck_pallas.7} parent=1 // pred_region
      %s417 = ssub.s32 2048, 2048
      %418 = vsyncadd [#allocation4], %s417
      %s419 = sshll.u32 [#allocation3], 4
      %s420 = int_to_ptr.vmem [resolvable:$true] %s419
      %425 = dma.vmem_to_hbm [thread:$0]  %s420, 2048, %s5, [#allocation4], 128, 128, 8
    $region33: #{bottleneck_pallas.7} parent=1 // pred_fallthru
      _
    // Predicated region
    $region34: #{bottleneck_pallas.7} parent=1 // pred_check
      _
    $region35: #{bottleneck_pallas.7} parent=1 // pred_check_branch
      %427 = sbr.rel (0) target = $region37
    $region36: #{bottleneck_pallas.7} parent=1 // pred_region
      %s429 = ssub.s32 2048, 2048
      %430 = vsyncadd [#allocation6], %s429
      %s431 = sshll.u32 [#allocation5], 4
      %s432 = int_to_ptr.vmem [resolvable:$true] %s431
      %437 = dma.vmem_to_hbm [thread:$0]  %s432, 2048, %s6, [#allocation6], 128, 128, 8
    $region37: #{bottleneck_pallas.7} parent=1 // pred_fallthru
      _
    // Predicated region
    $region38: #{bottleneck_pallas.7} parent=1 // pred_check
      _
    $region39: #{bottleneck_pallas.7} parent=1 // pred_check_branch
      %439 = sbr.rel (0) target = $region41
    $region40: #{bottleneck_pallas.7} parent=1 // pred_region
      %440 = dma.done [#allocation4], 2048
    $region41: #{bottleneck_pallas.7} parent=1 // pred_fallthru
      _
    // Predicated region
    $region42: #{bottleneck_pallas.7} parent=1 // pred_check
      _
    $region43: #{bottleneck_pallas.7} parent=1 // pred_check_branch
      %442 = sbr.rel (0) target = $region45
    $region44: #{bottleneck_pallas.7} parent=1 // pred_region
      %443 = dma.done [#allocation6], 2048
    $region45: #{bottleneck_pallas.7} parent=1 // pred_fallthru
      _
    %444 = vsyncpa [#allocation4], 1
    %445 = vsyncpa [#allocation6], 1

</llo_original>
